<compile_context>
chip_gen: v7x
topology: tpu7x:2x2x1
jax: 0.10.0
libtpu: 0.0.40
codegen_flags: <defaults>
</compile_context>

<pallas_src>
import functools

import jax
import jax.numpy as jnp
from jax.experimental import pallas as pl
from jax.experimental.pallas import tpu as pltpu

C1 = 8    # conv1 output channels (assumed Conv_block)
C2 = 16   # conv2 output channels (assumed Conv_block)


# ----------------------------------------------------------------------------
# In-kernel helpers
# ----------------------------------------------------------------------------
def _shift_lanes(v, off):
    """r[:, s] = v[:, s + off] for in-range s; zero filler elsewhere.

    Out-of-range / row-wrapped positions are zeroed later by the tap mask, so
    the filler value never matters.
    """
    if off == 0:
        return v
    n = v.shape[1]
    filler = jnp.zeros((v.shape[0], abs(off)), v.dtype)
    if off > 0:
        return jnp.concatenate([v[:, off:], filler], axis=1)
    return jnp.concatenate([filler, v[:, : n + off]], axis=1)


def _conv3x3_relu(x_flat, mask_ref, w_ref, b_ref, *, width):
    """3x3 / stride 1 / pad 1 conv + ReLU on a flattened (Cin, H*W) image.

    w_ref:    (Cout, 9*Cin) bf16 im2col weight, tap-major rows
    b_ref:    (Cout, 1) f32
    mask_ref: (9, 1, H*W) f32 validity mask per tap (handles zero padding and
              row wrap-around of the flattened lane shifts)
    returns:  (Cout, H*W) f32, post-ReLU
    """
    taps = []
    for t in range(9):
        dy, dx = t // 3, t % 3
        off = (dy - 1) * width + (dx - 1)
        taps.append(_shift_lanes(x_flat, off) * mask_ref[t])
    cols = jnp.concatenate(taps, axis=0).astype(jnp.bfloat16)        # (9*Cin, HW)
    acc = jnp.dot(w_ref[...], cols, preferred_element_type=jnp.float32)
    return jnp.maximum(acc + b_ref[...], 0.0)


def _ac_net_kernel(x_ref, mask_ref, w1_ref, b1_ref, w2_ref, b2_ref,
                   w3_ref, b3_ref, wh_ref, bh_ref,
                   logits_ref, value_ref, *, width, action_dim):
    # One image per grid step; everything below stays on-chip.
    x_flat = x_ref[0]                                                # (Cin, HW) f32

    h1 = _conv3x3_relu(x_flat, mask_ref, w1_ref, b1_ref, width=width)  # (C1, HW)
    h2 = _conv3x3_relu(h1, mask_ref, w2_ref, b2_ref, width=width)      # (C2, HW)

    # PyTorch NCHW flatten: feature index = c*HW + (h*W + w).
    # Built as a lane-dense (1, C2*HW) vector via 128-aligned lane concats.
    feat = jnp.concatenate([h2[c:c + 1, :] for c in range(h2.shape[0])],
                           axis=1).astype(jnp.bfloat16)              # (1, C2*HW)

    h = jnp.dot(feat, w3_ref[...], preferred_element_type=jnp.float32)
    h = jnp.maximum(h + b3_ref[...], 0.0).astype(jnp.bfloat16)       # (1, hidden)

    # Fused actor+critic heads: single (hidden, action_dim+1) matmul.
    out = jnp.dot(h, wh_ref[...], preferred_element_type=jnp.float32) + bh_ref[...]
    logits_ref[0] = out[:, :action_dim].astype(logits_ref.dtype)
    value_ref[0] = out[:, action_dim:action_dim + 1].astype(value_ref.dtype)


# ----------------------------------------------------------------------------
# Parameters: PyTorch-style init + one-time "parameter load" conversion
# ----------------------------------------------------------------------------
def init_params(key, input_channels, width, action_dim, hidden_dim):
    """PyTorch-layout f32 parameters (Conv2d OIHW, Linear (out, in))."""
    feature_dim = C2 * width * width
    ks = jax.random.split(key, 10)

    def u(k, shape, fan_in):
        bound = 1.0 / jnp.sqrt(fan_in)
        return jax.random.uniform(k, shape, jnp.float32, -bound, bound)

    return {
        "conv1_w": u(ks[0], (C1, input_channels, 3, 3), 9 * input_channels),
        "conv1_b": u(ks[1], (C1,), 9 * input_channels),
        "conv2_w": u(ks[2], (C2, C1, 3, 3), 9 * C1),
        "conv2_b": u(ks[3], (C2,), 9 * C1),
        "fc1_w":   u(ks[4], (hidden_dim, feature_dim), feature_dim),
        "fc1_b":   u(ks[5], (hidden_dim,), feature_dim),
        "actor_w": u(ks[6], (action_dim, hidden_dim), hidden_dim),
        "actor_b": u(ks[7], (action_dim,), hidden_dim),
        "critic_w": u(ks[8], (1, hidden_dim), hidden_dim),
        "critic_b": u(ks[9], (1,), hidden_dim),
    }


def prepare_params(raw, height, width):
    """One-time conversion to the kernel layout (done at parameter-load time).

    - conv weights -> tap-major im2col matrices, bf16
    - fc1 weight   -> (feature_dim, hidden) bf16 in NCHW-flatten order
    - actor+critic -> fused (hidden, action_dim+1) bf16 weight
    - biases kept f32 in broadcast-ready shapes
    - precomputed (9, 1, H*W) validity mask for the padded 3x3 window
    """
    def conv_mat(w):                           # (Cout, Cin, 3, 3) -> (Cout, 9*Cin)
        cout, cin = w.shape[0], w.shape[1]
        return (jnp.transpose(w, (0, 2, 3, 1))
                .reshape(cout, 9 * cin).astype(jnp.bfloat16))

    hw = height * width
    hh = jnp.arange(height).reshape(height, 1)
    ww = jnp.arange(width).reshape(1, width)
    masks = []
    for t in range(9):
        dy, dx = t // 3, t % 3
        valid = ((hh + dy - 1 >= 0) & (hh + dy - 1 < height)
                 & (ww + dx - 1 >= 0) & (ww + dx - 1 < width))
        masks.append(valid.reshape(1, hw))
    tap_mask = jnp.stack(masks, axis=0).astype(jnp.float32)          # (9, 1, HW)

    head_w = jnp.concatenate([raw["actor_w"], raw["critic_w"]], axis=0)  # (A+1, hid)
    head_b = jnp.concatenate([raw["actor_b"], raw["critic_b"]], axis=0)  # (A+1,)

    return {
        "tap_mask": tap_mask,
        "conv1_w": conv_mat(raw["conv1_w"]),
        "conv1_b": raw["conv1_b"].reshape(-1, 1).astype(jnp.float32),
        "conv2_w": conv_mat(raw["conv2_w"]),
        "conv2_b": raw["conv2_b"].reshape(-1, 1).astype(jnp.float32),
        "fc1_w": jnp.transpose(raw["fc1_w"]).astype(jnp.bfloat16),   # (feat, hidden)
        "fc1_b": raw["fc1_b"].reshape(1, -1).astype(jnp.float32),
        "head_w": jnp.transpose(head_w).astype(jnp.bfloat16),        # (hidden, A+1)
        "head_b": head_b.reshape(1, -1).astype(jnp.float32),
    }


# ----------------------------------------------------------------------------
# Forward pass: one fused pallas_call
# ----------------------------------------------------------------------------
def ac_net_forward(params, x):
    """x: (N, Cin, H, W) f32 -> (logits (N, action_dim), value (N, 1))."""
    N, Cin, H, W = x.shape
    HW = H * W
    feature_dim, hidden = params["fc1_w"].shape
    A = params["head_w"].shape[1] - 1
    assert feature_dim == C2 * HW

    # Free, contiguous reshape (no transpose / pad): the kernel works on (C, H*W).
    x_flat = x.astype(jnp.float32).reshape(N, Cin, HW)

    zero2 = lambda b: (0, 0)
    zero3 = lambda b: (0, 0, 0)
    logits3, value3 = pl.pallas_call(
        functools.partial(_ac_net_kernel, width=W, action_dim=A),
        out_shape=(jax.ShapeDtypeStruct((N, 1, A), jnp.float32),
                   jax.ShapeDtypeStruct((N, 1, 1), jnp.float32)),
        grid=(N,),
        in_specs=[
            pl.BlockSpec((1, Cin, HW), lambda b: (b, 0, 0)),   # per-image input
            pl.BlockSpec((9, 1, HW), zero3),                   # tap mask (resident)
            pl.BlockSpec((C1, 9 * Cin), zero2),                # conv1 weight
            pl.BlockSpec((C1, 1), zero2),                      # conv1 bias
            pl.BlockSpec((C2, 9 * C1), zero2),                 # conv2 weight
            pl.BlockSpec((C2, 1), zero2),                      # conv2 bias
            pl.BlockSpec((feature_dim, hidden), zero2),        # fc1 weight
            pl.BlockSpec((1, hidden), zero2),                  # fc1 bias
            pl.BlockSpec((hidden, A + 1), zero2),              # fused head weight
            pl.BlockSpec((1, A + 1), zero2),                   # fused head bias
        ],
        out_specs=(pl.BlockSpec((1, 1, A), lambda b: (b, 0, 0)),
                   pl.BlockSpec((1, 1, 1), lambda b: (b, 0, 0))),
        compiler_params=pltpu.CompilerParams(
            dimension_semantics=("parallel",)),
    )(x_flat, params["tap_mask"], params["conv1_w"], params["conv1_b"],
      params["conv2_w"], params["conv2_b"], params["fc1_w"], params["fc1_b"],
      params["head_w"], params["head_b"])

    return logits3.reshape(N, A), value3.reshape(N, 1)


# ----------------------------------------------------------------------------
# Pure-JAX reference (uses the same bf16-rounded weights, f32 math) for checking
# ----------------------------------------------------------------------------
def _reference_forward(raw, x):
    f32 = jnp.float32

    def bf(v):
        return v.astype(jnp.bfloat16).astype(f32)

    def conv(v, w, b):
        y = jax.lax.conv_general_dilated(
            v, bf(w), window_strides=(1, 1), padding=((1, 1), (1, 1)),
            dimension_numbers=("NCHW", "OIHW", "NCHW"))
        return jax.nn.relu(y + b.reshape(1, -1, 1, 1))

    h = conv(x.astype(f32), raw["conv1_w"], raw["conv1_b"])
    h = conv(h, raw["conv2_w"], raw["conv2_b"])
    feat = h.reshape(h.shape[0], -1)                        # NCHW flatten
    hid = jax.nn.relu(feat @ bf(raw["fc1_w"]).T + raw["fc1_b"])
    logits = hid @ bf(raw["actor_w"]).T + raw["actor_b"]
    value = hid @ bf(raw["critic_w"]).T + raw["critic_b"]
    return logits, value


if __name__ == "__main__":
    key = jax.random.PRNGKey(0)
    batch, input_channels, width = 2, 4, 16
    action_dim, hidden_dim = 6, 32

    kp, kx = jax.random.split(key)
    raw = init_params(kp, input_channels, width, action_dim, hidden_dim)
    params = prepare_params(raw, width, width)
    x = jax.random.normal(kx, (batch, input_channels, width, width), jnp.float32)

    fwd = jax.jit(ac_net_forward)
    logits, value = fwd(params, x)
    jax.block_until_ready((logits, value))

    assert logits.shape == (batch, action_dim)
    assert value.shape == (batch, 1)

    ref_logits, ref_value = _reference_forward(raw, x)
    assert bool(jnp.allclose(logits, ref_logits, rtol=5e-2, atol=2e-2))
    assert bool(jnp.allclose(value, ref_value, rtol=5e-2, atol=2e-2))

    # TODO(synk): act()/evaluate() (Categorical sampling, log_prob, entropy) are
    # post-forward utilities, not part of the module's forward; not kernelized.
    print("KERNEL_OK")
</pallas_src>

<mosaic_0001>
module attributes {stable_mosaic.version = 11 : i64} {
  func.func @_ac_net_kernel(%arg0: i32, %arg1: memref<1x4x256xf32, #tpu.memory_space<vmem>>, %arg2: memref<9x1x256xf32, #tpu.memory_space<vmem>>, %arg3: memref<8x36xbf16, #tpu.memory_space<vmem>>, %arg4: memref<8x1xf32, #tpu.memory_space<vmem>>, %arg5: memref<16x72xbf16, #tpu.memory_space<vmem>>, %arg6: memref<16x1xf32, #tpu.memory_space<vmem>>, %arg7: memref<4096x32xbf16, #tpu.memory_space<vmem>>, %arg8: memref<1x32xf32, #tpu.memory_space<vmem>>, %arg9: memref<32x7xbf16, #tpu.memory_space<vmem>>, %arg10: memref<1x7xf32, #tpu.memory_space<vmem>>, %arg11: memref<1x1x6xf32, #tpu.memory_space<vmem>>, %arg12: memref<1x1x1xf32, #tpu.memory_space<vmem>>) attributes {dimension_semantics = [#tpu.dimension_semantics<parallel>], iteration_bounds = array<i64: 2>, scalar_prefetch = 0 : i64, scratch_operands = 0 : i64, tpu.core_type = #tpu.core_type<tc>, window_params = [{transform_indices = @transform_0, window_bounds = array<i64: 1, 4, 256>}, {pipeline_mode = #tpu.pipeline_mode<synchronous>, transform_indices = @transform_1, window_bounds = array<i64: 9, 1, 256>}, {pipeline_mode = #tpu.pipeline_mode<synchronous>, transform_indices = @transform_2, window_bounds = array<i64: 8, 36>}, {pipeline_mode = #tpu.pipeline_mode<synchronous>, transform_indices = @transform_3, window_bounds = array<i64: 8, 1>}, {pipeline_mode = #tpu.pipeline_mode<synchronous>, transform_indices = @transform_4, window_bounds = array<i64: 16, 72>}, {pipeline_mode = #tpu.pipeline_mode<synchronous>, transform_indices = @transform_5, window_bounds = array<i64: 16, 1>}, {pipeline_mode = #tpu.pipeline_mode<synchronous>, transform_indices = @transform_6, window_bounds = array<i64: 4096, 32>}, {pipeline_mode = #tpu.pipeline_mode<synchronous>, transform_indices = @transform_7, window_bounds = array<i64: 1, 32>}, {pipeline_mode = #tpu.pipeline_mode<synchronous>, transform_indices = @transform_8, window_bounds = array<i64: 32, 7>}, {pipeline_mode = #tpu.pipeline_mode<synchronous>, transform_indices = @transform_9, window_bounds = array<i64: 1, 7>}, {transform_indices = @transform_10, window_bounds = array<i64: 1, 1, 6>}, {transform_indices = @transform_11, window_bounds = array<i64: 1, 1, 1>}]} {
    %c0 = arith.constant 0 : index
    %c0_0 = arith.constant 0 : index
    %c0_1 = arith.constant 0 : index
    %0 = vector.load %arg1[%c0, %c0_0, %c0_1] : memref<1x4x256xf32, #tpu.memory_space<vmem>>, vector<1x4x256xf32>
    %1 = vector.shape_cast %0 : vector<1x4x256xf32> to vector<4x256xf32>
    %cst = arith.constant 0.000000e+00 : f32
    %2 = vector.broadcast %cst : f32 to vector<4x17xf32>
    %3 = vector.extract_strided_slice %1 {offsets = [0, 0], sizes = [4, 239], strides = [1, 1]} : vector<4x256xf32> to vector<4x239xf32>
    %4 = tpu.concatenate %2, %3 in 1 : vector<4x17xf32>, vector<4x239xf32> -> vector<4x256xf32>
    %c0_2 = arith.constant 0 : index
    %c0_3 = arith.constant 0 : index
    %c0_4 = arith.constant 0 : index
    %5 = vector.load %arg2[%c0_2, %c0_3, %c0_4] : memref<9x1x256xf32, #tpu.memory_space<vmem>>, vector<1x1x256xf32>
    %6 = vector.shape_cast %5 : vector<1x1x256xf32> to vector<1x256xf32>
    %7 = vector.broadcast %6 : vector<1x256xf32> to vector<4x256xf32>
    %8 = arith.mulf %4, %7 : vector<4x256xf32>
    %cst_5 = arith.constant 0.000000e+00 : f32
    %9 = vector.broadcast %cst_5 : f32 to vector<4x16xf32>
    %10 = vector.extract_strided_slice %1 {offsets = [0, 0], sizes = [4, 240], strides = [1, 1]} : vector<4x256xf32> to vector<4x240xf32>
    %11 = tpu.concatenate %9, %10 in 1 : vector<4x16xf32>, vector<4x240xf32> -> vector<4x256xf32>
    %c1 = arith.constant 1 : index
    %c0_6 = arith.constant 0 : index
    %c0_7 = arith.constant 0 : index
    %12 = vector.load %arg2[%c1, %c0_6, %c0_7] : memref<9x1x256xf32, #tpu.memory_space<vmem>>, vector<1x1x256xf32>
    %13 = vector.shape_cast %12 : vector<1x1x256xf32> to vector<1x256xf32>
    %14 = vector.broadcast %13 : vector<1x256xf32> to vector<4x256xf32>
    %15 = arith.mulf %11, %14 : vector<4x256xf32>
    %cst_8 = arith.constant 0.000000e+00 : f32
    %16 = vector.broadcast %cst_8 : f32 to vector<4x15xf32>
    %17 = vector.extract_strided_slice %1 {offsets = [0, 0], sizes = [4, 241], strides = [1, 1]} : vector<4x256xf32> to vector<4x241xf32>
    %18 = tpu.concatenate %16, %17 in 1 : vector<4x15xf32>, vector<4x241xf32> -> vector<4x256xf32>
    %c2 = arith.constant 2 : index
    %c0_9 = arith.constant 0 : index
    %c0_10 = arith.constant 0 : index
    %19 = vector.load %arg2[%c2, %c0_9, %c0_10] : memref<9x1x256xf32, #tpu.memory_space<vmem>>, vector<1x1x256xf32>
    %20 = vector.shape_cast %19 : vector<1x1x256xf32> to vector<1x256xf32>
    %21 = vector.broadcast %20 : vector<1x256xf32> to vector<4x256xf32>
    %22 = arith.mulf %18, %21 : vector<4x256xf32>
    %cst_11 = arith.constant 0.000000e+00 : f32
    %23 = vector.broadcast %cst_11 : f32 to vector<4x1xf32>
    %24 = vector.extract_strided_slice %1 {offsets = [0, 0], sizes = [4, 255], strides = [1, 1]} : vector<4x256xf32> to vector<4x255xf32>
    %25 = tpu.concatenate %23, %24 in 1 : vector<4x1xf32>, vector<4x255xf32> -> vector<4x256xf32>
    %c3 = arith.constant 3 : index
    %c0_12 = arith.constant 0 : index
    %c0_13 = arith.constant 0 : index
    %26 = vector.load %arg2[%c3, %c0_12, %c0_13] : memref<9x1x256xf32, #tpu.memory_space<vmem>>, vector<1x1x256xf32>
    %27 = vector.shape_cast %26 : vector<1x1x256xf32> to vector<1x256xf32>
    %28 = vector.broadcast %27 : vector<1x256xf32> to vector<4x256xf32>
    %29 = arith.mulf %25, %28 : vector<4x256xf32>
    %c4 = arith.constant 4 : index
    %c0_14 = arith.constant 0 : index
    %c0_15 = arith.constant 0 : index
    %30 = vector.load %arg2[%c4, %c0_14, %c0_15] : memref<9x1x256xf32, #tpu.memory_space<vmem>>, vector<1x1x256xf32>
    %31 = vector.shape_cast %30 : vector<1x1x256xf32> to vector<1x256xf32>
    %32 = vector.broadcast %31 : vector<1x256xf32> to vector<4x256xf32>
    %33 = arith.mulf %1, %32 : vector<4x256xf32>
    %cst_16 = arith.constant 0.000000e+00 : f32
    %34 = vector.broadcast %cst_16 : f32 to vector<4x1xf32>
    %35 = vector.extract_strided_slice %1 {offsets = [0, 1], sizes = [4, 255], strides = [1, 1]} : vector<4x256xf32> to vector<4x255xf32>
    %36 = tpu.concatenate %35, %34 in 1 : vector<4x255xf32>, vector<4x1xf32> -> vector<4x256xf32>
    %c5 = arith.constant 5 : index
    %c0_17 = arith.constant 0 : index
    %c0_18 = arith.constant 0 : index
    %37 = vector.load %arg2[%c5, %c0_17, %c0_18] : memref<9x1x256xf32, #tpu.memory_space<vmem>>, vector<1x1x256xf32>
    %38 = vector.shape_cast %37 : vector<1x1x256xf32> to vector<1x256xf32>
    %39 = vector.broadcast %38 : vector<1x256xf32> to vector<4x256xf32>
    %40 = arith.mulf %36, %39 : vector<4x256xf32>
    %cst_19 = arith.constant 0.000000e+00 : f32
    %41 = vector.broadcast %cst_19 : f32 to vector<4x15xf32>
    %42 = vector.extract_strided_slice %1 {offsets = [0, 15], sizes = [4, 241], strides = [1, 1]} : vector<4x256xf32> to vector<4x241xf32>
    %43 = tpu.concatenate %42, %41 in 1 : vector<4x241xf32>, vector<4x15xf32> -> vector<4x256xf32>
    %c6 = arith.constant 6 : index
    %c0_20 = arith.constant 0 : index
    %c0_21 = arith.constant 0 : index
    %44 = vector.load %arg2[%c6, %c0_20, %c0_21] : memref<9x1x256xf32, #tpu.memory_space<vmem>>, vector<1x1x256xf32>
    %45 = vector.shape_cast %44 : vector<1x1x256xf32> to vector<1x256xf32>
    %46 = vector.broadcast %45 : vector<1x256xf32> to vector<4x256xf32>
    %47 = arith.mulf %43, %46 : vector<4x256xf32>
    %cst_22 = arith.constant 0.000000e+00 : f32
    %48 = vector.broadcast %cst_22 : f32 to vector<4x16xf32>
    %49 = vector.extract_strided_slice %1 {offsets = [0, 16], sizes = [4, 240], strides = [1, 1]} : vector<4x256xf32> to vector<4x240xf32>
    %50 = tpu.concatenate %49, %48 in 1 : vector<4x240xf32>, vector<4x16xf32> -> vector<4x256xf32>
    %c7 = arith.constant 7 : index
    %c0_23 = arith.constant 0 : index
    %c0_24 = arith.constant 0 : index
    %51 = vector.load %arg2[%c7, %c0_23, %c0_24] : memref<9x1x256xf32, #tpu.memory_space<vmem>>, vector<1x1x256xf32>
    %52 = vector.shape_cast %51 : vector<1x1x256xf32> to vector<1x256xf32>
    %53 = vector.broadcast %52 : vector<1x256xf32> to vector<4x256xf32>
    %54 = arith.mulf %50, %53 : vector<4x256xf32>
    %cst_25 = arith.constant 0.000000e+00 : f32
    %55 = vector.broadcast %cst_25 : f32 to vector<4x17xf32>
    %56 = vector.extract_strided_slice %1 {offsets = [0, 17], sizes = [4, 239], strides = [1, 1]} : vector<4x256xf32> to vector<4x239xf32>
    %57 = tpu.concatenate %56, %55 in 1 : vector<4x239xf32>, vector<4x17xf32> -> vector<4x256xf32>
    %c8 = arith.constant 8 : index
    %c0_26 = arith.constant 0 : index
    %c0_27 = arith.constant 0 : index
    %58 = vector.load %arg2[%c8, %c0_26, %c0_27] : memref<9x1x256xf32, #tpu.memory_space<vmem>>, vector<1x1x256xf32>
    %59 = vector.shape_cast %58 : vector<1x1x256xf32> to vector<1x256xf32>
    %60 = vector.broadcast %59 : vector<1x256xf32> to vector<4x256xf32>
    %61 = arith.mulf %57, %60 : vector<4x256xf32>
    %62 = tpu.concatenate %8, %15, %22, %29, %33, %40, %47, %54, %61 in 0 : vector<4x256xf32>, vector<4x256xf32>, vector<4x256xf32>, vector<4x256xf32>, vector<4x256xf32>, vector<4x256xf32>, vector<4x256xf32>, vector<4x256xf32>, vector<4x256xf32> -> vector<36x256xf32>
    %63 = arith.truncf %62 : vector<36x256xf32> to vector<36x256xbf16>
    %c0_28 = arith.constant 0 : index
    %c0_29 = arith.constant 0 : index
    %64 = vector.load %arg3[%c0_28, %c0_29] : memref<8x36xbf16, #tpu.memory_space<vmem>>, vector<8x36xbf16>
    %cst_30 = arith.constant dense<0.000000e+00> : vector<8x256xf32>
    %65 = tpu.matmul %64, %63, %cst_30 {dimension_numbers = #tpu.dot_dimension_numbers<[1], [0], [0], [1], [0, 0, 1, 1], [], []>} : vector<8x36xbf16>, vector<36x256xbf16>, vector<8x256xf32> -> vector<8x256xf32>
    %c0_31 = arith.constant 0 : index
    %c0_32 = arith.constant 0 : index
    %66 = vector.load %arg4[%c0_31, %c0_32] : memref<8x1xf32, #tpu.memory_space<vmem>>, vector<8x1xf32>
    %67 = vector.broadcast %66 : vector<8x1xf32> to vector<8x256xf32>
    %68 = arith.addf %65, %67 : vector<8x256xf32>
    %cst_33 = arith.constant 0.000000e+00 : f32
    %69 = vector.broadcast %cst_33 : f32 to vector<8x256xf32>
    %70 = arith.maximumf %68, %69 : vector<8x256xf32>
    %cst_34 = arith.constant 0.000000e+00 : f32
    %71 = vector.broadcast %cst_34 : f32 to vector<8x17xf32>
    %72 = vector.extract_strided_slice %70 {offsets = [0, 0], sizes = [8, 239], strides = [1, 1]} : vector<8x256xf32> to vector<8x239xf32>
    %73 = tpu.concatenate %71, %72 in 1 : vector<8x17xf32>, vector<8x239xf32> -> vector<8x256xf32>
    %c0_35 = arith.constant 0 : index
    %c0_36 = arith.constant 0 : index
    %c0_37 = arith.constant 0 : index
    %74 = vector.load %arg2[%c0_35, %c0_36, %c0_37] : memref<9x1x256xf32, #tpu.memory_space<vmem>>, vector<1x1x256xf32>
    %75 = vector.shape_cast %74 : vector<1x1x256xf32> to vector<1x256xf32>
    %76 = vector.broadcast %75 : vector<1x256xf32> to vector<8x256xf32>
    %77 = arith.mulf %73, %76 : vector<8x256xf32>
    %cst_38 = arith.constant 0.000000e+00 : f32
    %78 = vector.broadcast %cst_38 : f32 to vector<8x16xf32>
    %79 = vector.extract_strided_slice %70 {offsets = [0, 0], sizes = [8, 240], strides = [1, 1]} : vector<8x256xf32> to vector<8x240xf32>
    %80 = tpu.concatenate %78, %79 in 1 : vector<8x16xf32>, vector<8x240xf32> -> vector<8x256xf32>
    %c1_39 = arith.constant 1 : index
    %c0_40 = arith.constant 0 : index
    %c0_41 = arith.constant 0 : index
    %81 = vector.load %arg2[%c1_39, %c0_40, %c0_41] : memref<9x1x256xf32, #tpu.memory_space<vmem>>, vector<1x1x256xf32>
    %82 = vector.shape_cast %81 : vector<1x1x256xf32> to vector<1x256xf32>
    %83 = vector.broadcast %82 : vector<1x256xf32> to vector<8x256xf32>
    %84 = arith.mulf %80, %83 : vector<8x256xf32>
    %cst_42 = arith.constant 0.000000e+00 : f32
    %85 = vector.broadcast %cst_42 : f32 to vector<8x15xf32>
    %86 = vector.extract_strided_slice %70 {offsets = [0, 0], sizes = [8, 241], strides = [1, 1]} : vector<8x256xf32> to vector<8x241xf32>
    %87 = tpu.concatenate %85, %86 in 1 : vector<8x15xf32>, vector<8x241xf32> -> vector<8x256xf32>
    %c2_43 = arith.constant 2 : index
    %c0_44 = arith.constant 0 : index
    %c0_45 = arith.constant 0 : index
    %88 = vector.load %arg2[%c2_43, %c0_44, %c0_45] : memref<9x1x256xf32, #tpu.memory_space<vmem>>, vector<1x1x256xf32>
    %89 = vector.shape_cast %88 : vector<1x1x256xf32> to vector<1x256xf32>
    %90 = vector.broadcast %89 : vector<1x256xf32> to vector<8x256xf32>
    %91 = arith.mulf %87, %90 : vector<8x256xf32>
    %cst_46 = arith.constant 0.000000e+00 : f32
    %92 = vector.broadcast %cst_46 : f32 to vector<8x1xf32>
    %93 = vector.extract_strided_slice %70 {offsets = [0, 0], sizes = [8, 255], strides = [1, 1]} : vector<8x256xf32> to vector<8x255xf32>
    %94 = tpu.concatenate %92, %93 in 1 : vector<8x1xf32>, vector<8x255xf32> -> vector<8x256xf32>
    %c3_47 = arith.constant 3 : index
    %c0_48 = arith.constant 0 : index
    %c0_49 = arith.constant 0 : index
    %95 = vector.load %arg2[%c3_47, %c0_48, %c0_49] : memref<9x1x256xf32, #tpu.memory_space<vmem>>, vector<1x1x256xf32>
    %96 = vector.shape_cast %95 : vector<1x1x256xf32> to vector<1x256xf32>
    %97 = vector.broadcast %96 : vector<1x256xf32> to vector<8x256xf32>
    %98 = arith.mulf %94, %97 : vector<8x256xf32>
    %c4_50 = arith.constant 4 : index
    %c0_51 = arith.constant 0 : index
    %c0_52 = arith.constant 0 : index
    %99 = vector.load %arg2[%c4_50, %c0_51, %c0_52] : memref<9x1x256xf32, #tpu.memory_space<vmem>>, vector<1x1x256xf32>
    %100 = vector.shape_cast %99 : vector<1x1x256xf32> to vector<1x256xf32>
    %101 = vector.broadcast %100 : vector<1x256xf32> to vector<8x256xf32>
    %102 = arith.mulf %70, %101 : vector<8x256xf32>
    %cst_53 = arith.constant 0.000000e+00 : f32
    %103 = vector.broadcast %cst_53 : f32 to vector<8x1xf32>
    %104 = vector.extract_strided_slice %70 {offsets = [0, 1], sizes = [8, 255], strides = [1, 1]} : vector<8x256xf32> to vector<8x255xf32>
    %105 = tpu.concatenate %104, %103 in 1 : vector<8x255xf32>, vector<8x1xf32> -> vector<8x256xf32>
    %c5_54 = arith.constant 5 : index
    %c0_55 = arith.constant 0 : index
    %c0_56 = arith.constant 0 : index
    %106 = vector.load %arg2[%c5_54, %c0_55, %c0_56] : memref<9x1x256xf32, #tpu.memory_space<vmem>>, vector<1x1x256xf32>
    %107 = vector.shape_cast %106 : vector<1x1x256xf32> to vector<1x256xf32>
    %108 = vector.broadcast %107 : vector<1x256xf32> to vector<8x256xf32>
    %109 = arith.mulf %105, %108 : vector<8x256xf32>
    %cst_57 = arith.constant 0.000000e+00 : f32
    %110 = vector.broadcast %cst_57 : f32 to vector<8x15xf32>
    %111 = vector.extract_strided_slice %70 {offsets = [0, 15], sizes = [8, 241], strides = [1, 1]} : vector<8x256xf32> to vector<8x241xf32>
    %112 = tpu.concatenate %111, %110 in 1 : vector<8x241xf32>, vector<8x15xf32> -> vector<8x256xf32>
    %c6_58 = arith.constant 6 : index
    %c0_59 = arith.constant 0 : index
    %c0_60 = arith.constant 0 : index
    %113 = vector.load %arg2[%c6_58, %c0_59, %c0_60] : memref<9x1x256xf32, #tpu.memory_space<vmem>>, vector<1x1x256xf32>
    %114 = vector.shape_cast %113 : vector<1x1x256xf32> to vector<1x256xf32>
    %115 = vector.broadcast %114 : vector<1x256xf32> to vector<8x256xf32>
    %116 = arith.mulf %112, %115 : vector<8x256xf32>
    %cst_61 = arith.constant 0.000000e+00 : f32
    %117 = vector.broadcast %cst_61 : f32 to vector<8x16xf32>
    %118 = vector.extract_strided_slice %70 {offsets = [0, 16], sizes = [8, 240], strides = [1, 1]} : vector<8x256xf32> to vector<8x240xf32>
    %119 = tpu.concatenate %118, %117 in 1 : vector<8x240xf32>, vector<8x16xf32> -> vector<8x256xf32>
    %c7_62 = arith.constant 7 : index
    %c0_63 = arith.constant 0 : index
    %c0_64 = arith.constant 0 : index
    %120 = vector.load %arg2[%c7_62, %c0_63, %c0_64] : memref<9x1x256xf32, #tpu.memory_space<vmem>>, vector<1x1x256xf32>
    %121 = vector.shape_cast %120 : vector<1x1x256xf32> to vector<1x256xf32>
    %122 = vector.broadcast %121 : vector<1x256xf32> to vector<8x256xf32>
    %123 = arith.mulf %119, %122 : vector<8x256xf32>
    %cst_65 = arith.constant 0.000000e+00 : f32
    %124 = vector.broadcast %cst_65 : f32 to vector<8x17xf32>
    %125 = vector.extract_strided_slice %70 {offsets = [0, 17], sizes = [8, 239], strides = [1, 1]} : vector<8x256xf32> to vector<8x239xf32>
    %126 = tpu.concatenate %125, %124 in 1 : vector<8x239xf32>, vector<8x17xf32> -> vector<8x256xf32>
    %c8_66 = arith.constant 8 : index
    %c0_67 = arith.constant 0 : index
    %c0_68 = arith.constant 0 : index
    %127 = vector.load %arg2[%c8_66, %c0_67, %c0_68] : memref<9x1x256xf32, #tpu.memory_space<vmem>>, vector<1x1x256xf32>
    %128 = vector.shape_cast %127 : vector<1x1x256xf32> to vector<1x256xf32>
    %129 = vector.broadcast %128 : vector<1x256xf32> to vector<8x256xf32>
    %130 = arith.mulf %126, %129 : vector<8x256xf32>
    %131 = tpu.concatenate %77, %84, %91, %98, %102, %109, %116, %123, %130 in 0 : vector<8x256xf32>, vector<8x256xf32>, vector<8x256xf32>, vector<8x256xf32>, vector<8x256xf32>, vector<8x256xf32>, vector<8x256xf32>, vector<8x256xf32>, vector<8x256xf32> -> vector<72x256xf32>
    %132 = arith.truncf %131 : vector<72x256xf32> to vector<72x256xbf16>
    %c0_69 = arith.constant 0 : index
    %c0_70 = arith.constant 0 : index
    %133 = vector.load %arg5[%c0_69, %c0_70] : memref<16x72xbf16, #tpu.memory_space<vmem>>, vector<16x72xbf16>
    %cst_71 = arith.constant dense<0.000000e+00> : vector<16x256xf32>
    %134 = tpu.matmul %133, %132, %cst_71 {dimension_numbers = #tpu.dot_dimension_numbers<[1], [0], [0], [1], [0, 0, 1, 1], [], []>} : vector<16x72xbf16>, vector<72x256xbf16>, vector<16x256xf32> -> vector<16x256xf32>
    %c0_72 = arith.constant 0 : index
    %c0_73 = arith.constant 0 : index
    %135 = vector.load %arg6[%c0_72, %c0_73] : memref<16x1xf32, #tpu.memory_space<vmem>>, vector<16x1xf32>
    %136 = vector.broadcast %135 : vector<16x1xf32> to vector<16x256xf32>
    %137 = arith.addf %134, %136 : vector<16x256xf32>
    %cst_74 = arith.constant 0.000000e+00 : f32
    %138 = vector.broadcast %cst_74 : f32 to vector<16x256xf32>
    %139 = arith.maximumf %137, %138 : vector<16x256xf32>
    %140 = vector.extract_strided_slice %139 {offsets = [0, 0], sizes = [1, 256], strides = [1, 1]} : vector<16x256xf32> to vector<1x256xf32>
    %141 = vector.extract_strided_slice %139 {offsets = [1, 0], sizes = [1, 256], strides = [1, 1]} : vector<16x256xf32> to vector<1x256xf32>
    %142 = vector.extract_strided_slice %139 {offsets = [2, 0], sizes = [1, 256], strides = [1, 1]} : vector<16x256xf32> to vector<1x256xf32>
    %143 = vector.extract_strided_slice %139 {offsets = [3, 0], sizes = [1, 256], strides = [1, 1]} : vector<16x256xf32> to vector<1x256xf32>
    %144 = vector.extract_strided_slice %139 {offsets = [4, 0], sizes = [1, 256], strides = [1, 1]} : vector<16x256xf32> to vector<1x256xf32>
    %145 = vector.extract_strided_slice %139 {offsets = [5, 0], sizes = [1, 256], strides = [1, 1]} : vector<16x256xf32> to vector<1x256xf32>
    %146 = vector.extract_strided_slice %139 {offsets = [6, 0], sizes = [1, 256], strides = [1, 1]} : vector<16x256xf32> to vector<1x256xf32>
    %147 = vector.extract_strided_slice %139 {offsets = [7, 0], sizes = [1, 256], strides = [1, 1]} : vector<16x256xf32> to vector<1x256xf32>
    %148 = vector.extract_strided_slice %139 {offsets = [8, 0], sizes = [1, 256], strides = [1, 1]} : vector<16x256xf32> to vector<1x256xf32>
    %149 = vector.extract_strided_slice %139 {offsets = [9, 0], sizes = [1, 256], strides = [1, 1]} : vector<16x256xf32> to vector<1x256xf32>
    %150 = vector.extract_strided_slice %139 {offsets = [10, 0], sizes = [1, 256], strides = [1, 1]} : vector<16x256xf32> to vector<1x256xf32>
    %151 = vector.extract_strided_slice %139 {offsets = [11, 0], sizes = [1, 256], strides = [1, 1]} : vector<16x256xf32> to vector<1x256xf32>
    %152 = vector.extract_strided_slice %139 {offsets = [12, 0], sizes = [1, 256], strides = [1, 1]} : vector<16x256xf32> to vector<1x256xf32>
    %153 = vector.extract_strided_slice %139 {offsets = [13, 0], sizes = [1, 256], strides = [1, 1]} : vector<16x256xf32> to vector<1x256xf32>
    %154 = vector.extract_strided_slice %139 {offsets = [14, 0], sizes = [1, 256], strides = [1, 1]} : vector<16x256xf32> to vector<1x256xf32>
    %155 = vector.extract_strided_slice %139 {offsets = [15, 0], sizes = [1, 256], strides = [1, 1]} : vector<16x256xf32> to vector<1x256xf32>
    %156 = tpu.concatenate %140, %141, %142, %143, %144, %145, %146, %147, %148, %149, %150, %151, %152, %153, %154, %155 in 1 : vector<1x256xf32>, vector<1x256xf32>, vector<1x256xf32>, vector<1x256xf32>, vector<1x256xf32>, vector<1x256xf32>, vector<1x256xf32>, vector<1x256xf32>, vector<1x256xf32>, vector<1x256xf32>, vector<1x256xf32>, vector<1x256xf32>, vector<1x256xf32>, vector<1x256xf32>, vector<1x256xf32>, vector<1x256xf32> -> vector<1x4096xf32>
    %157 = arith.truncf %156 : vector<1x4096xf32> to vector<1x4096xbf16>
    %c0_75 = arith.constant 0 : index
    %c0_76 = arith.constant 0 : index
    %158 = vector.load %arg7[%c0_75, %c0_76] : memref<4096x32xbf16, #tpu.memory_space<vmem>>, vector<4096x32xbf16>
    %cst_77 = arith.constant dense<0.000000e+00> : vector<1x32xf32>
    %159 = tpu.matmul %157, %158, %cst_77 {dimension_numbers = #tpu.dot_dimension_numbers<[1], [0], [0], [1], [0, 0, 1, 1], [], []>} : vector<1x4096xbf16>, vector<4096x32xbf16>, vector<1x32xf32> -> vector<1x32xf32>
    %c0_78 = arith.constant 0 : index
    %c0_79 = arith.constant 0 : index
    %160 = vector.load %arg8[%c0_78, %c0_79] : memref<1x32xf32, #tpu.memory_space<vmem>>, vector<1x32xf32>
    %161 = arith.addf %159, %160 : vector<1x32xf32>
    %cst_80 = arith.constant 0.000000e+00 : f32
    %162 = vector.broadcast %cst_80 : f32 to vector<1x32xf32>
    %163 = arith.maximumf %161, %162 : vector<1x32xf32>
    %164 = arith.truncf %163 : vector<1x32xf32> to vector<1x32xbf16>
    %c0_81 = arith.constant 0 : index
    %c0_82 = arith.constant 0 : index
    %165 = vector.load %arg9[%c0_81, %c0_82] : memref<32x7xbf16, #tpu.memory_space<vmem>>, vector<32x7xbf16>
    %cst_83 = arith.constant dense<0.000000e+00> : vector<1x7xf32>
    %166 = tpu.matmul %164, %165, %cst_83 {dimension_numbers = #tpu.dot_dimension_numbers<[1], [0], [0], [1], [0, 0, 1, 1], [], []>} : vector<1x32xbf16>, vector<32x7xbf16>, vector<1x7xf32> -> vector<1x7xf32>
    %c0_84 = arith.constant 0 : index
    %c0_85 = arith.constant 0 : index
    %167 = vector.load %arg10[%c0_84, %c0_85] : memref<1x7xf32, #tpu.memory_space<vmem>>, vector<1x7xf32>
    %168 = arith.addf %166, %167 : vector<1x7xf32>
    %169 = vector.extract_strided_slice %168 {offsets = [0, 0], sizes = [1, 6], strides = [1, 1]} : vector<1x7xf32> to vector<1x6xf32>
    %c0_86 = arith.constant 0 : index
    %c0_87 = arith.constant 0 : index
    %c0_88 = arith.constant 0 : index
    %170 = vector.load %arg11[%c0_86, %c0_87, %c0_88] : memref<1x1x6xf32, #tpu.memory_space<vmem>>, vector<1x1x6xf32>
    %171 = vector.shape_cast %170 : vector<1x1x6xf32> to vector<1x6xf32>
    %172 = vector.shape_cast %169 : vector<1x6xf32> to vector<1x1x6xf32>
    tpu.vector_store %arg11[%c0_86, %c0_87, %c0_88], %172 {strides = array<i32>} : memref<1x1x6xf32, #tpu.memory_space<vmem>>, vector<1x1x6xf32>,
    %173 = vector.extract_strided_slice %168 {offsets = [0, 6], sizes = [1, 1], strides = [1, 1]} : vector<1x7xf32> to vector<1x1xf32>
    %c0_89 = arith.constant 0 : index
    %c0_90 = arith.constant 0 : index
    %c0_91 = arith.constant 0 : index
    %174 = vector.load %arg12[%c0_89, %c0_90, %c0_91] : memref<1x1x1xf32, #tpu.memory_space<vmem>>, vector<1x1x1xf32>
    %175 = vector.shape_cast %174 : vector<1x1x1xf32> to vector<1x1xf32>
    %176 = vector.shape_cast %173 : vector<1x1xf32> to vector<1x1x1xf32>
    tpu.vector_store %arg12[%c0_89, %c0_90, %c0_91], %176 {strides = array<i32>} : memref<1x1x1xf32, #tpu.memory_space<vmem>>, vector<1x1x1xf32>,
    return
  }
  func.func @transform_0(%arg0: i32) -> (i32, i32, i32) {
    %c0_i32 = arith.constant 0 : i32
    %c0_i32_0 = arith.constant 0 : i32
    %c0_i32_1 = arith.constant 0 : i32
    return %arg0, %c0_i32, %c0_i32_0 : i32, i32, i32
  }
  func.func @transform_1(%arg0: i32) -> (i32, i32, i32) {
    %c0_i32 = arith.constant 0 : i32
    %c0_i32_0 = arith.constant 0 : i32
    %c0_i32_1 = arith.constant 0 : i32
    %c0_i32_2 = arith.constant 0 : i32
    return %c0_i32, %c0_i32_0, %c0_i32_1 : i32, i32, i32
  }
  func.func @transform_2(%arg0: i32) -> (i32, i32) {
    %c0_i32 = arith.constant 0 : i32
    %c0_i32_0 = arith.constant 0 : i32
    %c0_i32_1 = arith.constant 0 : i32
    return %c0_i32, %c0_i32_0 : i32, i32
  }
  func.func @transform_3(%arg0: i32) -> (i32, i32) {
    %c0_i32 = arith.constant 0 : i32
    %c0_i32_0 = arith.constant 0 : i32
    %c0_i32_1 = arith.constant 0 : i32
    return %c0_i32, %c0_i32_0 : i32, i32
  }
  func.func @transform_4(%arg0: i32) -> (i32, i32) {
    %c0_i32 = arith.constant 0 : i32
    %c0_i32_0 = arith.constant 0 : i32
    %c0_i32_1 = arith.constant 0 : i32
    return %c0_i32, %c0_i32_0 : i32, i32
  }
  func.func @transform_5(%arg0: i32) -> (i32, i32) {
    %c0_i32 = arith.constant 0 : i32
    %c0_i32_0 = arith.constant 0 : i32
    %c0_i32_1 = arith.constant 0 : i32
    return %c0_i32, %c0_i32_0 : i32, i32
  }
  func.func @transform_6(%arg0: i32) -> (i32, i32) {
    %c0_i32 = arith.constant 0 : i32
    %c0_i32_0 = arith.constant 0 : i32
    %c0_i32_1 = arith.constant 0 : i32
    return %c0_i32, %c0_i32_0 : i32, i32
  }
  func.func @transform_7(%arg0: i32) -> (i32, i32) {
    %c0_i32 = arith.constant 0 : i32
    %c0_i32_0 = arith.constant 0 : i32
    %c0_i32_1 = arith.constant 0 : i32
    return %c0_i32, %c0_i32_0 : i32, i32
  }
  func.func @transform_8(%arg0: i32) -> (i32, i32) {
    %c0_i32 = arith.constant 0 : i32
    %c0_i32_0 = arith.constant 0 : i32
    %c0_i32_1 = arith.constant 0 : i32
    return %c0_i32, %c0_i32_0 : i32, i32
  }
  func.func @transform_9(%arg0: i32) -> (i32, i32) {
    %c0_i32 = arith.constant 0 : i32
    %c0_i32_0 = arith.constant 0 : i32
    %c0_i32_1 = arith.constant 0 : i32
    return %c0_i32, %c0_i32_0 : i32, i32
  }
  func.func @transform_10(%arg0: i32) -> (i32, i32, i32) {
    %c0_i32 = arith.constant 0 : i32
    %c0_i32_0 = arith.constant 0 : i32
    %c0_i32_1 = arith.constant 0 : i32
    return %arg0, %c0_i32, %c0_i32_0 : i32, i32, i32
  }
  func.func @transform_11(%arg0: i32) -> (i32, i32, i32) {
    %c0_i32 = arith.constant 0 : i32
    %c0_i32_0 = arith.constant 0 : i32
    %c0_i32_1 = arith.constant 0 : i32
    return %arg0, %c0_i32, %c0_i32_0 : i32, i32, i32
  }
}

</mosaic_0001>

<llo_original>
// kernel: ac_net_forward.1
$region0: #{ac_net_forward.1}
  #allocation0 [shape = 'u32[]', space=smem, size = 0x4, offset = 0x4, fixed_abs, tag = 'smem constant byte address 0x4 - core index']
  #allocation1 [shape = 'u32[144,128]{1,0:T(1,128)}', space=vmem, size = 0x12000, scoped, tag = 'internal scratch']
  %s0 = inlined_call_operand.vmem [shape: f32[2,4,256], index: 0, kind: input, shape index: {}]
  %s1 = inlined_call_operand.vmem [shape: f32[9,1,256], index: 1, kind: input, shape index: {}]
  %s2 = inlined_call_operand.vmem [shape: bf16[8,36], index: 2, kind: input, shape index: {}]
  %s3 = inlined_call_operand.vmem [shape: f32[8,1], index: 3, kind: input, shape index: {}]
  %s4 = inlined_call_operand.vmem [shape: bf16[16,72], index: 4, kind: input, shape index: {}]
  %s5 = inlined_call_operand.vmem [shape: f32[16,1], index: 5, kind: input, shape index: {}]
  %s6 = inlined_call_operand.vmem [shape: bf16[4096,32], index: 6, kind: input, shape index: {}]
  %s7 = inlined_call_operand.vmem [shape: f32[1,32], index: 7, kind: input, shape index: {}]
  %s8 = inlined_call_operand.vmem [shape: bf16[32,7], index: 8, kind: input, shape index: {}]
  %s9 = inlined_call_operand.vmem [shape: f32[1,7], index: 9, kind: input, shape index: {}]
  %s10 = inlined_call_operand.hbm [shape: f32[2,1,6], index: 10, kind: output, shape index: {0}]
  %s11 = inlined_call_operand.vmem [shape: f32[2,1,1], index: 11, kind: output, shape index: {1}]
  %12 = xla_tuple %s10, %s11
  %s13 = sld [smem:[#allocation0]]
  $region81: #{ac_net_forward.1} parent=0
    _
  %s15 = ssub.s32 1, %s13
  %s16 = scalar_select 0, %s15, %s13
  $region1: #{ac_net_forward.1} parent=0
    #allocation2 [shape = 'u8[1024]{0}', space=vmem, size = 0x400, scoped, tag = 'output window, operand 0']
    #allocation3 [shape = 's32[2]{0}', space=sflag, size = 0x8, scoped, tag = 'scoped memory for ac_net_forward.1']
    %17 = vsyncpa [#allocation3], 0
    %s18 = scalar_lea.sflag [#allocation3], 1
    %19 = vsyncpa %s18, 0
    loop: start=0, step=1, limit=4
    $region2: #{ac_net_forward.1} parent=1 // loop_pre_header
      _
    $region3: #{ac_net_forward.1} parent=1 // loop_header
      %s21 = sphi 0, %s25
      %p22 = scmp.ge.s32.totalorder %s21, 4
      %s31 = sphi 0, %s33
      %s34 = sphi 0, %s31
      %s35 = sphi 0, %s34
      %s51 = sphi 0, %s35
      %s55 = sphi 0, %s55
      %s57 = sphi 0, %s55
      %s58 = sphi 0, %s57
      %s72 = sphi 0, %s58
      %s76 = sphi 0, %s76
      %s78 = sphi 0, %s76
      %s79 = sphi 0, %s78
      %s93 = sphi 0, %s79
      %s97 = sphi 0, %s97
      %s99 = sphi 0, %s97
      %s100 = sphi 0, %s99
      %s114 = sphi 0, %s100
      %s118 = sphi 0, %s118
      %s120 = sphi 0, %s118
      %s121 = sphi 0, %s120
      %s135 = sphi 0, %s121
      %s139 = sphi 0, %s139
      %s141 = sphi 0, %s139
      %s142 = sphi 0, %s141
      %s156 = sphi 0, %s142
      %s160 = sphi 0, %s160
      %s162 = sphi 0, %s160
      %s163 = sphi 0, %s162
      %s177 = sphi 0, %s163
      %s181 = sphi 0, %s181
      %s183 = sphi 0, %s181
      %s184 = sphi 0, %s183
      %s198 = sphi 0, %s184
      %s202 = sphi 0, %s202
      %s204 = sphi 0, %s202
      %s205 = sphi 0, %s204
      %s219 = sphi 0, %s205
      %s223 = sphi 0, %s223
      %s225 = sphi 0, %s223
      %s226 = sphi 0, %s225
      %s240 = sphi 0, %s226
      %s246 = sphi 0, %s248
      %s249 = sphi 0, %s246
      %s250 = sphi 0, %s249
      %s266 = sphi 0, %s250
      %s272 = sphi 0, %s274
      %s275 = sphi 0, %s272
      %s276 = sphi 0, %s275
      %s292 = sphi 0, %s276
    $region4: #{ac_net_forward.1} parent=1 // loop_header_branch
      %24 = sbr.rel (%p22) target = $region8
    $region5: #{ac_net_forward.1} parent=1 // loop_body
      %s26 = ssub.s32 %s21, 1
      %s27 = ssub.s32 %s21, 2
      %s28 = sadd.s32 %s21, 1
      %s29 = ssub.s32 %s21, %s28
      %p30 = scmp.eq.s32.totalorder %s29, 0
      %s32 = sadd.s32 %s31, 1
      %s33 = scalar_select %p30, %s31, %s32
      %p36 = pneg %p30
      %p37 = scmp.eq.s32.totalorder %s21, 1
      %p38 = por %p36, %p37
      %p39 = scmp.ne.s32.totalorder %s31, %s34
      %p40 = scmp.eq.s32.totalorder %s21, 0
      %p41 = por %p39, %p40
      %p42 = scmp.ne.s32.totalorder %s31, %s34
      %p43 = scmp.eq.s32.totalorder %s26, 1
      %p44 = por %p42, %p43
      %p45 = scmp.ne.s32.totalorder %s34, %s35
      %p46 = scmp.eq.s32.totalorder %s26, 0
      %p47 = por %p45, %p46
      %p48 = scmp.ne.s32.totalorder %s34, %s35
      %p49 = scmp.eq.s32.totalorder %s27, 1
      %p50 = por %p48, %p49
      %p52 = scmp.ne.s32.totalorder %s35, %s51
      %p53 = scmp.eq.s32.totalorder %s27, 0
      %p54 = por %p52, %p53
      %s56 = sadd.s32 %s55, 1
      %p59 = scmp.eq.s32.totalorder %s21, 1
      %p60 = scmp.ne.s32.totalorder %s55, %s57
      %p61 = scmp.eq.s32.totalorder %s21, 0
      %p62 = por %p60, %p61
      %p63 = scmp.ne.s32.totalorder %s55, %s57
      %p64 = scmp.eq.s32.totalorder %s26, 1
      %p65 = por %p63, %p64
      %p66 = scmp.ne.s32.totalorder %s57, %s58
      %p67 = scmp.eq.s32.totalorder %s26, 0
      %p68 = por %p66, %p67
      %p69 = scmp.ne.s32.totalorder %s57, %s58
      %p70 = scmp.eq.s32.totalorder %s27, 1
      %p71 = por %p69, %p70
      %p73 = scmp.ne.s32.totalorder %s58, %s72
      %p74 = scmp.eq.s32.totalorder %s27, 0
      %p75 = por %p73, %p74
      %s77 = sadd.s32 %s76, 1
      %p80 = scmp.eq.s32.totalorder %s21, 1
      %p81 = scmp.ne.s32.totalorder %s76, %s78
      %p82 = scmp.eq.s32.totalorder %s21, 0
      %p83 = por %p81, %p82
      %p84 = scmp.ne.s32.totalorder %s76, %s78
      %p85 = scmp.eq.s32.totalorder %s26, 1
      %p86 = por %p84, %p85
      %p87 = scmp.ne.s32.totalorder %s78, %s79
      %p88 = scmp.eq.s32.totalorder %s26, 0
      %p89 = por %p87, %p88
      %p90 = scmp.ne.s32.totalorder %s78, %s79
      %p91 = scmp.eq.s32.totalorder %s27, 1
      %p92 = por %p90, %p91
      %p94 = scmp.ne.s32.totalorder %s79, %s93
      %p95 = scmp.eq.s32.totalorder %s27, 0
      %p96 = por %p94, %p95
      %s98 = sadd.s32 %s97, 1
      %p101 = scmp.eq.s32.totalorder %s21, 1
      %p102 = scmp.ne.s32.totalorder %s97, %s99
      %p103 = scmp.eq.s32.totalorder %s21, 0
      %p104 = por %p102, %p103
      %p105 = scmp.ne.s32.totalorder %s97, %s99
      %p106 = scmp.eq.s32.totalorder %s26, 1
      %p107 = por %p105, %p106
      %p108 = scmp.ne.s32.totalorder %s99, %s100
      %p109 = scmp.eq.s32.totalorder %s26, 0
      %p110 = por %p108, %p109
      %p111 = scmp.ne.s32.totalorder %s99, %s100
      %p112 = scmp.eq.s32.totalorder %s27, 1
      %p113 = por %p111, %p112
      %p115 = scmp.ne.s32.totalorder %s100, %s114
      %p116 = scmp.eq.s32.totalorder %s27, 0
      %p117 = por %p115, %p116
      %s119 = sadd.s32 %s118, 1
      %p122 = scmp.eq.s32.totalorder %s21, 1
      %p123 = scmp.ne.s32.totalorder %s118, %s120
      %p124 = scmp.eq.s32.totalorder %s21, 0
      %p125 = por %p123, %p124
      %p126 = scmp.ne.s32.totalorder %s118, %s120
      %p127 = scmp.eq.s32.totalorder %s26, 1
      %p128 = por %p126, %p127
      %p129 = scmp.ne.s32.totalorder %s120, %s121
      %p130 = scmp.eq.s32.totalorder %s26, 0
      %p131 = por %p129, %p130
      %p132 = scmp.ne.s32.totalorder %s120, %s121
      %p133 = scmp.eq.s32.totalorder %s27, 1
      %p134 = por %p132, %p133
      %p136 = scmp.ne.s32.totalorder %s121, %s135
      %p137 = scmp.eq.s32.totalorder %s27, 0
      %p138 = por %p136, %p137
      %s140 = sadd.s32 %s139, 1
      %p143 = scmp.eq.s32.totalorder %s21, 1
      %p144 = scmp.ne.s32.totalorder %s139, %s141
      %p145 = scmp.eq.s32.totalorder %s21, 0
      %p146 = por %p144, %p145
      %p147 = scmp.ne.s32.totalorder %s139, %s141
      %p148 = scmp.eq.s32.totalorder %s26, 1
      %p149 = por %p147, %p148
      %p150 = scmp.ne.s32.totalorder %s141, %s142
      %p151 = scmp.eq.s32.totalorder %s26, 0
      %p152 = por %p150, %p151
      %p153 = scmp.ne.s32.totalorder %s141, %s142
      %p154 = scmp.eq.s32.totalorder %s27, 1
      %p155 = por %p153, %p154
      %p157 = scmp.ne.s32.totalorder %s142, %s156
      %p158 = scmp.eq.s32.totalorder %s27, 0
      %p159 = por %p157, %p158
      %s161 = sadd.s32 %s160, 1
      %p164 = scmp.eq.s32.totalorder %s21, 1
      %p165 = scmp.ne.s32.totalorder %s160, %s162
      %p166 = scmp.eq.s32.totalorder %s21, 0
      %p167 = por %p165, %p166
      %p168 = scmp.ne.s32.totalorder %s160, %s162
      %p169 = scmp.eq.s32.totalorder %s26, 1
      %p170 = por %p168, %p169
      %p171 = scmp.ne.s32.totalorder %s162, %s163
      %p172 = scmp.eq.s32.totalorder %s26, 0
      %p173 = por %p171, %p172
      %p174 = scmp.ne.s32.totalorder %s162, %s163
      %p175 = scmp.eq.s32.totalorder %s27, 1
      %p176 = por %p174, %p175
      %p178 = scmp.ne.s32.totalorder %s163, %s177
      %p179 = scmp.eq.s32.totalorder %s27, 0
      %p180 = por %p178, %p179
      %s182 = sadd.s32 %s181, 1
      %p185 = scmp.eq.s32.totalorder %s21, 1
      %p186 = scmp.ne.s32.totalorder %s181, %s183
      %p187 = scmp.eq.s32.totalorder %s21, 0
      %p188 = por %p186, %p187
      %p189 = scmp.ne.s32.totalorder %s181, %s183
      %p190 = scmp.eq.s32.totalorder %s26, 1
      %p191 = por %p189, %p190
      %p192 = scmp.ne.s32.totalorder %s183, %s184
      %p193 = scmp.eq.s32.totalorder %s26, 0
      %p194 = por %p192, %p193
      %p195 = scmp.ne.s32.totalorder %s183, %s184
      %p196 = scmp.eq.s32.totalorder %s27, 1
      %p197 = por %p195, %p196
      %p199 = scmp.ne.s32.totalorder %s184, %s198
      %p200 = scmp.eq.s32.totalorder %s27, 0
      %p201 = por %p199, %p200
      %s203 = sadd.s32 %s202, 1
      %p206 = scmp.eq.s32.totalorder %s21, 1
      %p207 = scmp.ne.s32.totalorder %s202, %s204
      %p208 = scmp.eq.s32.totalorder %s21, 0
      %p209 = por %p207, %p208
      %p210 = scmp.ne.s32.totalorder %s202, %s204
      %p211 = scmp.eq.s32.totalorder %s26, 1
      %p212 = por %p210, %p211
      %p213 = scmp.ne.s32.totalorder %s204, %s205
      %p214 = scmp.eq.s32.totalorder %s26, 0
      %p215 = por %p213, %p214
      %p216 = scmp.ne.s32.totalorder %s204, %s205
      %p217 = scmp.eq.s32.totalorder %s27, 1
      %p218 = por %p216, %p217
      %p220 = scmp.ne.s32.totalorder %s205, %s219
      %p221 = scmp.eq.s32.totalorder %s27, 0
      %p222 = por %p220, %p221
      %s224 = sadd.s32 %s223, 1
      %p227 = scmp.eq.s32.totalorder %s21, 1
      %p228 = scmp.ne.s32.totalorder %s223, %s225
      %p229 = scmp.eq.s32.totalorder %s21, 0
      %p230 = por %p228, %p229
      %p231 = scmp.ne.s32.totalorder %s223, %s225
      %p232 = scmp.eq.s32.totalorder %s26, 1
      %p233 = por %p231, %p232
      %p234 = scmp.ne.s32.totalorder %s225, %s226
      %p235 = scmp.eq.s32.totalorder %s26, 0
      %p236 = por %p234, %p235
      %p237 = scmp.ne.s32.totalorder %s225, %s226
      %p238 = scmp.eq.s32.totalorder %s27, 1
      %p239 = por %p237, %p238
      %p241 = scmp.ne.s32.totalorder %s226, %s240
      %p242 = scmp.eq.s32.totalorder %s27, 0
      %p243 = por %p241, %p242
      %s244 = ssub.s32 %s21, %s28
      %p245 = scmp.eq.s32.totalorder %s244, 0
      %s247 = sadd.s32 %s246, 1
      %s248 = scalar_select %p245, %s246, %s247
      %p251 = pneg %p245
      %p252 = scmp.eq.s32.totalorder %s21, 1
      %p253 = por %p251, %p252
      %p254 = scmp.ne.s32.totalorder %s246, %s249
      %p255 = scmp.eq.s32.totalorder %s21, 0
      %p256 = por %p254, %p255
      %p257 = scmp.ne.s32.totalorder %s246, %s249
      %p258 = scmp.eq.s32.totalorder %s26, 1
      %p259 = por %p257, %p258
      %p260 = scmp.ne.s32.totalorder %s249, %s250
      %p261 = scmp.eq.s32.totalorder %s26, 0
      %p262 = por %p260, %p261
      %p263 = scmp.ne.s32.totalorder %s249, %s250
      %p264 = scmp.eq.s32.totalorder %s27, 1
      %p265 = por %p263, %p264
      %p267 = scmp.ne.s32.totalorder %s250, %s266
      %p268 = scmp.eq.s32.totalorder %s27, 0
      %p269 = por %p267, %p268
      %s270 = ssub.s32 %s21, %s28
      %p271 = scmp.eq.s32.totalorder %s270, 0
      %s273 = sadd.s32 %s272, 1
      %s274 = scalar_select %p271, %s272, %s273
      %p277 = pneg %p271
      %p278 = scmp.eq.s32.totalorder %s21, 1
      %p279 = por %p277, %p278
      %p280 = scmp.ne.s32.totalorder %s272, %s275
      %p281 = scmp.eq.s32.totalorder %s21, 0
      %p282 = por %p280, %p281
      %p283 = scmp.ne.s32.totalorder %s272, %s275
      %p284 = scmp.eq.s32.totalorder %s26, 1
      %p285 = por %p283, %p284
      %p286 = scmp.ne.s32.totalorder %s275, %s276
      %p287 = scmp.eq.s32.totalorder %s26, 0
      %p288 = por %p286, %p287
      %p289 = scmp.ne.s32.totalorder %s275, %s276
      %p290 = scmp.eq.s32.totalorder %s27, 1
      %p291 = por %p289, %p290
      %p293 = scmp.ne.s32.totalorder %s276, %s292
      %p294 = scmp.eq.s32.totalorder %s27, 0
      %p295 = por %p293, %p294
      %p296 = scmp.le.s32.totalorder 1, %s21
      %p297 = scmp.lt.s32.totalorder %s21, 3
      %p298 = pnand %p296, %p297
      %p299 = pneg %p298
      // Predicated region
      $region9: #{ac_net_forward.1} parent=5 // pred_check
        _
      $region10: #{ac_net_forward.1} parent=5 // pred_check_branch
        %301 = sbr.rel (%p298) target = $region12
      $region11: #{ac_net_forward.1} parent=5 // pred_region
        %s302 = ssub.s32 %s21, 1
        // Predicated region
        $region13: #{ac_net_forward.1} parent=11 // pred_check
          %p303 = pneg %p68
        $region14: #{ac_net_forward.1} parent=11 // pred_check_branch
          %305 = sbr.rel (%p303) target = $region16
        $region15: #{ac_net_forward.1} parent=11 // pred_region
          _
        $region16: #{ac_net_forward.1} parent=11 // pred_fallthru
          _
        // Predicated region
        $region17: #{ac_net_forward.1} parent=11 // pred_check
          %p306 = pneg %p89
        $region18: #{ac_net_forward.1} parent=11 // pred_check_branch
          %308 = sbr.rel (%p306) target = $region20
        $region19: #{ac_net_forward.1} parent=11 // pred_region
          _
        $region20: #{ac_net_forward.1} parent=11 // pred_fallthru
          _
        // Predicated region
        $region21: #{ac_net_forward.1} parent=11 // pred_check
          %p309 = pneg %p110
        $region22: #{ac_net_forward.1} parent=11 // pred_check_branch
          %311 = sbr.rel (%p309) target = $region24
        $region23: #{ac_net_forward.1} parent=11 // pred_region
          _
        $region24: #{ac_net_forward.1} parent=11 // pred_fallthru
          _
        // Predicated region
        $region25: #{ac_net_forward.1} parent=11 // pred_check
          %p312 = pneg %p131
        $region26: #{ac_net_forward.1} parent=11 // pred_check_branch
          %314 = sbr.rel (%p312) target = $region28
        $region27: #{ac_net_forward.1} parent=11 // pred_region
          _
        $region28: #{ac_net_forward.1} parent=11 // pred_fallthru
          _
        // Predicated region
        $region29: #{ac_net_forward.1} parent=11 // pred_check
          %p315 = pneg %p152
        $region30: #{ac_net_forward.1} parent=11 // pred_check_branch
          %317 = sbr.rel (%p315) target = $region32
        $region31: #{ac_net_forward.1} parent=11 // pred_region
          _
        $region32: #{ac_net_forward.1} parent=11 // pred_fallthru
          _
        // Predicated region
        $region33: #{ac_net_forward.1} parent=11 // pred_check
          %p318 = pneg %p173
        $region34: #{ac_net_forward.1} parent=11 // pred_check_branch
          %320 = sbr.rel (%p318) target = $region36
        $region35: #{ac_net_forward.1} parent=11 // pred_region
          _
        $region36: #{ac_net_forward.1} parent=11 // pred_fallthru
          _
        // Predicated region
        $region37: #{ac_net_forward.1} parent=11 // pred_check
          %p321 = pneg %p194
        $region38: #{ac_net_forward.1} parent=11 // pred_check_branch
          %323 = sbr.rel (%p321) target = $region40
        $region39: #{ac_net_forward.1} parent=11 // pred_region
          _
        $region40: #{ac_net_forward.1} parent=11 // pred_fallthru
          _
        // Predicated region
        $region41: #{ac_net_forward.1} parent=11 // pred_check
          %p324 = pneg %p215
        $region42: #{ac_net_forward.1} parent=11 // pred_check_branch
          %326 = sbr.rel (%p324) target = $region44
        $region43: #{ac_net_forward.1} parent=11 // pred_region
          _
        $region44: #{ac_net_forward.1} parent=11 // pred_fallthru
          _
        // Predicated region
        $region45: #{ac_net_forward.1} parent=11 // pred_check
          %p327 = pneg %p236
        $region46: #{ac_net_forward.1} parent=11 // pred_check_branch
          %329 = sbr.rel (%p327) target = $region48
        $region47: #{ac_net_forward.1} parent=11 // pred_region
          _
        $region48: #{ac_net_forward.1} parent=11 // pred_fallthru
          _
      $region12: #{ac_net_forward.1} parent=5 // pred_fallthru
        _
      %p330 = scmp.lt.s32.totalorder %s21, 2
      // Predicated region
      $region49: #{ac_net_forward.1} parent=5 // pred_check
        %p331 = pneg %p330
      $region50: #{ac_net_forward.1} parent=5 // pred_check_branch
        %333 = sbr.rel (%p331) target = $region52
      $region51: #{ac_net_forward.1} parent=5 // pred_region
        // Predicated region
        $region53: #{ac_net_forward.1} parent=51 // pred_check
          %p334 = pneg %p41
        $region54: #{ac_net_forward.1} parent=51 // pred_check_branch
          %336 = sbr.rel (%p334) target = $region56
        $region55: #{ac_net_forward.1} parent=51 // pred_region
          %p337 = scmp.lt.s32.totalorder %s21, 1
          %s338 = scalar_select %p337, %s21, 1
          %s339 = smul.addr %s338, 2
          %s340 = smul.addr %s339, 4
          %s341 = scalar_lea.vmem %s0, %s340
        $region56: #{ac_net_forward.1} parent=51 // pred_fallthru
          _
      $region52: #{ac_net_forward.1} parent=5 // pred_fallthru
        _
      %p342 = scmp.le.s32.totalorder 1, %s21
      %p343 = scmp.lt.s32.totalorder %s21, 3
      %p344 = pnand %p342, %p343
      %p345 = pneg %p344
      // Predicated region
      $region57: #{ac_net_forward.1} parent=5 // pred_check
        _
      $region58: #{ac_net_forward.1} parent=5 // pred_check_branch
        %347 = sbr.rel (%p344) target = $region60
      $region59: #{ac_net_forward.1} parent=5 // pred_region
        %s348 = ssub.s32 %s21, 1
        %p349 = scmp.lt.s32.totalorder %s26, 1
        %s350 = scalar_select %p349, %s26, 1
        %s351 = smul.addr %s350, 2
        %s352 = smul.addr %s351, 4
        %s353 = scalar_lea.vmem %s0, %s352
        %p354 = pneg %p47
        %p355 = pneg %p44
        %p356 = pneg %p68
        %p357 = pneg %p65
        %p358 = pneg %p89
        %p359 = pneg %p86
        %p360 = pneg %p110
        %p361 = pneg %p107
        %p362 = pneg %p131
        %p363 = pneg %p128
        %p364 = pneg %p152
        %p365 = pneg %p149
        %p366 = pneg %p173
        %p367 = pneg %p170
        %p368 = pneg %p194
        %p369 = pneg %p191
        %p370 = pneg %p215
        %p371 = pneg %p212
        %p372 = pneg %p236
        %p373 = pneg %p233
        %p374 = pneg %p262
        %p375 = pneg %p259
        %s376 = sand.u32 %s249, 1
        %s377 = scalar_lea.sflag [#allocation3], %s376
        %s378 = sand.u32 %s249, 1
        %s379 = scalar_lea.vmem [#allocation2], %s378
        %p380 = pneg %p288
        %p381 = pneg %p285
        %p382 = scmp.lt.s32.totalorder %s26, 1
        %s383 = scalar_select %p382, %s26, 1
        %s384 = scalar_lea.vmem %s11, %s383
        %p385 = scmp.lt.s32.totalorder %s26, 1
        %s386 = scalar_select %p385, %s26, 1
        %s387 = smul.addr %s386, 2
        %s388 = smul.addr %s387, 4
        %s389 = scalar_lea.vmem %s0, %s388
        %p390 = scmp.lt.s32.totalorder %s26, 1
        %s391 = scalar_select %p390, %s26, 1
        %s392 = scalar_lea.vmem %s11, %s391
        %v394 = vld [vmem:[%s389] sm:$0xff]
        %v396 = vcombine.high %v394, %v394
        %397 = vrot.lane.b32.xlu0 %v394, 17
        %v398 = vpop.permute.xlu0 %397
        %399 = vrot.lane.b32.xlu0 %v396, 17
        %v400 = vpop.permute.xlu0 %399
        %vm401 = vcmask 138240
        %v402 = vsel %vm401, %v398, %v400
        %v405 = vsel %vm401, 0.0, %v398
        %v406 = vld [vmem:[%s1] sm:$0x3]
        %v408 = vlaneseq
        %v409 = vshrl.u32 %v408, 7
        %v410 = vsub.s32 0, %v409
        %v411 = vrot.slane %v406, %v410
        %v412 = vlaneseq
        %v413 = vshrl.u32 %v412, 7
        %v414 = vsub.s32 1, %v413
        %v415 = vrot.slane %v406, %v414
        %v418 = vmul.f32 %v405, %v411
        %v419 = vmul.f32 %v402, %v415
        %420 = vrot.lane.b32.xlu0 %v394, 16
        %v421 = vpop.permute.xlu0 %420
        %422 = vrot.lane.b32.xlu0 %v396, 16
        %v423 = vpop.permute.xlu0 %422
        %vm424 = vcmask 130048
        %v425 = vsel %vm424, %v421, %v423
        %v428 = vsel %vm424, 0.0, %v421
        %s429 = scalar_lea.vmem %s1, 2
        %v430 = vld [vmem:[%s429] sm:$0x3]
        %v432 = vlaneseq
        %v433 = vshrl.u32 %v432, 7
        %v434 = vsub.s32 0, %v433
        %v435 = vrot.slane %v430, %v434
        %v436 = vlaneseq
        %v437 = vshrl.u32 %v436, 7
        %v438 = vsub.s32 1, %v437
        %v439 = vrot.slane %v430, %v438
        %v442 = vmul.f32 %v428, %v435
        %v443 = vmul.f32 %v425, %v439
        %444 = vrot.lane.b32.xlu0 %v394, 15
        %v445 = vpop.permute.xlu0 %444
        %446 = vrot.lane.b32.xlu0 %v396, 15
        %v447 = vpop.permute.xlu0 %446
        %vm448 = vcmask 121856
        %v449 = vsel %vm448, %v445, %v447
        %v452 = vsel %vm448, 0.0, %v445
        %s453 = scalar_lea.vmem %s1, 4
        %v454 = vld [vmem:[%s453] sm:$0x3]
        %v456 = vlaneseq
        %v457 = vshrl.u32 %v456, 7
        %v458 = vsub.s32 0, %v457
        %v459 = vrot.slane %v454, %v458
        %v460 = vlaneseq
        %v461 = vshrl.u32 %v460, 7
        %v462 = vsub.s32 1, %v461
        %v463 = vrot.slane %v454, %v462
        %v466 = vmul.f32 %v452, %v459
        %v467 = vmul.f32 %v449, %v463
        %468 = vrot.lane.b32.xlu0 %v394, 1
        %v469 = vpop.permute.xlu0 %468
        %470 = vrot.lane.b32.xlu0 %v396, 1
        %v471 = vpop.permute.xlu0 %470
        %vm472 = vcmask 7168
        %v473 = vsel %vm472, %v469, %v471
        %v476 = vsel %vm472, 0.0, %v469
        %s477 = scalar_lea.vmem %s1, 6
        %v478 = vld [vmem:[%s477] sm:$0x3]
        %v480 = vlaneseq
        %v481 = vshrl.u32 %v480, 7
        %v482 = vsub.s32 0, %v481
        %v483 = vrot.slane %v478, %v482
        %v484 = vlaneseq
        %v485 = vshrl.u32 %v484, 7
        %v486 = vsub.s32 1, %v485
        %v487 = vrot.slane %v478, %v486
        %v490 = vmul.f32 %v476, %v483
        %v491 = vmul.f32 %v473, %v487
        %s492 = scalar_lea.vmem %s1, 8
        %v493 = vld [vmem:[%s492] sm:$0x3]
        %v495 = vlaneseq
        %v496 = vshrl.u32 %v495, 7
        %v497 = vsub.s32 0, %v496
        %v498 = vrot.slane %v493, %v497
        %v499 = vlaneseq
        %v500 = vshrl.u32 %v499, 7
        %v501 = vsub.s32 1, %v500
        %v502 = vrot.slane %v493, %v501
        %v503 = vcombine.low %v498, %v502
        %v505 = vmul.f32 %v394, %v503
        %506 = vrot.lane.b32.xlu0 %v394, 127
        %v507 = vpop.permute.xlu0 %506
        %508 = vrot.lane.b32.xlu0 %v396, 127
        %v509 = vpop.permute.xlu0 %508
        %vm510 = vcmask 1039360
        %v511 = vsel %vm510, %v507, %v509
        %v514 = vsel %vm510, %v509, 0.0
        %s515 = scalar_lea.vmem %s1, 10
        %v516 = vld [vmem:[%s515] sm:$0x3]
        %v518 = vlaneseq
        %v519 = vshrl.u32 %v518, 7
        %v520 = vsub.s32 0, %v519
        %v521 = vrot.slane %v516, %v520
        %v522 = vlaneseq
        %v523 = vshrl.u32 %v522, 7
        %v524 = vsub.s32 1, %v523
        %v525 = vrot.slane %v516, %v524
        %v528 = vmul.f32 %v511, %v521
        %v529 = vmul.f32 %v514, %v525
        %530 = vrot.lane.b32.xlu0 %v394, 113
        %v531 = vpop.permute.xlu0 %530
        %532 = vrot.lane.b32.xlu0 %v396, 113
        %v533 = vpop.permute.xlu0 %532
        %vm534 = vcmask 924672
        %v535 = vsel %vm534, %v531, %v533
        %v538 = vsel %vm534, %v533, 0.0
        %s539 = scalar_lea.vmem %s1, 12
        %v540 = vld [vmem:[%s539] sm:$0x3]
        %v542 = vlaneseq
        %v543 = vshrl.u32 %v542, 7
        %v544 = vsub.s32 0, %v543
        %v545 = vrot.slane %v540, %v544
        %v546 = vlaneseq
        %v547 = vshrl.u32 %v546, 7
        %v548 = vsub.s32 1, %v547
        %v549 = vrot.slane %v540, %v548
        %v552 = vmul.f32 %v535, %v545
        %v553 = vmul.f32 %v538, %v549
        %554 = vrot.lane.b32.xlu0 %v394, 112
        %v555 = vpop.permute.xlu0 %554
        %556 = vrot.lane.b32.xlu0 %v396, 112
        %v557 = vpop.permute.xlu0 %556
        %vm558 = vcmask 916480
        %v559 = vsel %vm558, %v555, %v557
        %v562 = vsel %vm558, %v557, 0.0
        %s563 = scalar_lea.vmem %s1, 14
        %v564 = vld [vmem:[%s563] sm:$0x3]
        %v566 = vlaneseq
        %v567 = vshrl.u32 %v566, 7
        %v568 = vsub.s32 0, %v567
        %v569 = vrot.slane %v564, %v568
        %v570 = vlaneseq
        %v571 = vshrl.u32 %v570, 7
        %v572 = vsub.s32 1, %v571
        %v573 = vrot.slane %v564, %v572
        %v576 = vmul.f32 %v559, %v569
        %v577 = vmul.f32 %v562, %v573
        %578 = vrot.lane.b32.xlu0 %v394, 111
        %v579 = vpop.permute.xlu0 %578
        %580 = vrot.lane.b32.xlu0 %v396, 111
        %v581 = vpop.permute.xlu0 %580
        %vm582 = vcmask 908288
        %v583 = vsel %vm582, %v579, %v581
        %v586 = vsel %vm582, %v581, 0.0
        %s587 = scalar_lea.vmem %s1, 16
        %v588 = vld [vmem:[%s587] sm:$0x3]
        %v590 = vlaneseq
        %v591 = vshrl.u32 %v590, 7
        %v592 = vsub.s32 0, %v591
        %v593 = vrot.slane %v588, %v592
        %v594 = vlaneseq
        %v595 = vshrl.u32 %v594, 7
        %v596 = vsub.s32 1, %v595
        %v597 = vrot.slane %v588, %v596
        %v600 = vmul.f32 %v583, %v593
        %v601 = vmul.f32 %v586, %v597
        %v604 = vrot.slane %v442, 4
        %v605 = vrot.slane %v443, 4
        %v610 = vrot.slane %v490, 4
        %v611 = vrot.slane %v491, 4
        %v615 = vcombine.high %v505, %v505
        %v619 = vrot.slane %v528, 4
        %v620 = vrot.slane %v529, 4
        %v625 = vrot.slane %v576, 4
        %v626 = vrot.slane %v577, 4
        %vm629 = vcmask 1043456
        %v630 = vsel %vm629, %v418, %v604
        %v631 = vsel %vm629, %v419, %v605
        %v632 = vsel %vm629, %v466, %v610
        %v633 = vsel %vm629, %v467, %v611
        %v634 = vsel %vm629, %v505, %v619
        %v635 = vsel %vm629, %v615, %v620
        %v636 = vsel %vm629, %v552, %v625
        %v637 = vsel %vm629, %v553, %v626
        %v638 = vpack.c.bf16 %v632, %v630
        %v639 = vpack.c.bf16 %v633, %v631
        %v640 = vpack.c.bf16 %v636, %v634
        %v641 = vpack.c.bf16 %v637, %v635
        %v642 = vpack.c.bf16 %v600, %v600
        %v643 = vpack.c.bf16 %v601, %v601
        %v644 = vld [vmem:[%s2] sm:$0xf]
        %v645 = vld [vmem:[%s3] sm:$0xff]
        %647 = vset.pattern.permute.xlu0 0
        %648 = vperm.xlu0 %647, %v645
        %v649 = vpop.permute.xlu0 %648
        %vm651 = vcmask 293888
        %v653 = vsel %vm651, %v644, 0
        %vm655 = vcmask 1041408
        %v657 = vsel %vm655, %v642, 0
        %v660 = vsel %vm655, %v643, 0
        %662 = vmatprep.subr.bf16.mxu0 %v639
        %663 = vmatpush1.bf16.msra.mxu0 %v638
        %664 = vmatprep.subr.bf16.mxu0 %v641
        %665 = vmatpush1.bf16.msra.mxu0 %v640
        %666 = vmatprep.subr.bf16.mxu0 %v660
        %667 = vmatpush1.bf16.msra.mxu0 %v657
        %668 = vmatprep.subr.bf16.mxu0 0
        %669 = vmatpush1.bf16.msra.mxu0 0
        %670 = vmatprep.subr.bf16.mxu0 0
        %671 = vmatpush1.bf16.msra.mxu0 0
        %672 = vmatprep.subr.bf16.mxu0 0
        %673 = vmatpush1.bf16.msra.mxu0 0
        %674 = vmatprep.subr.bf16.mxu0 0
        %675 = vmatpush1.bf16.msra.mxu0 0
        %676 = vmatprep.subr.bf16.mxu0 0
        %677 = vmatpush1.bf16.msra.mxu0 0
        %678 = vmatprep.subr.bf16.mxu0 0
        %679 = vmatpush1.bf16.msra.mxu0 0
        %680 = vmatprep.subr.bf16.mxu0 0
        %681 = vmatpush1.bf16.msra.mxu0 0
        %682 = vmatprep.subr.bf16.mxu0 0
        %683 = vmatpush1.bf16.msra.mxu0 0
        %684 = vmatprep.subr.bf16.mxu0 0
        %685 = vmatpush1.bf16.msra.mxu0 0
        %686 = vmatprep.subr.bf16.mxu0 0
        %687 = vmatpush1.bf16.msra.mxu0 0
        %688 = vmatprep.subr.bf16.mxu0 0
        %689 = vmatpush1.bf16.msra.mxu0 0
        %690 = vmatprep.subr.bf16.mxu0 0
        %691 = vmatpush1.bf16.msra.mxu0 0
        %692 = vmatprep.subr.bf16.mxu0 0
        %693 = vmatpush1.bf16.msra.mxu0 0
        %694 = vmatprep.mubr.bf16.mxu0 0
        %695 = vmatmul.mubr.bf16.gmra.mrb[0].mxu0 %v653
        %v696 = vpop.f32.mrb[0].mxu0
        %v697 = vadd.f32 %v649, %v696
        %v698 = vpop.f32.mrb[0].mxu0
        %v699 = vadd.f32 %v649, %v698
        %v700 = vpop.f32.mrb[0].mxu0
        %v701 = vpop.f32.mrb[0].mxu0
        %702 = vdwg.mxu0
        %v703 = vmax.f32 %v697, 0.0
        %v704 = vmax.f32 %v699, 0.0
        %707 = vrot.lane.b32.xlu0 %v703, 17
        %v708 = vpop.permute.xlu0 %707
        %709 = vrot.lane.b32.xlu0 %v704, 17
        %v710 = vpop.permute.xlu0 %709
        %v711 = vsel %vm401, %v708, %v710
        %v714 = vsel %vm401, 0.0, %v708
        %v715 = vmul.f32 %v714, %v411
        %v716 = vmul.f32 %v711, %v415
        %717 = vrot.lane.b32.xlu0 %v703, 16
        %v718 = vpop.permute.xlu0 %717
        %719 = vrot.lane.b32.xlu0 %v704, 16
        %v720 = vpop.permute.xlu0 %719
        %v721 = vsel %vm424, %v718, %v720
        %v724 = vsel %vm424, 0.0, %v718
        %v725 = vmul.f32 %v724, %v435
        %v726 = vmul.f32 %v721, %v439
        %727 = vrot.lane.b32.xlu0 %v703, 15
        %v728 = vpop.permute.xlu0 %727
        %729 = vrot.lane.b32.xlu0 %v704, 15
        %v730 = vpop.permute.xlu0 %729
        %v731 = vsel %vm448, %v728, %v730
        %v734 = vsel %vm448, 0.0, %v728
        %v735 = vmul.f32 %v734, %v459
        %v736 = vmul.f32 %v731, %v463
        %737 = vrot.lane.b32.xlu0 %v703, 1
        %v738 = vpop.permute.xlu0 %737
        %739 = vrot.lane.b32.xlu0 %v704, 1
        %v740 = vpop.permute.xlu0 %739
        %v741 = vsel %vm472, %v738, %v740
        %v744 = vsel %vm472, 0.0, %v738
        %v745 = vmul.f32 %v744, %v483
        %v746 = vmul.f32 %v741, %v487
        %v749 = vmul.f32 %v703, %v498
        %v750 = vmul.f32 %v704, %v502
        %751 = vrot.lane.b32.xlu0 %v703, 127
        %v752 = vpop.permute.xlu0 %751
        %753 = vrot.lane.b32.xlu0 %v704, 127
        %v754 = vpop.permute.xlu0 %753
        %v755 = vsel %vm510, %v752, %v754
        %v758 = vsel %vm510, %v754, 0.0
        %v759 = vmul.f32 %v755, %v521
        %v760 = vmul.f32 %v758, %v525
        %761 = vrot.lane.b32.xlu0 %v703, 113
        %v762 = vpop.permute.xlu0 %761
        %763 = vrot.lane.b32.xlu0 %v704, 113
        %v764 = vpop.permute.xlu0 %763
        %v765 = vsel %vm534, %v762, %v764
        %v768 = vsel %vm534, %v764, 0.0
        %v769 = vmul.f32 %v765, %v545
        %v770 = vmul.f32 %v768, %v549
        %771 = vrot.lane.b32.xlu0 %v703, 112
        %v772 = vpop.permute.xlu0 %771
        %773 = vrot.lane.b32.xlu0 %v704, 112
        %v774 = vpop.permute.xlu0 %773
        %v775 = vsel %vm558, %v772, %v774
        %v778 = vsel %vm558, %v774, 0.0
        %v779 = vmul.f32 %v775, %v569
        %v780 = vmul.f32 %v778, %v573
        %781 = vrot.lane.b32.xlu0 %v703, 111
        %v782 = vpop.permute.xlu0 %781
        %783 = vrot.lane.b32.xlu0 %v704, 111
        %v784 = vpop.permute.xlu0 %783
        %v785 = vsel %vm582, %v782, %v784
        %v788 = vsel %vm582, %v784, 0.0
        %v789 = vmul.f32 %v785, %v593
        %v790 = vmul.f32 %v788, %v597
        %v791 = vpack.c.bf16 %v725, %v715
        %v792 = vpack.c.bf16 %v726, %v716
        %v793 = vpack.c.bf16 %v745, %v735
        %v794 = vpack.c.bf16 %v746, %v736
        %v795 = vpack.c.bf16 %v759, %v749
        %v796 = vpack.c.bf16 %v760, %v750
        %v797 = vpack.c.bf16 %v779, %v769
        %v798 = vpack.c.bf16 %v780, %v770
        %v799 = vpack.c.bf16 %v789, %v789
        %v800 = vpack.c.bf16 %v790, %v790
        %v801 = vld [vmem:[%s4] sm:$0xf]
        %v802 = vld [vmem:[%s4 + $0x4] sm:$0xf]
        %v803 = vld [vmem:[%s5] sm:$0xff]
        %v804 = vld [vmem:[%s5 + $0x8] sm:$0xff]
        %806 = vset.pattern.permute.xlu0 0
        %807 = vperm.xlu0 %806, %v803
        %v808 = vpop.permute.xlu0 %807
        %811 = vset.pattern.permute.xlu0 0
        %812 = vperm.xlu0 %811, %v804
        %v813 = vpop.permute.xlu0 %812
        %v817 = vunpack.c.l.b16 %v801
        %v818 = vunpack.c.l.b16 %v802
        %v819 = vpack.c.b16 %v818, %v817
        %vm820 = vcmask 588800
        %v822 = vsel %vm820, %v819, 0
        %v825 = vsel %vm629, %v799, 0
        %v828 = vsel %vm629, %v800, 0
        %830 = vmatprep.subr.bf16.mxu0 %v792
        %831 = vmatpush1.bf16.msra.mxu0 %v791
        %832 = vmatprep.subr.bf16.mxu0 %v794
        %833 = vmatpush1.bf16.msra.mxu0 %v793
        %834 = vmatprep.subr.bf16.mxu0 %v796
        %835 = vmatpush1.bf16.msra.mxu0 %v795
        %836 = vmatprep.subr.bf16.mxu0 %v798
        %837 = vmatpush1.bf16.msra.mxu0 %v797
        %838 = vmatprep.subr.bf16.mxu0 %v828
        %839 = vmatpush1.bf16.msra.mxu0 %v825
        %840 = vmatprep.subr.bf16.mxu0 0
        %841 = vmatpush1.bf16.msra.mxu0 0
        %842 = vmatprep.subr.bf16.mxu0 0
        %843 = vmatpush1.bf16.msra.mxu0 0
        %844 = vmatprep.subr.bf16.mxu0 0
        %845 = vmatpush1.bf16.msra.mxu0 0
        %846 = vmatprep.subr.bf16.mxu0 0
        %847 = vmatpush1.bf16.msra.mxu0 0
        %848 = vmatprep.subr.bf16.mxu0 0
        %849 = vmatpush1.bf16.msra.mxu0 0
        %850 = vmatprep.subr.bf16.mxu0 0
        %851 = vmatpush1.bf16.msra.mxu0 0
        %852 = vmatprep.subr.bf16.mxu0 0
        %853 = vmatpush1.bf16.msra.mxu0 0
        %854 = vmatprep.subr.bf16.mxu0 0
        %855 = vmatpush1.bf16.msra.mxu0 0
        %856 = vmatprep.subr.bf16.mxu0 0
        %857 = vmatpush1.bf16.msra.mxu0 0
        %858 = vmatprep.subr.bf16.mxu0 0
        %859 = vmatpush1.bf16.msra.mxu0 0
        %860 = vmatprep.subr.bf16.mxu0 0
        %861 = vmatpush1.bf16.msra.mxu0 0
        %862 = vmatprep.mubr.bf16.mxu0 0
        %863 = vmatmul.mubr.bf16.gmra.mrb[0].mxu0 %v822
        %v864 = vpop.f32.mrb[0].mxu0
        %v865 = vadd.f32 %v808, %v864
        %v866 = vpop.f32.mrb[0].mxu0
        %v867 = vadd.f32 %v808, %v866
        %v868 = vpop.f32.mrb[0].mxu0
        %v869 = vadd.f32 %v813, %v868
        %v870 = vpop.f32.mrb[0].mxu0
        %v871 = vadd.f32 %v813, %v870
        %872 = vdwg.mxu0
        %v873 = vmax.f32 %v865, 0.0
        %v874 = vmax.f32 %v867, 0.0
        %v875 = vmax.f32 %v869, 0.0
        %v876 = vmax.f32 %v871, 0.0
        %v879 = vrot.slane %v873, 1
        %v880 = vrot.slane %v874, 1
        %v883 = vrot.slane %v873, 2
        %v884 = vrot.slane %v874, 2
        %v887 = vrot.slane %v873, 3
        %v888 = vrot.slane %v874, 3
        %v891 = vrot.slane %v873, 4
        %v892 = vrot.slane %v874, 4
        %v895 = vrot.slane %v873, 5
        %v896 = vrot.slane %v874, 5
        %v899 = vrot.slane %v873, 6
        %v900 = vrot.slane %v874, 6
        %v903 = vrot.slane %v873, 7
        %v904 = vrot.slane %v874, 7
        %v909 = vrot.slane %v875, 1
        %v910 = vrot.slane %v876, 1
        %v913 = vrot.slane %v875, 2
        %v914 = vrot.slane %v876, 2
        %v917 = vrot.slane %v875, 3
        %v918 = vrot.slane %v876, 3
        %v921 = vrot.slane %v875, 4
        %v922 = vrot.slane %v876, 4
        %v925 = vrot.slane %v875, 5
        %v926 = vrot.slane %v876, 5
        %v929 = vrot.slane %v875, 6
        %v930 = vrot.slane %v876, 6
        %v933 = vrot.slane %v875, 7
        %v934 = vrot.slane %v876, 7
        %v937 = vpack.c.bf16 %v873, %v873
        %v938 = vpack.c.bf16 %v874, %v874
        %v939 = vpack.c.bf16 %v879, %v879
        %v940 = vpack.c.bf16 %v880, %v880
        %v941 = vpack.c.bf16 %v883, %v883
        %v942 = vpack.c.bf16 %v884, %v884
        %v943 = vpack.c.bf16 %v887, %v887
        %v944 = vpack.c.bf16 %v888, %v888
        %v945 = vpack.c.bf16 %v891, %v891
        %v946 = vpack.c.bf16 %v892, %v892
        %v947 = vpack.c.bf16 %v895, %v895
        %v948 = vpack.c.bf16 %v896, %v896
        %v949 = vpack.c.bf16 %v899, %v899
        %v950 = vpack.c.bf16 %v900, %v900
        %v951 = vpack.c.bf16 %v903, %v903
        %v952 = vpack.c.bf16 %v904, %v904
        %v953 = vpack.c.bf16 %v875, %v875
        %v954 = vpack.c.bf16 %v876, %v876
        %v955 = vpack.c.bf16 %v909, %v909
        %v956 = vpack.c.bf16 %v910, %v910
        %v957 = vpack.c.bf16 %v913, %v913
        %v958 = vpack.c.bf16 %v914, %v914
        %v959 = vpack.c.bf16 %v917, %v917
        %v960 = vpack.c.bf16 %v918, %v918
        %v961 = vpack.c.bf16 %v921, %v921
        %v962 = vpack.c.bf16 %v922, %v922
        %v963 = vpack.c.bf16 %v925, %v925
        %v964 = vpack.c.bf16 %v926, %v926
        %v965 = vpack.c.bf16 %v929, %v929
        %v966 = vpack.c.bf16 %v930, %v930
        %v967 = vpack.c.bf16 %v933, %v933
        %v968 = vpack.c.bf16 %v934, %v934
        %v969 = vld [vmem:[%s6] sm:$0xf]
        %v970 = vld [vmem:[%s6 + $0x4] sm:$0xf]
        %v971 = vld [vmem:[%s6 + $0x8] sm:$0xf]
        %v972 = vld [vmem:[%s6 + $0xc] sm:$0xf]
        %v973 = vld [vmem:[%s6 + $0x10] sm:$0xf]
        %v974 = vld [vmem:[%s6 + $0x14] sm:$0xf]
        %v975 = vld [vmem:[%s6 + $0x18] sm:$0xf]
        %v976 = vld [vmem:[%s6 + $0x1c] sm:$0xf]
        %v977 = vld [vmem:[%s6 + $0x20] sm:$0xf]
        %v978 = vld [vmem:[%s6 + $0x24] sm:$0xf]
        %v979 = vld [vmem:[%s6 + $0x28] sm:$0xf]
        %v980 = vld [vmem:[%s6 + $0x2c] sm:$0xf]
        %v981 = vld [vmem:[%s6 + $0x30] sm:$0xf]
        %v982 = vld [vmem:[%s6 + $0x34] sm:$0xf]
        %v983 = vld [vmem:[%s6 + $0x38] sm:$0xf]
        %v984 = vld [vmem:[%s6 + $0x3c] sm:$0xf]
        %v985 = vld [vmem:[%s6 + $0x40] sm:$0xf]
        %v986 = vld [vmem:[%s6 + $0x44] sm:$0xf]
        %v987 = vld [vmem:[%s6 + $0x48] sm:$0xf]
        %v988 = vld [vmem:[%s6 + $0x4c] sm:$0xf]
        %v989 = vld [vmem:[%s6 + $0x50] sm:$0xf]
        %v990 = vld [vmem:[%s6 + $0x54] sm:$0xf]
        %v991 = vld [vmem:[%s6 + $0x58] sm:$0xf]
        %v992 = vld [vmem:[%s6 + $0x5c] sm:$0xf]
        %v993 = vld [vmem:[%s6 + $0x60] sm:$0xf]
        %v994 = vld [vmem:[%s6 + $0x64] sm:$0xf]
        %v995 = vld [vmem:[%s6 + $0x68] sm:$0xf]
        %v996 = vld [vmem:[%s6 + $0x6c] sm:$0xf]
        %v997 = vld [vmem:[%s6 + $0x70] sm:$0xf]
        %v998 = vld [vmem:[%s6 + $0x74] sm:$0xf]
        %v999 = vld [vmem:[%s6 + $0x78] sm:$0xf]
        %v1000 = vld [vmem:[%s6 + $0x7c] sm:$0xf]
        %v1001 = vld [vmem:[%s6 + $0x80] sm:$0xf]
        %v1002 = vld [vmem:[%s6 + $0x84] sm:$0xf]
        %v1003 = vld [vmem:[%s6 + $0x88] sm:$0xf]
        %v1004 = vld [vmem:[%s6 + $0x8c] sm:$0xf]
        %v1005 = vld [vmem:[%s6 + $0x90] sm:$0xf]
        %v1006 = vld [vmem:[%s6 + $0x94] sm:$0xf]
        %v1007 = vld [vmem:[%s6 + $0x98] sm:$0xf]
        %v1008 = vld [vmem:[%s6 + $0x9c] sm:$0xf]
        %v1009 = vld [vmem:[%s6 + $0xa0] sm:$0xf]
        %v1010 = vld [vmem:[%s6 + $0xa4] sm:$0xf]
        %v1011 = vld [vmem:[%s6 + $0xa8] sm:$0xf]
        %v1012 = vld [vmem:[%s6 + $0xac] sm:$0xf]
        %v1013 = vld [vmem:[%s6 + $0xb0] sm:$0xf]
        %v1014 = vld [vmem:[%s6 + $0xb4] sm:$0xf]
        %v1015 = vld [vmem:[%s6 + $0xb8] sm:$0xf]
        %v1016 = vld [vmem:[%s6 + $0xbc] sm:$0xf]
        %v1017 = vld [vmem:[%s6 + $0xc0] sm:$0xf]
        %v1018 = vld [vmem:[%s6 + $0xc4] sm:$0xf]
        %v1019 = vld [vmem:[%s6 + $0xc8] sm:$0xf]
        %v1020 = vld [vmem:[%s6 + $0xcc] sm:$0xf]
        %v1021 = vld [vmem:[%s6 + $0xd0] sm:$0xf]
        %v1022 = vld [vmem:[%s6 + $0xd4] sm:$0xf]
        %v1023 = vld [vmem:[%s6 + $0xd8] sm:$0xf]
        %v1024 = vld [vmem:[%s6 + $0xdc] sm:$0xf]
        %v1025 = vld [vmem:[%s6 + $0xe0] sm:$0xf]
        %v1026 = vld [vmem:[%s6 + $0xe4] sm:$0xf]
        %v1027 = vld [vmem:[%s6 + $0xe8] sm:$0xf]
        %v1028 = vld [vmem:[%s6 + $0xec] sm:$0xf]
        %v1029 = vld [vmem:[%s6 + $0xf0] sm:$0xf]
        %v1030 = vld [vmem:[%s6 + $0xf4] sm:$0xf]
        %v1031 = vld [vmem:[%s6 + $0xf8] sm:$0xf]
        %v1032 = vld [vmem:[%s6 + $0xfc] sm:$0xf]
        %v1033 = vld [vmem:[%s6 + $0x100] sm:$0xf]
        %v1034 = vld [vmem:[%s6 + $0x104] sm:$0xf]
        %v1035 = vld [vmem:[%s6 + $0x108] sm:$0xf]
        %v1036 = vld [vmem:[%s6 + $0x10c] sm:$0xf]
        %v1037 = vld [vmem:[%s6 + $0x110] sm:$0xf]
        %v1038 = vld [vmem:[%s6 + $0x114] sm:$0xf]
        %v1039 = vld [vmem:[%s6 + $0x118] sm:$0xf]
        %v1040 = vld [vmem:[%s6 + $0x11c] sm:$0xf]
        %v1041 = vld [vmem:[%s6 + $0x120] sm:$0xf]
        %v1042 = vld [vmem:[%s6 + $0x124] sm:$0xf]
        %v1043 = vld [vmem:[%s6 + $0x128] sm:$0xf]
        %v1044 = vld [vmem:[%s6 + $0x12c] sm:$0xf]
        %v1045 = vld [vmem:[%s6 + $0x130] sm:$0xf]
        %v1046 = vld [vmem:[%s6 + $0x134] sm:$0xf]
        %v1047 = vld [vmem:[%s6 + $0x138] sm:$0xf]
        %v1048 = vld [vmem:[%s6 + $0x13c] sm:$0xf]
        %v1049 = vld [vmem:[%s6 + $0x140] sm:$0xf]
        %v1050 = vld [vmem:[%s6 + $0x144] sm:$0xf]
        %v1051 = vld [vmem:[%s6 + $0x148] sm:$0xf]
        %v1052 = vld [vmem:[%s6 + $0x14c] sm:$0xf]
        %v1053 = vld [vmem:[%s6 + $0x150] sm:$0xf]
        %v1054 = vld [vmem:[%s6 + $0x154] sm:$0xf]
        %v1055 = vld [vmem:[%s6 + $0x158] sm:$0xf]
        %v1056 = vld [vmem:[%s6 + $0x15c] sm:$0xf]
        %v1057 = vld [vmem:[%s6 + $0x160] sm:$0xf]
        %v1058 = vld [vmem:[%s6 + $0x164] sm:$0xf]
        %v1059 = vld [vmem:[%s6 + $0x168] sm:$0xf]
        %v1060 = vld [vmem:[%s6 + $0x16c] sm:$0xf]
        %v1061 = vld [vmem:[%s6 + $0x170] sm:$0xf]
        %v1062 = vld [vmem:[%s6 + $0x174] sm:$0xf]
        %v1063 = vld [vmem:[%s6 + $0x178] sm:$0xf]
        %v1064 = vld [vmem:[%s6 + $0x17c] sm:$0xf]
        %v1065 = vld [vmem:[%s6 + $0x180] sm:$0xf]
        %v1066 = vld [vmem:[%s6 + $0x184] sm:$0xf]
        %v1067 = vld [vmem:[%s6 + $0x188] sm:$0xf]
        %v1068 = vld [vmem:[%s6 + $0x18c] sm:$0xf]
        %v1069 = vld [vmem:[%s6 + $0x190] sm:$0xf]
        %v1070 = vld [vmem:[%s6 + $0x194] sm:$0xf]
        %v1071 = vld [vmem:[%s6 + $0x198] sm:$0xf]
        %v1072 = vld [vmem:[%s6 + $0x19c] sm:$0xf]
        %v1073 = vld [vmem:[%s6 + $0x1a0] sm:$0xf]
        %v1074 = vld [vmem:[%s6 + $0x1a4] sm:$0xf]
        %v1075 = vld [vmem:[%s6 + $0x1a8] sm:$0xf]
        %v1076 = vld [vmem:[%s6 + $0x1ac] sm:$0xf]
        %v1077 = vld [vmem:[%s6 + $0x1b0] sm:$0xf]
        %v1078 = vld [vmem:[%s6 + $0x1b4] sm:$0xf]
        %v1079 = vld [vmem:[%s6 + $0x1b8] sm:$0xf]
        %v1080 = vld [vmem:[%s6 + $0x1bc] sm:$0xf]
        %v1081 = vld [vmem:[%s6 + $0x1c0] sm:$0xf]
        %v1082 = vld [vmem:[%s6 + $0x1c4] sm:$0xf]
        %v1083 = vld [vmem:[%s6 + $0x1c8] sm:$0xf]
        %v1084 = vld [vmem:[%s6 + $0x1cc] sm:$0xf]
        %v1085 = vld [vmem:[%s6 + $0x1d0] sm:$0xf]
        %v1086 = vld [vmem:[%s6 + $0x1d4] sm:$0xf]
        %v1087 = vld [vmem:[%s6 + $0x1d8] sm:$0xf]
        %v1088 = vld [vmem:[%s6 + $0x1dc] sm:$0xf]
        %v1089 = vld [vmem:[%s6 + $0x1e0] sm:$0xf]
        %v1090 = vld [vmem:[%s6 + $0x1e4] sm:$0xf]
        %v1091 = vld [vmem:[%s6 + $0x1e8] sm:$0xf]
        %v1092 = vld [vmem:[%s6 + $0x1ec] sm:$0xf]
        %v1093 = vld [vmem:[%s6 + $0x1f0] sm:$0xf]
        %v1094 = vld [vmem:[%s6 + $0x1f4] sm:$0xf]
        %v1095 = vld [vmem:[%s6 + $0x1f8] sm:$0xf]
        %v1096 = vld [vmem:[%s6 + $0x1fc] sm:$0xf]
        %v1097 = vld [vmem:[%s6 + $0x200] sm:$0xf]
        %v1098 = vld [vmem:[%s6 + $0x204] sm:$0xf]
        %v1099 = vld [vmem:[%s6 + $0x208] sm:$0xf]
        %v1100 = vld [vmem:[%s6 + $0x20c] sm:$0xf]
        %v1101 = vld [vmem:[%s6 + $0x210] sm:$0xf]
        %v1102 = vld [vmem:[%s6 + $0x214] sm:$0xf]
        %v1103 = vld [vmem:[%s6 + $0x218] sm:$0xf]
        %v1104 = vld [vmem:[%s6 + $0x21c] sm:$0xf]
        %v1105 = vld [vmem:[%s6 + $0x220] sm:$0xf]
        %v1106 = vld [vmem:[%s6 + $0x224] sm:$0xf]
        %v1107 = vld [vmem:[%s6 + $0x228] sm:$0xf]
        %v1108 = vld [vmem:[%s6 + $0x22c] sm:$0xf]
        %v1109 = vld [vmem:[%s6 + $0x230] sm:$0xf]
        %v1110 = vld [vmem:[%s6 + $0x234] sm:$0xf]
        %v1111 = vld [vmem:[%s6 + $0x238] sm:$0xf]
        %v1112 = vld [vmem:[%s6 + $0x23c] sm:$0xf]
        %v1113 = vld [vmem:[%s6 + $0x240] sm:$0xf]
        %v1114 = vld [vmem:[%s6 + $0x244] sm:$0xf]
        %v1115 = vld [vmem:[%s6 + $0x248] sm:$0xf]
        %v1116 = vld [vmem:[%s6 + $0x24c] sm:$0xf]
        %v1117 = vld [vmem:[%s6 + $0x250] sm:$0xf]
        %v1118 = vld [vmem:[%s6 + $0x254] sm:$0xf]
        %v1119 = vld [vmem:[%s6 + $0x258] sm:$0xf]
        %v1120 = vld [vmem:[%s6 + $0x25c] sm:$0xf]
        %v1121 = vld [vmem:[%s6 + $0x260] sm:$0xf]
        %v1122 = vld [vmem:[%s6 + $0x264] sm:$0xf]
        %v1123 = vld [vmem:[%s6 + $0x268] sm:$0xf]
        %v1124 = vld [vmem:[%s6 + $0x26c] sm:$0xf]
        %v1125 = vld [vmem:[%s6 + $0x270] sm:$0xf]
        %v1126 = vld [vmem:[%s6 + $0x274] sm:$0xf]
        %v1127 = vld [vmem:[%s6 + $0x278] sm:$0xf]
        %v1128 = vld [vmem:[%s6 + $0x27c] sm:$0xf]
        %v1129 = vld [vmem:[%s6 + $0x280] sm:$0xf]
        %v1130 = vld [vmem:[%s6 + $0x284] sm:$0xf]
        %v1131 = vld [vmem:[%s6 + $0x288] sm:$0xf]
        %v1132 = vld [vmem:[%s6 + $0x28c] sm:$0xf]
        %v1133 = vld [vmem:[%s6 + $0x290] sm:$0xf]
        %v1134 = vld [vmem:[%s6 + $0x294] sm:$0xf]
        %v1135 = vld [vmem:[%s6 + $0x298] sm:$0xf]
        %v1136 = vld [vmem:[%s6 + $0x29c] sm:$0xf]
        %v1137 = vld [vmem:[%s6 + $0x2a0] sm:$0xf]
        %v1138 = vld [vmem:[%s6 + $0x2a4] sm:$0xf]
        %v1139 = vld [vmem:[%s6 + $0x2a8] sm:$0xf]
        %v1140 = vld [vmem:[%s6 + $0x2ac] sm:$0xf]
        %v1141 = vld [vmem:[%s6 + $0x2b0] sm:$0xf]
        %v1142 = vld [vmem:[%s6 + $0x2b4] sm:$0xf]
        %v1143 = vld [vmem:[%s6 + $0x2b8] sm:$0xf]
        %v1144 = vld [vmem:[%s6 + $0x2bc] sm:$0xf]
        %v1145 = vld [vmem:[%s6 + $0x2c0] sm:$0xf]
        %v1146 = vld [vmem:[%s6 + $0x2c4] sm:$0xf]
        %v1147 = vld [vmem:[%s6 + $0x2c8] sm:$0xf]
        %v1148 = vld [vmem:[%s6 + $0x2cc] sm:$0xf]
        %v1149 = vld [vmem:[%s6 + $0x2d0] sm:$0xf]
        %v1150 = vld [vmem:[%s6 + $0x2d4] sm:$0xf]
        %v1151 = vld [vmem:[%s6 + $0x2d8] sm:$0xf]
        %v1152 = vld [vmem:[%s6 + $0x2dc] sm:$0xf]
        %v1153 = vld [vmem:[%s6 + $0x2e0] sm:$0xf]
        %v1154 = vld [vmem:[%s6 + $0x2e4] sm:$0xf]
        %v1155 = vld [vmem:[%s6 + $0x2e8] sm:$0xf]
        %v1156 = vld [vmem:[%s6 + $0x2ec] sm:$0xf]
        %v1157 = vld [vmem:[%s6 + $0x2f0] sm:$0xf]
        %v1158 = vld [vmem:[%s6 + $0x2f4] sm:$0xf]
        %v1159 = vld [vmem:[%s6 + $0x2f8] sm:$0xf]
        %v1160 = vld [vmem:[%s6 + $0x2fc] sm:$0xf]
        %v1161 = vld [vmem:[%s6 + $0x300] sm:$0xf]
        %v1162 = vld [vmem:[%s6 + $0x304] sm:$0xf]
        %v1163 = vld [vmem:[%s6 + $0x308] sm:$0xf]
        %v1164 = vld [vmem:[%s6 + $0x30c] sm:$0xf]
        %v1165 = vld [vmem:[%s6 + $0x310] sm:$0xf]
        %v1166 = vld [vmem:[%s6 + $0x314] sm:$0xf]
        %v1167 = vld [vmem:[%s6 + $0x318] sm:$0xf]
        %v1168 = vld [vmem:[%s6 + $0x31c] sm:$0xf]
        %v1169 = vld [vmem:[%s6 + $0x320] sm:$0xf]
        %v1170 = vld [vmem:[%s6 + $0x324] sm:$0xf]
        %v1171 = vld [vmem:[%s6 + $0x328] sm:$0xf]
        %v1172 = vld [vmem:[%s6 + $0x32c] sm:$0xf]
        %v1173 = vld [vmem:[%s6 + $0x330] sm:$0xf]
        %v1174 = vld [vmem:[%s6 + $0x334] sm:$0xf]
        %v1175 = vld [vmem:[%s6 + $0x338] sm:$0xf]
        %v1176 = vld [vmem:[%s6 + $0x33c] sm:$0xf]
        %v1177 = vld [vmem:[%s6 + $0x340] sm:$0xf]
        %v1178 = vld [vmem:[%s6 + $0x344] sm:$0xf]
        %v1179 = vld [vmem:[%s6 + $0x348] sm:$0xf]
        %v1180 = vld [vmem:[%s6 + $0x34c] sm:$0xf]
        %v1181 = vld [vmem:[%s6 + $0x350] sm:$0xf]
        %v1182 = vld [vmem:[%s6 + $0x354] sm:$0xf]
        %v1183 = vld [vmem:[%s6 + $0x358] sm:$0xf]
        %v1184 = vld [vmem:[%s6 + $0x35c] sm:$0xf]
        %v1185 = vld [vmem:[%s6 + $0x360] sm:$0xf]
        %v1186 = vld [vmem:[%s6 + $0x364] sm:$0xf]
        %v1187 = vld [vmem:[%s6 + $0x368] sm:$0xf]
        %v1188 = vld [vmem:[%s6 + $0x36c] sm:$0xf]
        %v1189 = vld [vmem:[%s6 + $0x370] sm:$0xf]
        %v1190 = vld [vmem:[%s6 + $0x374] sm:$0xf]
        %v1191 = vld [vmem:[%s6 + $0x378] sm:$0xf]
        %v1192 = vld [vmem:[%s6 + $0x37c] sm:$0xf]
        %v1193 = vld [vmem:[%s6 + $0x380] sm:$0xf]
        %v1194 = vld [vmem:[%s6 + $0x384] sm:$0xf]
        %v1195 = vld [vmem:[%s6 + $0x388] sm:$0xf]
        %v1196 = vld [vmem:[%s6 + $0x38c] sm:$0xf]
        %v1197 = vld [vmem:[%s6 + $0x390] sm:$0xf]
        %v1198 = vld [vmem:[%s6 + $0x394] sm:$0xf]
        %v1199 = vld [vmem:[%s6 + $0x398] sm:$0xf]
        %v1200 = vld [vmem:[%s6 + $0x39c] sm:$0xf]
        %v1201 = vld [vmem:[%s6 + $0x3a0] sm:$0xf]
        %v1202 = vld [vmem:[%s6 + $0x3a4] sm:$0xf]
        %v1203 = vld [vmem:[%s6 + $0x3a8] sm:$0xf]
        %v1204 = vld [vmem:[%s6 + $0x3ac] sm:$0xf]
        %v1205 = vld [vmem:[%s6 + $0x3b0] sm:$0xf]
        %v1206 = vld [vmem:[%s6 + $0x3b4] sm:$0xf]
        %v1207 = vld [vmem:[%s6 + $0x3b8] sm:$0xf]
        %v1208 = vld [vmem:[%s6 + $0x3bc] sm:$0xf]
        %v1209 = vld [vmem:[%s6 + $0x3c0] sm:$0xf]
        %v1210 = vld [vmem:[%s6 + $0x3c4] sm:$0xf]
        %v1211 = vld [vmem:[%s6 + $0x3c8] sm:$0xf]
        %v1212 = vld [vmem:[%s6 + $0x3cc] sm:$0xf]
        %v1213 = vld [vmem:[%s6 + $0x3d0] sm:$0xf]
        %v1214 = vld [vmem:[%s6 + $0x3d4] sm:$0xf]
        %v1215 = vld [vmem:[%s6 + $0x3d8] sm:$0xf]
        %v1216 = vld [vmem:[%s6 + $0x3dc] sm:$0xf]
        %v1217 = vld [vmem:[%s6 + $0x3e0] sm:$0xf]
        %v1218 = vld [vmem:[%s6 + $0x3e4] sm:$0xf]
        %v1219 = vld [vmem:[%s6 + $0x3e8] sm:$0xf]
        %v1220 = vld [vmem:[%s6 + $0x3ec] sm:$0xf]
        %v1221 = vld [vmem:[%s6 + $0x3f0] sm:$0xf]
        %v1222 = vld [vmem:[%s6 + $0x3f4] sm:$0xf]
        %v1223 = vld [vmem:[%s6 + $0x3f8] sm:$0xf]
        %v1224 = vld [vmem:[%s6 + $0x3fc] sm:$0xf]
        %v1225 = vld [vmem:[%s6 + $0x400] sm:$0xf]
        %v1226 = vld [vmem:[%s6 + $0x404] sm:$0xf]
        %v1227 = vld [vmem:[%s6 + $0x408] sm:$0xf]
        %v1228 = vld [vmem:[%s6 + $0x40c] sm:$0xf]
        %v1229 = vld [vmem:[%s6 + $0x410] sm:$0xf]
        %v1230 = vld [vmem:[%s6 + $0x414] sm:$0xf]
        %v1231 = vld [vmem:[%s6 + $0x418] sm:$0xf]
        %v1232 = vld [vmem:[%s6 + $0x41c] sm:$0xf]
        %v1233 = vld [vmem:[%s6 + $0x420] sm:$0xf]
        %v1234 = vld [vmem:[%s6 + $0x424] sm:$0xf]
        %v1235 = vld [vmem:[%s6 + $0x428] sm:$0xf]
        %v1236 = vld [vmem:[%s6 + $0x42c] sm:$0xf]
        %v1237 = vld [vmem:[%s6 + $0x430] sm:$0xf]
        %v1238 = vld [vmem:[%s6 + $0x434] sm:$0xf]
        %v1239 = vld [vmem:[%s6 + $0x438] sm:$0xf]
        %v1240 = vld [vmem:[%s6 + $0x43c] sm:$0xf]
        %v1241 = vld [vmem:[%s6 + $0x440] sm:$0xf]
        %v1242 = vld [vmem:[%s6 + $0x444] sm:$0xf]
        %v1243 = vld [vmem:[%s6 + $0x448] sm:$0xf]
        %v1244 = vld [vmem:[%s6 + $0x44c] sm:$0xf]
        %v1245 = vld [vmem:[%s6 + $0x450] sm:$0xf]
        %v1246 = vld [vmem:[%s6 + $0x454] sm:$0xf]
        %v1247 = vld [vmem:[%s6 + $0x458] sm:$0xf]
        %v1248 = vld [vmem:[%s6 + $0x45c] sm:$0xf]
        %v1249 = vld [vmem:[%s6 + $0x460] sm:$0xf]
        %v1250 = vld [vmem:[%s6 + $0x464] sm:$0xf]
        %v1251 = vld [vmem:[%s6 + $0x468] sm:$0xf]
        %v1252 = vld [vmem:[%s6 + $0x46c] sm:$0xf]
        %v1253 = vld [vmem:[%s6 + $0x470] sm:$0xf]
        %v1254 = vld [vmem:[%s6 + $0x474] sm:$0xf]
        %v1255 = vld [vmem:[%s6 + $0x478] sm:$0xf]
        %v1256 = vld [vmem:[%s6 + $0x47c] sm:$0xf]
        %v1257 = vld [vmem:[%s6 + $0x480] sm:$0xf]
        %v1258 = vld [vmem:[%s6 + $0x484] sm:$0xf]
        %v1259 = vld [vmem:[%s6 + $0x488] sm:$0xf]
        %v1260 = vld [vmem:[%s6 + $0x48c] sm:$0xf]
        %v1261 = vld [vmem:[%s6 + $0x490] sm:$0xf]
        %v1262 = vld [vmem:[%s6 + $0x494] sm:$0xf]
        %v1263 = vld [vmem:[%s6 + $0x498] sm:$0xf]
        %v1264 = vld [vmem:[%s6 + $0x49c] sm:$0xf]
        %v1265 = vld [vmem:[%s6 + $0x4a0] sm:$0xf]
        %v1266 = vld [vmem:[%s6 + $0x4a4] sm:$0xf]
        %v1267 = vld [vmem:[%s6 + $0x4a8] sm:$0xf]
        %v1268 = vld [vmem:[%s6 + $0x4ac] sm:$0xf]
        %v1269 = vld [vmem:[%s6 + $0x4b0] sm:$0xf]
        %v1270 = vld [vmem:[%s6 + $0x4b4] sm:$0xf]
        %v1271 = vld [vmem:[%s6 + $0x4b8] sm:$0xf]
        %v1272 = vld [vmem:[%s6 + $0x4bc] sm:$0xf]
        %v1273 = vld [vmem:[%s6 + $0x4c0] sm:$0xf]
        %v1274 = vld [vmem:[%s6 + $0x4c4] sm:$0xf]
        %v1275 = vld [vmem:[%s6 + $0x4c8] sm:$0xf]
        %v1276 = vld [vmem:[%s6 + $0x4cc] sm:$0xf]
        %v1277 = vld [vmem:[%s6 + $0x4d0] sm:$0xf]
        %v1278 = vld [vmem:[%s6 + $0x4d4] sm:$0xf]
        %v1279 = vld [vmem:[%s6 + $0x4d8] sm:$0xf]
        %v1280 = vld [vmem:[%s6 + $0x4dc] sm:$0xf]
        %v1281 = vld [vmem:[%s6 + $0x4e0] sm:$0xf]
        %v1282 = vld [vmem:[%s6 + $0x4e4] sm:$0xf]
        %v1283 = vld [vmem:[%s6 + $0x4e8] sm:$0xf]
        %v1284 = vld [vmem:[%s6 + $0x4ec] sm:$0xf]
        %v1285 = vld [vmem:[%s6 + $0x4f0] sm:$0xf]
        %v1286 = vld [vmem:[%s6 + $0x4f4] sm:$0xf]
        %v1287 = vld [vmem:[%s6 + $0x4f8] sm:$0xf]
        %v1288 = vld [vmem:[%s6 + $0x4fc] sm:$0xf]
        %v1289 = vld [vmem:[%s6 + $0x500] sm:$0xf]
        %v1290 = vld [vmem:[%s6 + $0x504] sm:$0xf]
        %v1291 = vld [vmem:[%s6 + $0x508] sm:$0xf]
        %v1292 = vld [vmem:[%s6 + $0x50c] sm:$0xf]
        %v1293 = vld [vmem:[%s6 + $0x510] sm:$0xf]
        %v1294 = vld [vmem:[%s6 + $0x514] sm:$0xf]
        %v1295 = vld [vmem:[%s6 + $0x518] sm:$0xf]
        %v1296 = vld [vmem:[%s6 + $0x51c] sm:$0xf]
        %v1297 = vld [vmem:[%s6 + $0x520] sm:$0xf]
        %v1298 = vld [vmem:[%s6 + $0x524] sm:$0xf]
        %v1299 = vld [vmem:[%s6 + $0x528] sm:$0xf]
        %v1300 = vld [vmem:[%s6 + $0x52c] sm:$0xf]
        %v1301 = vld [vmem:[%s6 + $0x530] sm:$0xf]
        %v1302 = vld [vmem:[%s6 + $0x534] sm:$0xf]
        %v1303 = vld [vmem:[%s6 + $0x538] sm:$0xf]
        %v1304 = vld [vmem:[%s6 + $0x53c] sm:$0xf]
        %v1305 = vld [vmem:[%s6 + $0x540] sm:$0xf]
        %v1306 = vld [vmem:[%s6 + $0x544] sm:$0xf]
        %v1307 = vld [vmem:[%s6 + $0x548] sm:$0xf]
        %v1308 = vld [vmem:[%s6 + $0x54c] sm:$0xf]
        %v1309 = vld [vmem:[%s6 + $0x550] sm:$0xf]
        %v1310 = vld [vmem:[%s6 + $0x554] sm:$0xf]
        %v1311 = vld [vmem:[%s6 + $0x558] sm:$0xf]
        %v1312 = vld [vmem:[%s6 + $0x55c] sm:$0xf]
        %v1313 = vld [vmem:[%s6 + $0x560] sm:$0xf]
        %v1314 = vld [vmem:[%s6 + $0x564] sm:$0xf]
        %v1315 = vld [vmem:[%s6 + $0x568] sm:$0xf]
        %v1316 = vld [vmem:[%s6 + $0x56c] sm:$0xf]
        %v1317 = vld [vmem:[%s6 + $0x570] sm:$0xf]
        %v1318 = vld [vmem:[%s6 + $0x574] sm:$0xf]
        %v1319 = vld [vmem:[%s6 + $0x578] sm:$0xf]
        %v1320 = vld [vmem:[%s6 + $0x57c] sm:$0xf]
        %v1321 = vld [vmem:[%s6 + $0x580] sm:$0xf]
        %v1322 = vld [vmem:[%s6 + $0x584] sm:$0xf]
        %v1323 = vld [vmem:[%s6 + $0x588] sm:$0xf]
        %v1324 = vld [vmem:[%s6 + $0x58c] sm:$0xf]
        %v1325 = vld [vmem:[%s6 + $0x590] sm:$0xf]
        %v1326 = vld [vmem:[%s6 + $0x594] sm:$0xf]
        %v1327 = vld [vmem:[%s6 + $0x598] sm:$0xf]
        %v1328 = vld [vmem:[%s6 + $0x59c] sm:$0xf]
        %v1329 = vld [vmem:[%s6 + $0x5a0] sm:$0xf]
        %v1330 = vld [vmem:[%s6 + $0x5a4] sm:$0xf]
        %v1331 = vld [vmem:[%s6 + $0x5a8] sm:$0xf]
        %v1332 = vld [vmem:[%s6 + $0x5ac] sm:$0xf]
        %v1333 = vld [vmem:[%s6 + $0x5b0] sm:$0xf]
        %v1334 = vld [vmem:[%s6 + $0x5b4] sm:$0xf]
        %v1335 = vld [vmem:[%s6 + $0x5b8] sm:$0xf]
        %v1336 = vld [vmem:[%s6 + $0x5bc] sm:$0xf]
        %v1337 = vld [vmem:[%s6 + $0x5c0] sm:$0xf]
        %v1338 = vld [vmem:[%s6 + $0x5c4] sm:$0xf]
        %v1339 = vld [vmem:[%s6 + $0x5c8] sm:$0xf]
        %v1340 = vld [vmem:[%s6 + $0x5cc] sm:$0xf]
        %v1341 = vld [vmem:[%s6 + $0x5d0] sm:$0xf]
        %v1342 = vld [vmem:[%s6 + $0x5d4] sm:$0xf]
        %v1343 = vld [vmem:[%s6 + $0x5d8] sm:$0xf]
        %v1344 = vld [vmem:[%s6 + $0x5dc] sm:$0xf]
        %v1345 = vld [vmem:[%s6 + $0x5e0] sm:$0xf]
        %v1346 = vld [vmem:[%s6 + $0x5e4] sm:$0xf]
        %v1347 = vld [vmem:[%s6 + $0x5e8] sm:$0xf]
        %v1348 = vld [vmem:[%s6 + $0x5ec] sm:$0xf]
        %v1349 = vld [vmem:[%s6 + $0x5f0] sm:$0xf]
        %v1350 = vld [vmem:[%s6 + $0x5f4] sm:$0xf]
        %v1351 = vld [vmem:[%s6 + $0x5f8] sm:$0xf]
        %v1352 = vld [vmem:[%s6 + $0x5fc] sm:$0xf]
        %v1353 = vld [vmem:[%s6 + $0x600] sm:$0xf]
        %v1354 = vld [vmem:[%s6 + $0x604] sm:$0xf]
        %v1355 = vld [vmem:[%s6 + $0x608] sm:$0xf]
        %v1356 = vld [vmem:[%s6 + $0x60c] sm:$0xf]
        %v1357 = vld [vmem:[%s6 + $0x610] sm:$0xf]
        %v1358 = vld [vmem:[%s6 + $0x614] sm:$0xf]
        %v1359 = vld [vmem:[%s6 + $0x618] sm:$0xf]
        %v1360 = vld [vmem:[%s6 + $0x61c] sm:$0xf]
        %v1361 = vld [vmem:[%s6 + $0x620] sm:$0xf]
        %v1362 = vld [vmem:[%s6 + $0x624] sm:$0xf]
        %v1363 = vld [vmem:[%s6 + $0x628] sm:$0xf]
        %v1364 = vld [vmem:[%s6 + $0x62c] sm:$0xf]
        %v1365 = vld [vmem:[%s6 + $0x630] sm:$0xf]
        %v1366 = vld [vmem:[%s6 + $0x634] sm:$0xf]
        %v1367 = vld [vmem:[%s6 + $0x638] sm:$0xf]
        %v1368 = vld [vmem:[%s6 + $0x63c] sm:$0xf]
        %v1369 = vld [vmem:[%s6 + $0x640] sm:$0xf]
        %v1370 = vld [vmem:[%s6 + $0x644] sm:$0xf]
        %v1371 = vld [vmem:[%s6 + $0x648] sm:$0xf]
        %v1372 = vld [vmem:[%s6 + $0x64c] sm:$0xf]
        %v1373 = vld [vmem:[%s6 + $0x650] sm:$0xf]
        %v1374 = vld [vmem:[%s6 + $0x654] sm:$0xf]
        %v1375 = vld [vmem:[%s6 + $0x658] sm:$0xf]
        %v1376 = vld [vmem:[%s6 + $0x65c] sm:$0xf]
        %v1377 = vld [vmem:[%s6 + $0x660] sm:$0xf]
        %v1378 = vld [vmem:[%s6 + $0x664] sm:$0xf]
        %v1379 = vld [vmem:[%s6 + $0x668] sm:$0xf]
        %v1380 = vld [vmem:[%s6 + $0x66c] sm:$0xf]
        %v1381 = vld [vmem:[%s6 + $0x670] sm:$0xf]
        %v1382 = vld [vmem:[%s6 + $0x674] sm:$0xf]
        %v1383 = vld [vmem:[%s6 + $0x678] sm:$0xf]
        %v1384 = vld [vmem:[%s6 + $0x67c] sm:$0xf]
        %v1385 = vld [vmem:[%s6 + $0x680] sm:$0xf]
        %v1386 = vld [vmem:[%s6 + $0x684] sm:$0xf]
        %v1387 = vld [vmem:[%s6 + $0x688] sm:$0xf]
        %v1388 = vld [vmem:[%s6 + $0x68c] sm:$0xf]
        %v1389 = vld [vmem:[%s6 + $0x690] sm:$0xf]
        %v1390 = vld [vmem:[%s6 + $0x694] sm:$0xf]
        %v1391 = vld [vmem:[%s6 + $0x698] sm:$0xf]
        %v1392 = vld [vmem:[%s6 + $0x69c] sm:$0xf]
        %v1393 = vld [vmem:[%s6 + $0x6a0] sm:$0xf]
        %v1394 = vld [vmem:[%s6 + $0x6a4] sm:$0xf]
        %v1395 = vld [vmem:[%s6 + $0x6a8] sm:$0xf]
        %v1396 = vld [vmem:[%s6 + $0x6ac] sm:$0xf]
        %v1397 = vld [vmem:[%s6 + $0x6b0] sm:$0xf]
        %v1398 = vld [vmem:[%s6 + $0x6b4] sm:$0xf]
        %v1399 = vld [vmem:[%s6 + $0x6b8] sm:$0xf]
        %v1400 = vld [vmem:[%s6 + $0x6bc] sm:$0xf]
        %v1401 = vld [vmem:[%s6 + $0x6c0] sm:$0xf]
        %v1402 = vld [vmem:[%s6 + $0x6c4] sm:$0xf]
        %v1403 = vld [vmem:[%s6 + $0x6c8] sm:$0xf]
        %v1404 = vld [vmem:[%s6 + $0x6cc] sm:$0xf]
        %v1405 = vld [vmem:[%s6 + $0x6d0] sm:$0xf]
        %v1406 = vld [vmem:[%s6 + $0x6d4] sm:$0xf]
        %v1407 = vld [vmem:[%s6 + $0x6d8] sm:$0xf]
        %v1408 = vld [vmem:[%s6 + $0x6dc] sm:$0xf]
        %v1409 = vld [vmem:[%s6 + $0x6e0] sm:$0xf]
        %v1410 = vld [vmem:[%s6 + $0x6e4] sm:$0xf]
        %v1411 = vld [vmem:[%s6 + $0x6e8] sm:$0xf]
        %v1412 = vld [vmem:[%s6 + $0x6ec] sm:$0xf]
        %v1413 = vld [vmem:[%s6 + $0x6f0] sm:$0xf]
        %v1414 = vld [vmem:[%s6 + $0x6f4] sm:$0xf]
        %v1415 = vld [vmem:[%s6 + $0x6f8] sm:$0xf]
        %v1416 = vld [vmem:[%s6 + $0x6fc] sm:$0xf]
        %v1417 = vld [vmem:[%s6 + $0x700] sm:$0xf]
        %v1418 = vld [vmem:[%s6 + $0x704] sm:$0xf]
        %v1419 = vld [vmem:[%s6 + $0x708] sm:$0xf]
        %v1420 = vld [vmem:[%s6 + $0x70c] sm:$0xf]
        %v1421 = vld [vmem:[%s6 + $0x710] sm:$0xf]
        %v1422 = vld [vmem:[%s6 + $0x714] sm:$0xf]
        %v1423 = vld [vmem:[%s6 + $0x718] sm:$0xf]
        %v1424 = vld [vmem:[%s6 + $0x71c] sm:$0xf]
        %v1425 = vld [vmem:[%s6 + $0x720] sm:$0xf]
        %v1426 = vld [vmem:[%s6 + $0x724] sm:$0xf]
        %v1427 = vld [vmem:[%s6 + $0x728] sm:$0xf]
        %v1428 = vld [vmem:[%s6 + $0x72c] sm:$0xf]
        %v1429 = vld [vmem:[%s6 + $0x730] sm:$0xf]
        %v1430 = vld [vmem:[%s6 + $0x734] sm:$0xf]
        %v1431 = vld [vmem:[%s6 + $0x738] sm:$0xf]
        %v1432 = vld [vmem:[%s6 + $0x73c] sm:$0xf]
        %v1433 = vld [vmem:[%s6 + $0x740] sm:$0xf]
        %v1434 = vld [vmem:[%s6 + $0x744] sm:$0xf]
        %v1435 = vld [vmem:[%s6 + $0x748] sm:$0xf]
        %v1436 = vld [vmem:[%s6 + $0x74c] sm:$0xf]
        %v1437 = vld [vmem:[%s6 + $0x750] sm:$0xf]
        %v1438 = vld [vmem:[%s6 + $0x754] sm:$0xf]
        %v1439 = vld [vmem:[%s6 + $0x758] sm:$0xf]
        %v1440 = vld [vmem:[%s6 + $0x75c] sm:$0xf]
        %v1441 = vld [vmem:[%s6 + $0x760] sm:$0xf]
        %v1442 = vld [vmem:[%s6 + $0x764] sm:$0xf]
        %v1443 = vld [vmem:[%s6 + $0x768] sm:$0xf]
        %v1444 = vld [vmem:[%s6 + $0x76c] sm:$0xf]
        %v1445 = vld [vmem:[%s6 + $0x770] sm:$0xf]
        %v1446 = vld [vmem:[%s6 + $0x774] sm:$0xf]
        %v1447 = vld [vmem:[%s6 + $0x778] sm:$0xf]
        %v1448 = vld [vmem:[%s6 + $0x77c] sm:$0xf]
        %v1449 = vld [vmem:[%s6 + $0x780] sm:$0xf]
        %v1450 = vld [vmem:[%s6 + $0x784] sm:$0xf]
        %v1451 = vld [vmem:[%s6 + $0x788] sm:$0xf]
        %v1452 = vld [vmem:[%s6 + $0x78c] sm:$0xf]
        %v1453 = vld [vmem:[%s6 + $0x790] sm:$0xf]
        %v1454 = vld [vmem:[%s6 + $0x794] sm:$0xf]
        %v1455 = vld [vmem:[%s6 + $0x798] sm:$0xf]
        %v1456 = vld [vmem:[%s6 + $0x79c] sm:$0xf]
        %v1457 = vld [vmem:[%s6 + $0x7a0] sm:$0xf]
        %v1458 = vld [vmem:[%s6 + $0x7a4] sm:$0xf]
        %v1459 = vld [vmem:[%s6 + $0x7a8] sm:$0xf]
        %v1460 = vld [vmem:[%s6 + $0x7ac] sm:$0xf]
        %v1461 = vld [vmem:[%s6 + $0x7b0] sm:$0xf]
        %v1462 = vld [vmem:[%s6 + $0x7b4] sm:$0xf]
        %v1463 = vld [vmem:[%s6 + $0x7b8] sm:$0xf]
        %v1464 = vld [vmem:[%s6 + $0x7bc] sm:$0xf]
        %v1465 = vld [vmem:[%s6 + $0x7c0] sm:$0xf]
        %v1466 = vld [vmem:[%s6 + $0x7c4] sm:$0xf]
        %v1467 = vld [vmem:[%s6 + $0x7c8] sm:$0xf]
        %v1468 = vld [vmem:[%s6 + $0x7cc] sm:$0xf]
        %v1469 = vld [vmem:[%s6 + $0x7d0] sm:$0xf]
        %v1470 = vld [vmem:[%s6 + $0x7d4] sm:$0xf]
        %v1471 = vld [vmem:[%s6 + $0x7d8] sm:$0xf]
        %v1472 = vld [vmem:[%s6 + $0x7dc] sm:$0xf]
        %v1473 = vld [vmem:[%s6 + $0x7e0] sm:$0xf]
        %v1474 = vld [vmem:[%s6 + $0x7e4] sm:$0xf]
        %v1475 = vld [vmem:[%s6 + $0x7e8] sm:$0xf]
        %v1476 = vld [vmem:[%s6 + $0x7ec] sm:$0xf]
        %v1477 = vld [vmem:[%s6 + $0x7f0] sm:$0xf]
        %v1478 = vld [vmem:[%s6 + $0x7f4] sm:$0xf]
        %v1479 = vld [vmem:[%s6 + $0x7f8] sm:$0xf]
        %v1480 = vld [vmem:[%s6 + $0x7fc] sm:$0xf]
        %v1481 = vld [vmem:[%s7] sm:$0x1]
        %v1994 = vunpack.c.l.b16 %v969
        %v1995 = vunpack.c.l.b16 %v970
        %v1996 = vunpack.c.l.b16 %v971
        %v1997 = vunpack.c.l.b16 %v972
        %v1998 = vunpack.c.l.b16 %v973
        %v1999 = vunpack.c.l.b16 %v974
        %v2000 = vunpack.c.l.b16 %v975
        %v2001 = vunpack.c.l.b16 %v976
        %v2002 = vunpack.c.l.b16 %v977
        %v2003 = vunpack.c.l.b16 %v978
        %v2004 = vunpack.c.l.b16 %v979
        %v2005 = vunpack.c.l.b16 %v980
        %v2006 = vunpack.c.l.b16 %v981
        %v2007 = vunpack.c.l.b16 %v982
        %v2008 = vunpack.c.l.b16 %v983
        %v2009 = vunpack.c.l.b16 %v984
        %v2010 = vunpack.c.l.b16 %v985
        %v2011 = vunpack.c.l.b16 %v986
        %v2012 = vunpack.c.l.b16 %v987
        %v2013 = vunpack.c.l.b16 %v988
        %v2014 = vunpack.c.l.b16 %v989
        %v2015 = vunpack.c.l.b16 %v990
        %v2016 = vunpack.c.l.b16 %v991
        %v2017 = vunpack.c.l.b16 %v992
        %v2018 = vunpack.c.l.b16 %v993
        %v2019 = vunpack.c.l.b16 %v994
        %v2020 = vunpack.c.l.b16 %v995
        %v2021 = vunpack.c.l.b16 %v996
        %v2022 = vunpack.c.l.b16 %v997
        %v2023 = vunpack.c.l.b16 %v998
        %v2024 = vunpack.c.l.b16 %v999
        %v2025 = vunpack.c.l.b16 %v1000
        %v2026 = vunpack.c.l.b16 %v1001
        %v2027 = vunpack.c.l.b16 %v1002
        %v2028 = vunpack.c.l.b16 %v1003
        %v2029 = vunpack.c.l.b16 %v1004
        %v2030 = vunpack.c.l.b16 %v1005
        %v2031 = vunpack.c.l.b16 %v1006
        %v2032 = vunpack.c.l.b16 %v1007
        %v2033 = vunpack.c.l.b16 %v1008
        %v2034 = vunpack.c.l.b16 %v1009
        %v2035 = vunpack.c.l.b16 %v1010
        %v2036 = vunpack.c.l.b16 %v1011
        %v2037 = vunpack.c.l.b16 %v1012
        %v2038 = vunpack.c.l.b16 %v1013
        %v2039 = vunpack.c.l.b16 %v1014
        %v2040 = vunpack.c.l.b16 %v1015
        %v2041 = vunpack.c.l.b16 %v1016
        %v2042 = vunpack.c.l.b16 %v1017
        %v2043 = vunpack.c.l.b16 %v1018
        %v2044 = vunpack.c.l.b16 %v1019
        %v2045 = vunpack.c.l.b16 %v1020
        %v2046 = vunpack.c.l.b16 %v1021
        %v2047 = vunpack.c.l.b16 %v1022
        %v2048 = vunpack.c.l.b16 %v1023
        %v2049 = vunpack.c.l.b16 %v1024
        %v2050 = vunpack.c.l.b16 %v1025
        %v2051 = vunpack.c.l.b16 %v1026
        %v2052 = vunpack.c.l.b16 %v1027
        %v2053 = vunpack.c.l.b16 %v1028
        %v2054 = vunpack.c.l.b16 %v1029
        %v2055 = vunpack.c.l.b16 %v1030
        %v2056 = vunpack.c.l.b16 %v1031
        %v2057 = vunpack.c.l.b16 %v1032
        %v2058 = vunpack.c.l.b16 %v1033
        %v2059 = vunpack.c.l.b16 %v1034
        %v2060 = vunpack.c.l.b16 %v1035
        %v2061 = vunpack.c.l.b16 %v1036
        %v2062 = vunpack.c.l.b16 %v1037
        %v2063 = vunpack.c.l.b16 %v1038
        %v2064 = vunpack.c.l.b16 %v1039
        %v2065 = vunpack.c.l.b16 %v1040
        %v2066 = vunpack.c.l.b16 %v1041
        %v2067 = vunpack.c.l.b16 %v1042
        %v2068 = vunpack.c.l.b16 %v1043
        %v2069 = vunpack.c.l.b16 %v1044
        %v2070 = vunpack.c.l.b16 %v1045
        %v2071 = vunpack.c.l.b16 %v1046
        %v2072 = vunpack.c.l.b16 %v1047
        %v2073 = vunpack.c.l.b16 %v1048
        %v2074 = vunpack.c.l.b16 %v1049
        %v2075 = vunpack.c.l.b16 %v1050
        %v2076 = vunpack.c.l.b16 %v1051
        %v2077 = vunpack.c.l.b16 %v1052
        %v2078 = vunpack.c.l.b16 %v1053
        %v2079 = vunpack.c.l.b16 %v1054
        %v2080 = vunpack.c.l.b16 %v1055
        %v2081 = vunpack.c.l.b16 %v1056
        %v2082 = vunpack.c.l.b16 %v1057
        %v2083 = vunpack.c.l.b16 %v1058
        %v2084 = vunpack.c.l.b16 %v1059
        %v2085 = vunpack.c.l.b16 %v1060
        %v2086 = vunpack.c.l.b16 %v1061
        %v2087 = vunpack.c.l.b16 %v1062
        %v2088 = vunpack.c.l.b16 %v1063
        %v2089 = vunpack.c.l.b16 %v1064
        %v2090 = vunpack.c.l.b16 %v1065
        %v2091 = vunpack.c.l.b16 %v1066
        %v2092 = vunpack.c.l.b16 %v1067
        %v2093 = vunpack.c.l.b16 %v1068
        %v2094 = vunpack.c.l.b16 %v1069
        %v2095 = vunpack.c.l.b16 %v1070
        %v2096 = vunpack.c.l.b16 %v1071
        %v2097 = vunpack.c.l.b16 %v1072
        %v2098 = vunpack.c.l.b16 %v1073
        %v2099 = vunpack.c.l.b16 %v1074
        %v2100 = vunpack.c.l.b16 %v1075
        %v2101 = vunpack.c.l.b16 %v1076
        %v2102 = vunpack.c.l.b16 %v1077
        %v2103 = vunpack.c.l.b16 %v1078
        %v2104 = vunpack.c.l.b16 %v1079
        %v2105 = vunpack.c.l.b16 %v1080
        %v2106 = vunpack.c.l.b16 %v1081
        %v2107 = vunpack.c.l.b16 %v1082
        %v2108 = vunpack.c.l.b16 %v1083
        %v2109 = vunpack.c.l.b16 %v1084
        %v2110 = vunpack.c.l.b16 %v1085
        %v2111 = vunpack.c.l.b16 %v1086
        %v2112 = vunpack.c.l.b16 %v1087
        %v2113 = vunpack.c.l.b16 %v1088
        %v2114 = vunpack.c.l.b16 %v1089
        %v2115 = vunpack.c.l.b16 %v1090
        %v2116 = vunpack.c.l.b16 %v1091
        %v2117 = vunpack.c.l.b16 %v1092
        %v2118 = vunpack.c.l.b16 %v1093
        %v2119 = vunpack.c.l.b16 %v1094
        %v2120 = vunpack.c.l.b16 %v1095
        %v2121 = vunpack.c.l.b16 %v1096
        %v2122 = vunpack.c.l.b16 %v1097
        %v2123 = vunpack.c.l.b16 %v1098
        %v2124 = vunpack.c.l.b16 %v1099
        %v2125 = vunpack.c.l.b16 %v1100
        %v2126 = vunpack.c.l.b16 %v1101
        %v2127 = vunpack.c.l.b16 %v1102
        %v2128 = vunpack.c.l.b16 %v1103
        %v2129 = vunpack.c.l.b16 %v1104
        %v2130 = vunpack.c.l.b16 %v1105
        %v2131 = vunpack.c.l.b16 %v1106
        %v2132 = vunpack.c.l.b16 %v1107
        %v2133 = vunpack.c.l.b16 %v1108
        %v2134 = vunpack.c.l.b16 %v1109
        %v2135 = vunpack.c.l.b16 %v1110
        %v2136 = vunpack.c.l.b16 %v1111
        %v2137 = vunpack.c.l.b16 %v1112
        %v2138 = vunpack.c.l.b16 %v1113
        %v2139 = vunpack.c.l.b16 %v1114
        %v2140 = vunpack.c.l.b16 %v1115
        %v2141 = vunpack.c.l.b16 %v1116
        %v2142 = vunpack.c.l.b16 %v1117
        %v2143 = vunpack.c.l.b16 %v1118
        %v2144 = vunpack.c.l.b16 %v1119
        %v2145 = vunpack.c.l.b16 %v1120
        %v2146 = vunpack.c.l.b16 %v1121
        %v2147 = vunpack.c.l.b16 %v1122
        %v2148 = vunpack.c.l.b16 %v1123
        %v2149 = vunpack.c.l.b16 %v1124
        %v2150 = vunpack.c.l.b16 %v1125
        %v2151 = vunpack.c.l.b16 %v1126
        %v2152 = vunpack.c.l.b16 %v1127
        %v2153 = vunpack.c.l.b16 %v1128
        %v2154 = vunpack.c.l.b16 %v1129
        %v2155 = vunpack.c.l.b16 %v1130
        %v2156 = vunpack.c.l.b16 %v1131
        %v2157 = vunpack.c.l.b16 %v1132
        %v2158 = vunpack.c.l.b16 %v1133
        %v2159 = vunpack.c.l.b16 %v1134
        %v2160 = vunpack.c.l.b16 %v1135
        %v2161 = vunpack.c.l.b16 %v1136
        %v2162 = vunpack.c.l.b16 %v1137
        %v2163 = vunpack.c.l.b16 %v1138
        %v2164 = vunpack.c.l.b16 %v1139
        %v2165 = vunpack.c.l.b16 %v1140
        %v2166 = vunpack.c.l.b16 %v1141
        %v2167 = vunpack.c.l.b16 %v1142
        %v2168 = vunpack.c.l.b16 %v1143
        %v2169 = vunpack.c.l.b16 %v1144
        %v2170 = vunpack.c.l.b16 %v1145
        %v2171 = vunpack.c.l.b16 %v1146
        %v2172 = vunpack.c.l.b16 %v1147
        %v2173 = vunpack.c.l.b16 %v1148
        %v2174 = vunpack.c.l.b16 %v1149
        %v2175 = vunpack.c.l.b16 %v1150
        %v2176 = vunpack.c.l.b16 %v1151
        %v2177 = vunpack.c.l.b16 %v1152
        %v2178 = vunpack.c.l.b16 %v1153
        %v2179 = vunpack.c.l.b16 %v1154
        %v2180 = vunpack.c.l.b16 %v1155
        %v2181 = vunpack.c.l.b16 %v1156
        %v2182 = vunpack.c.l.b16 %v1157
        %v2183 = vunpack.c.l.b16 %v1158
        %v2184 = vunpack.c.l.b16 %v1159
        %v2185 = vunpack.c.l.b16 %v1160
        %v2186 = vunpack.c.l.b16 %v1161
        %v2187 = vunpack.c.l.b16 %v1162
        %v2188 = vunpack.c.l.b16 %v1163
        %v2189 = vunpack.c.l.b16 %v1164
        %v2190 = vunpack.c.l.b16 %v1165
        %v2191 = vunpack.c.l.b16 %v1166
        %v2192 = vunpack.c.l.b16 %v1167
        %v2193 = vunpack.c.l.b16 %v1168
        %v2194 = vunpack.c.l.b16 %v1169
        %v2195 = vunpack.c.l.b16 %v1170
        %v2196 = vunpack.c.l.b16 %v1171
        %v2197 = vunpack.c.l.b16 %v1172
        %v2198 = vunpack.c.l.b16 %v1173
        %v2199 = vunpack.c.l.b16 %v1174
        %v2200 = vunpack.c.l.b16 %v1175
        %v2201 = vunpack.c.l.b16 %v1176
        %v2202 = vunpack.c.l.b16 %v1177
        %v2203 = vunpack.c.l.b16 %v1178
        %v2204 = vunpack.c.l.b16 %v1179
        %v2205 = vunpack.c.l.b16 %v1180
        %v2206 = vunpack.c.l.b16 %v1181
        %v2207 = vunpack.c.l.b16 %v1182
        %v2208 = vunpack.c.l.b16 %v1183
        %v2209 = vunpack.c.l.b16 %v1184
        %v2210 = vunpack.c.l.b16 %v1185
        %v2211 = vunpack.c.l.b16 %v1186
        %v2212 = vunpack.c.l.b16 %v1187
        %v2213 = vunpack.c.l.b16 %v1188
        %v2214 = vunpack.c.l.b16 %v1189
        %v2215 = vunpack.c.l.b16 %v1190
        %v2216 = vunpack.c.l.b16 %v1191
        %v2217 = vunpack.c.l.b16 %v1192
        %v2218 = vunpack.c.l.b16 %v1193
        %v2219 = vunpack.c.l.b16 %v1194
        %v2220 = vunpack.c.l.b16 %v1195
        %v2221 = vunpack.c.l.b16 %v1196
        %v2222 = vunpack.c.l.b16 %v1197
        %v2223 = vunpack.c.l.b16 %v1198
        %v2224 = vunpack.c.l.b16 %v1199
        %v2225 = vunpack.c.l.b16 %v1200
        %v2226 = vunpack.c.l.b16 %v1201
        %v2227 = vunpack.c.l.b16 %v1202
        %v2228 = vunpack.c.l.b16 %v1203
        %v2229 = vunpack.c.l.b16 %v1204
        %v2230 = vunpack.c.l.b16 %v1205
        %v2231 = vunpack.c.l.b16 %v1206
        %v2232 = vunpack.c.l.b16 %v1207
        %v2233 = vunpack.c.l.b16 %v1208
        %v2234 = vunpack.c.l.b16 %v1209
        %v2235 = vunpack.c.l.b16 %v1210
        %v2236 = vunpack.c.l.b16 %v1211
        %v2237 = vunpack.c.l.b16 %v1212
        %v2238 = vunpack.c.l.b16 %v1213
        %v2239 = vunpack.c.l.b16 %v1214
        %v2240 = vunpack.c.l.b16 %v1215
        %v2241 = vunpack.c.l.b16 %v1216
        %v2242 = vunpack.c.l.b16 %v1217
        %v2243 = vunpack.c.l.b16 %v1218
        %v2244 = vunpack.c.l.b16 %v1219
        %v2245 = vunpack.c.l.b16 %v1220
        %v2246 = vunpack.c.l.b16 %v1221
        %v2247 = vunpack.c.l.b16 %v1222
        %v2248 = vunpack.c.l.b16 %v1223
        %v2249 = vunpack.c.l.b16 %v1224
        %v2250 = vunpack.c.l.b16 %v1225
        %v2251 = vunpack.c.l.b16 %v1226
        %v2252 = vunpack.c.l.b16 %v1227
        %v2253 = vunpack.c.l.b16 %v1228
        %v2254 = vunpack.c.l.b16 %v1229
        %v2255 = vunpack.c.l.b16 %v1230
        %v2256 = vunpack.c.l.b16 %v1231
        %v2257 = vunpack.c.l.b16 %v1232
        %v2258 = vunpack.c.l.b16 %v1233
        %v2259 = vunpack.c.l.b16 %v1234
        %v2260 = vunpack.c.l.b16 %v1235
        %v2261 = vunpack.c.l.b16 %v1236
        %v2262 = vunpack.c.l.b16 %v1237
        %v2263 = vunpack.c.l.b16 %v1238
        %v2264 = vunpack.c.l.b16 %v1239
        %v2265 = vunpack.c.l.b16 %v1240
        %v2266 = vunpack.c.l.b16 %v1241
        %v2267 = vunpack.c.l.b16 %v1242
        %v2268 = vunpack.c.l.b16 %v1243
        %v2269 = vunpack.c.l.b16 %v1244
        %v2270 = vunpack.c.l.b16 %v1245
        %v2271 = vunpack.c.l.b16 %v1246
        %v2272 = vunpack.c.l.b16 %v1247
        %v2273 = vunpack.c.l.b16 %v1248
        %v2274 = vunpack.c.l.b16 %v1249
        %v2275 = vunpack.c.l.b16 %v1250
        %v2276 = vunpack.c.l.b16 %v1251
        %v2277 = vunpack.c.l.b16 %v1252
        %v2278 = vunpack.c.l.b16 %v1253
        %v2279 = vunpack.c.l.b16 %v1254
        %v2280 = vunpack.c.l.b16 %v1255
        %v2281 = vunpack.c.l.b16 %v1256
        %v2282 = vunpack.c.l.b16 %v1257
        %v2283 = vunpack.c.l.b16 %v1258
        %v2284 = vunpack.c.l.b16 %v1259
        %v2285 = vunpack.c.l.b16 %v1260
        %v2286 = vunpack.c.l.b16 %v1261
        %v2287 = vunpack.c.l.b16 %v1262
        %v2288 = vunpack.c.l.b16 %v1263
        %v2289 = vunpack.c.l.b16 %v1264
        %v2290 = vunpack.c.l.b16 %v1265
        %v2291 = vunpack.c.l.b16 %v1266
        %v2292 = vunpack.c.l.b16 %v1267
        %v2293 = vunpack.c.l.b16 %v1268
        %v2294 = vunpack.c.l.b16 %v1269
        %v2295 = vunpack.c.l.b16 %v1270
        %v2296 = vunpack.c.l.b16 %v1271
        %v2297 = vunpack.c.l.b16 %v1272
        %v2298 = vunpack.c.l.b16 %v1273
        %v2299 = vunpack.c.l.b16 %v1274
        %v2300 = vunpack.c.l.b16 %v1275
        %v2301 = vunpack.c.l.b16 %v1276
        %v2302 = vunpack.c.l.b16 %v1277
        %v2303 = vunpack.c.l.b16 %v1278
        %v2304 = vunpack.c.l.b16 %v1279
        %v2305 = vunpack.c.l.b16 %v1280
        %v2306 = vunpack.c.l.b16 %v1281
        %v2307 = vunpack.c.l.b16 %v1282
        %v2308 = vunpack.c.l.b16 %v1283
        %v2309 = vunpack.c.l.b16 %v1284
        %v2310 = vunpack.c.l.b16 %v1285
        %v2311 = vunpack.c.l.b16 %v1286
        %v2312 = vunpack.c.l.b16 %v1287
        %v2313 = vunpack.c.l.b16 %v1288
        %v2314 = vunpack.c.l.b16 %v1289
        %v2315 = vunpack.c.l.b16 %v1290
        %v2316 = vunpack.c.l.b16 %v1291
        %v2317 = vunpack.c.l.b16 %v1292
        %v2318 = vunpack.c.l.b16 %v1293
        %v2319 = vunpack.c.l.b16 %v1294
        %v2320 = vunpack.c.l.b16 %v1295
        %v2321 = vunpack.c.l.b16 %v1296
        %v2322 = vunpack.c.l.b16 %v1297
        %v2323 = vunpack.c.l.b16 %v1298
        %v2324 = vunpack.c.l.b16 %v1299
        %v2325 = vunpack.c.l.b16 %v1300
        %v2326 = vunpack.c.l.b16 %v1301
        %v2327 = vunpack.c.l.b16 %v1302
        %v2328 = vunpack.c.l.b16 %v1303
        %v2329 = vunpack.c.l.b16 %v1304
        %v2330 = vunpack.c.l.b16 %v1305
        %v2331 = vunpack.c.l.b16 %v1306
        %v2332 = vunpack.c.l.b16 %v1307
        %v2333 = vunpack.c.l.b16 %v1308
        %v2334 = vunpack.c.l.b16 %v1309
        %v2335 = vunpack.c.l.b16 %v1310
        %v2336 = vunpack.c.l.b16 %v1311
        %v2337 = vunpack.c.l.b16 %v1312
        %v2338 = vunpack.c.l.b16 %v1313
        %v2339 = vunpack.c.l.b16 %v1314
        %v2340 = vunpack.c.l.b16 %v1315
        %v2341 = vunpack.c.l.b16 %v1316
        %v2342 = vunpack.c.l.b16 %v1317
        %v2343 = vunpack.c.l.b16 %v1318
        %v2344 = vunpack.c.l.b16 %v1319
        %v2345 = vunpack.c.l.b16 %v1320
        %v2346 = vunpack.c.l.b16 %v1321
        %v2347 = vunpack.c.l.b16 %v1322
        %v2348 = vunpack.c.l.b16 %v1323
        %v2349 = vunpack.c.l.b16 %v1324
        %v2350 = vunpack.c.l.b16 %v1325
        %v2351 = vunpack.c.l.b16 %v1326
        %v2352 = vunpack.c.l.b16 %v1327
        %v2353 = vunpack.c.l.b16 %v1328
        %v2354 = vunpack.c.l.b16 %v1329
        %v2355 = vunpack.c.l.b16 %v1330
        %v2356 = vunpack.c.l.b16 %v1331
        %v2357 = vunpack.c.l.b16 %v1332
        %v2358 = vunpack.c.l.b16 %v1333
        %v2359 = vunpack.c.l.b16 %v1334
        %v2360 = vunpack.c.l.b16 %v1335
        %v2361 = vunpack.c.l.b16 %v1336
        %v2362 = vunpack.c.l.b16 %v1337
        %v2363 = vunpack.c.l.b16 %v1338
        %v2364 = vunpack.c.l.b16 %v1339
        %v2365 = vunpack.c.l.b16 %v1340
        %v2366 = vunpack.c.l.b16 %v1341
        %v2367 = vunpack.c.l.b16 %v1342
        %v2368 = vunpack.c.l.b16 %v1343
        %v2369 = vunpack.c.l.b16 %v1344
        %v2370 = vunpack.c.l.b16 %v1345
        %v2371 = vunpack.c.l.b16 %v1346
        %v2372 = vunpack.c.l.b16 %v1347
        %v2373 = vunpack.c.l.b16 %v1348
        %v2374 = vunpack.c.l.b16 %v1349
        %v2375 = vunpack.c.l.b16 %v1350
        %v2376 = vunpack.c.l.b16 %v1351
        %v2377 = vunpack.c.l.b16 %v1352
        %v2378 = vunpack.c.l.b16 %v1353
        %v2379 = vunpack.c.l.b16 %v1354
        %v2380 = vunpack.c.l.b16 %v1355
        %v2381 = vunpack.c.l.b16 %v1356
        %v2382 = vunpack.c.l.b16 %v1357
        %v2383 = vunpack.c.l.b16 %v1358
        %v2384 = vunpack.c.l.b16 %v1359
        %v2385 = vunpack.c.l.b16 %v1360
        %v2386 = vunpack.c.l.b16 %v1361
        %v2387 = vunpack.c.l.b16 %v1362
        %v2388 = vunpack.c.l.b16 %v1363
        %v2389 = vunpack.c.l.b16 %v1364
        %v2390 = vunpack.c.l.b16 %v1365
        %v2391 = vunpack.c.l.b16 %v1366
        %v2392 = vunpack.c.l.b16 %v1367
        %v2393 = vunpack.c.l.b16 %v1368
        %v2394 = vunpack.c.l.b16 %v1369
        %v2395 = vunpack.c.l.b16 %v1370
        %v2396 = vunpack.c.l.b16 %v1371
        %v2397 = vunpack.c.l.b16 %v1372
        %v2398 = vunpack.c.l.b16 %v1373
        %v2399 = vunpack.c.l.b16 %v1374
        %v2400 = vunpack.c.l.b16 %v1375
        %v2401 = vunpack.c.l.b16 %v1376
        %v2402 = vunpack.c.l.b16 %v1377
        %v2403 = vunpack.c.l.b16 %v1378
        %v2404 = vunpack.c.l.b16 %v1379
        %v2405 = vunpack.c.l.b16 %v1380
        %v2406 = vunpack.c.l.b16 %v1381
        %v2407 = vunpack.c.l.b16 %v1382
        %v2408 = vunpack.c.l.b16 %v1383
        %v2409 = vunpack.c.l.b16 %v1384
        %v2410 = vunpack.c.l.b16 %v1385
        %v2411 = vunpack.c.l.b16 %v1386
        %v2412 = vunpack.c.l.b16 %v1387
        %v2413 = vunpack.c.l.b16 %v1388
        %v2414 = vunpack.c.l.b16 %v1389
        %v2415 = vunpack.c.l.b16 %v1390
        %v2416 = vunpack.c.l.b16 %v1391
        %v2417 = vunpack.c.l.b16 %v1392
        %v2418 = vunpack.c.l.b16 %v1393
        %v2419 = vunpack.c.l.b16 %v1394
        %v2420 = vunpack.c.l.b16 %v1395
        %v2421 = vunpack.c.l.b16 %v1396
        %v2422 = vunpack.c.l.b16 %v1397
        %v2423 = vunpack.c.l.b16 %v1398
        %v2424 = vunpack.c.l.b16 %v1399
        %v2425 = vunpack.c.l.b16 %v1400
        %v2426 = vunpack.c.l.b16 %v1401
        %v2427 = vunpack.c.l.b16 %v1402
        %v2428 = vunpack.c.l.b16 %v1403
        %v2429 = vunpack.c.l.b16 %v1404
        %v2430 = vunpack.c.l.b16 %v1405
        %v2431 = vunpack.c.l.b16 %v1406
        %v2432 = vunpack.c.l.b16 %v1407
        %v2433 = vunpack.c.l.b16 %v1408
        %v2434 = vunpack.c.l.b16 %v1409
        %v2435 = vunpack.c.l.b16 %v1410
        %v2436 = vunpack.c.l.b16 %v1411
        %v2437 = vunpack.c.l.b16 %v1412
        %v2438 = vunpack.c.l.b16 %v1413
        %v2439 = vunpack.c.l.b16 %v1414
        %v2440 = vunpack.c.l.b16 %v1415
        %v2441 = vunpack.c.l.b16 %v1416
        %v2442 = vunpack.c.l.b16 %v1417
        %v2443 = vunpack.c.l.b16 %v1418
        %v2444 = vunpack.c.l.b16 %v1419
        %v2445 = vunpack.c.l.b16 %v1420
        %v2446 = vunpack.c.l.b16 %v1421
        %v2447 = vunpack.c.l.b16 %v1422
        %v2448 = vunpack.c.l.b16 %v1423
        %v2449 = vunpack.c.l.b16 %v1424
        %v2450 = vunpack.c.l.b16 %v1425
        %v2451 = vunpack.c.l.b16 %v1426
        %v2452 = vunpack.c.l.b16 %v1427
        %v2453 = vunpack.c.l.b16 %v1428
        %v2454 = vunpack.c.l.b16 %v1429
        %v2455 = vunpack.c.l.b16 %v1430
        %v2456 = vunpack.c.l.b16 %v1431
        %v2457 = vunpack.c.l.b16 %v1432
        %v2458 = vunpack.c.l.b16 %v1433
        %v2459 = vunpack.c.l.b16 %v1434
        %v2460 = vunpack.c.l.b16 %v1435
        %v2461 = vunpack.c.l.b16 %v1436
        %v2462 = vunpack.c.l.b16 %v1437
        %v2463 = vunpack.c.l.b16 %v1438
        %v2464 = vunpack.c.l.b16 %v1439
        %v2465 = vunpack.c.l.b16 %v1440
        %v2466 = vunpack.c.l.b16 %v1441
        %v2467 = vunpack.c.l.b16 %v1442
        %v2468 = vunpack.c.l.b16 %v1443
        %v2469 = vunpack.c.l.b16 %v1444
        %v2470 = vunpack.c.l.b16 %v1445
        %v2471 = vunpack.c.l.b16 %v1446
        %v2472 = vunpack.c.l.b16 %v1447
        %v2473 = vunpack.c.l.b16 %v1448
        %v2474 = vunpack.c.l.b16 %v1449
        %v2475 = vunpack.c.l.b16 %v1450
        %v2476 = vunpack.c.l.b16 %v1451
        %v2477 = vunpack.c.l.b16 %v1452
        %v2478 = vunpack.c.l.b16 %v1453
        %v2479 = vunpack.c.l.b16 %v1454
        %v2480 = vunpack.c.l.b16 %v1455
        %v2481 = vunpack.c.l.b16 %v1456
        %v2482 = vunpack.c.l.b16 %v1457
        %v2483 = vunpack.c.l.b16 %v1458
        %v2484 = vunpack.c.l.b16 %v1459
        %v2485 = vunpack.c.l.b16 %v1460
        %v2486 = vunpack.c.l.b16 %v1461
        %v2487 = vunpack.c.l.b16 %v1462
        %v2488 = vunpack.c.l.b16 %v1463
        %v2489 = vunpack.c.l.b16 %v1464
        %v2490 = vunpack.c.l.b16 %v1465
        %v2491 = vunpack.c.l.b16 %v1466
        %v2492 = vunpack.c.l.b16 %v1467
        %v2493 = vunpack.c.l.b16 %v1468
        %v2494 = vunpack.c.l.b16 %v1469
        %v2495 = vunpack.c.l.b16 %v1470
        %v2496 = vunpack.c.l.b16 %v1471
        %v2497 = vunpack.c.l.b16 %v1472
        %v2498 = vunpack.c.l.b16 %v1473
        %v2499 = vunpack.c.l.b16 %v1474
        %v2500 = vunpack.c.l.b16 %v1475
        %v2501 = vunpack.c.l.b16 %v1476
        %v2502 = vunpack.c.l.b16 %v1477
        %v2503 = vunpack.c.l.b16 %v1478
        %v2504 = vunpack.c.l.b16 %v1479
        %v2505 = vunpack.c.l.b16 %v1480
        %v2506 = vpack.c.b16 %v1995, %v1994
        %v2507 = vpack.c.b16 %v1997, %v1996
        %v2508 = vpack.c.b16 %v1999, %v1998
        %v2509 = vpack.c.b16 %v2001, %v2000
        %v2510 = vpack.c.b16 %v2003, %v2002
        %v2511 = vpack.c.b16 %v2005, %v2004
        %v2512 = vpack.c.b16 %v2007, %v2006
        %v2513 = vpack.c.b16 %v2009, %v2008
        %v2514 = vpack.c.b16 %v2011, %v2010
        %v2515 = vpack.c.b16 %v2013, %v2012
        %v2516 = vpack.c.b16 %v2015, %v2014
        %v2517 = vpack.c.b16 %v2017, %v2016
        %v2518 = vpack.c.b16 %v2019, %v2018
        %v2519 = vpack.c.b16 %v2021, %v2020
        %v2520 = vpack.c.b16 %v2023, %v2022
        %v2521 = vpack.c.b16 %v2025, %v2024
        %v2522 = vpack.c.b16 %v2027, %v2026
        %v2523 = vpack.c.b16 %v2029, %v2028
        %v2524 = vpack.c.b16 %v2031, %v2030
        %v2525 = vpack.c.b16 %v2033, %v2032
        %v2526 = vpack.c.b16 %v2035, %v2034
        %v2527 = vpack.c.b16 %v2037, %v2036
        %v2528 = vpack.c.b16 %v2039, %v2038
        %v2529 = vpack.c.b16 %v2041, %v2040
        %v2530 = vpack.c.b16 %v2043, %v2042
        %v2531 = vpack.c.b16 %v2045, %v2044
        %v2532 = vpack.c.b16 %v2047, %v2046
        %v2533 = vpack.c.b16 %v2049, %v2048
        %v2534 = vpack.c.b16 %v2051, %v2050
        %v2535 = vpack.c.b16 %v2053, %v2052
        %v2536 = vpack.c.b16 %v2055, %v2054
        %v2537 = vpack.c.b16 %v2057, %v2056
        %v2538 = vpack.c.b16 %v2059, %v2058
        %v2539 = vpack.c.b16 %v2061, %v2060
        %v2540 = vpack.c.b16 %v2063, %v2062
        %v2541 = vpack.c.b16 %v2065, %v2064
        %v2542 = vpack.c.b16 %v2067, %v2066
        %v2543 = vpack.c.b16 %v2069, %v2068
        %v2544 = vpack.c.b16 %v2071, %v2070
        %v2545 = vpack.c.b16 %v2073, %v2072
        %v2546 = vpack.c.b16 %v2075, %v2074
        %v2547 = vpack.c.b16 %v2077, %v2076
        %v2548 = vpack.c.b16 %v2079, %v2078
        %v2549 = vpack.c.b16 %v2081, %v2080
        %v2550 = vpack.c.b16 %v2083, %v2082
        %v2551 = vpack.c.b16 %v2085, %v2084
        %v2552 = vpack.c.b16 %v2087, %v2086
        %v2553 = vpack.c.b16 %v2089, %v2088
        %v2554 = vpack.c.b16 %v2091, %v2090
        %v2555 = vpack.c.b16 %v2093, %v2092
        %v2556 = vpack.c.b16 %v2095, %v2094
        %v2557 = vpack.c.b16 %v2097, %v2096
        %v2558 = vpack.c.b16 %v2099, %v2098
        %v2559 = vpack.c.b16 %v2101, %v2100
        %v2560 = vpack.c.b16 %v2103, %v2102
        %v2561 = vpack.c.b16 %v2105, %v2104
        %v2562 = vpack.c.b16 %v2107, %v2106
        %v2563 = vpack.c.b16 %v2109, %v2108
        %v2564 = vpack.c.b16 %v2111, %v2110
        %v2565 = vpack.c.b16 %v2113, %v2112
        %v2566 = vpack.c.b16 %v2115, %v2114
        %v2567 = vpack.c.b16 %v2117, %v2116
        %v2568 = vpack.c.b16 %v2119, %v2118
        %v2569 = vpack.c.b16 %v2121, %v2120
        %v2570 = vpack.c.b16 %v2123, %v2122
        %v2571 = vpack.c.b16 %v2125, %v2124
        %v2572 = vpack.c.b16 %v2127, %v2126
        %v2573 = vpack.c.b16 %v2129, %v2128
        %v2574 = vpack.c.b16 %v2131, %v2130
        %v2575 = vpack.c.b16 %v2133, %v2132
        %v2576 = vpack.c.b16 %v2135, %v2134
        %v2577 = vpack.c.b16 %v2137, %v2136
        %v2578 = vpack.c.b16 %v2139, %v2138
        %v2579 = vpack.c.b16 %v2141, %v2140
        %v2580 = vpack.c.b16 %v2143, %v2142
        %v2581 = vpack.c.b16 %v2145, %v2144
        %v2582 = vpack.c.b16 %v2147, %v2146
        %v2583 = vpack.c.b16 %v2149, %v2148
        %v2584 = vpack.c.b16 %v2151, %v2150
        %v2585 = vpack.c.b16 %v2153, %v2152
        %v2586 = vpack.c.b16 %v2155, %v2154
        %v2587 = vpack.c.b16 %v2157, %v2156
        %v2588 = vpack.c.b16 %v2159, %v2158
        %v2589 = vpack.c.b16 %v2161, %v2160
        %v2590 = vpack.c.b16 %v2163, %v2162
        %v2591 = vpack.c.b16 %v2165, %v2164
        %v2592 = vpack.c.b16 %v2167, %v2166
        %v2593 = vpack.c.b16 %v2169, %v2168
        %v2594 = vpack.c.b16 %v2171, %v2170
        %v2595 = vpack.c.b16 %v2173, %v2172
        %v2596 = vpack.c.b16 %v2175, %v2174
        %v2597 = vpack.c.b16 %v2177, %v2176
        %v2598 = vpack.c.b16 %v2179, %v2178
        %v2599 = vpack.c.b16 %v2181, %v2180
        %v2600 = vpack.c.b16 %v2183, %v2182
        %v2601 = vpack.c.b16 %v2185, %v2184
        %v2602 = vpack.c.b16 %v2187, %v2186
        %v2603 = vpack.c.b16 %v2189, %v2188
        %v2604 = vpack.c.b16 %v2191, %v2190
        %v2605 = vpack.c.b16 %v2193, %v2192
        %v2606 = vpack.c.b16 %v2195, %v2194
        %v2607 = vpack.c.b16 %v2197, %v2196
        %v2608 = vpack.c.b16 %v2199, %v2198
        %v2609 = vpack.c.b16 %v2201, %v2200
        %v2610 = vpack.c.b16 %v2203, %v2202
        %v2611 = vpack.c.b16 %v2205, %v2204
        %v2612 = vpack.c.b16 %v2207, %v2206
        %v2613 = vpack.c.b16 %v2209, %v2208
        %v2614 = vpack.c.b16 %v2211, %v2210
        %v2615 = vpack.c.b16 %v2213, %v2212
        %v2616 = vpack.c.b16 %v2215, %v2214
        %v2617 = vpack.c.b16 %v2217, %v2216
        %v2618 = vpack.c.b16 %v2219, %v2218
        %v2619 = vpack.c.b16 %v2221, %v2220
        %v2620 = vpack.c.b16 %v2223, %v2222
        %v2621 = vpack.c.b16 %v2225, %v2224
        %v2622 = vpack.c.b16 %v2227, %v2226
        %v2623 = vpack.c.b16 %v2229, %v2228
        %v2624 = vpack.c.b16 %v2231, %v2230
        %v2625 = vpack.c.b16 %v2233, %v2232
        %v2626 = vpack.c.b16 %v2235, %v2234
        %v2627 = vpack.c.b16 %v2237, %v2236
        %v2628 = vpack.c.b16 %v2239, %v2238
        %v2629 = vpack.c.b16 %v2241, %v2240
        %v2630 = vpack.c.b16 %v2243, %v2242
        %v2631 = vpack.c.b16 %v2245, %v2244
        %v2632 = vpack.c.b16 %v2247, %v2246
        %v2633 = vpack.c.b16 %v2249, %v2248
        %v2634 = vpack.c.b16 %v2251, %v2250
        %v2635 = vpack.c.b16 %v2253, %v2252
        %v2636 = vpack.c.b16 %v2255, %v2254
        %v2637 = vpack.c.b16 %v2257, %v2256
        %v2638 = vpack.c.b16 %v2259, %v2258
        %v2639 = vpack.c.b16 %v2261, %v2260
        %v2640 = vpack.c.b16 %v2263, %v2262
        %v2641 = vpack.c.b16 %v2265, %v2264
        %v2642 = vpack.c.b16 %v2267, %v2266
        %v2643 = vpack.c.b16 %v2269, %v2268
        %v2644 = vpack.c.b16 %v2271, %v2270
        %v2645 = vpack.c.b16 %v2273, %v2272
        %v2646 = vpack.c.b16 %v2275, %v2274
        %v2647 = vpack.c.b16 %v2277, %v2276
        %v2648 = vpack.c.b16 %v2279, %v2278
        %v2649 = vpack.c.b16 %v2281, %v2280
        %v2650 = vpack.c.b16 %v2283, %v2282
        %v2651 = vpack.c.b16 %v2285, %v2284
        %v2652 = vpack.c.b16 %v2287, %v2286
        %v2653 = vpack.c.b16 %v2289, %v2288
        %v2654 = vpack.c.b16 %v2291, %v2290
        %v2655 = vpack.c.b16 %v2293, %v2292
        %v2656 = vpack.c.b16 %v2295, %v2294
        %v2657 = vpack.c.b16 %v2297, %v2296
        %v2658 = vpack.c.b16 %v2299, %v2298
        %v2659 = vpack.c.b16 %v2301, %v2300
        %v2660 = vpack.c.b16 %v2303, %v2302
        %v2661 = vpack.c.b16 %v2305, %v2304
        %v2662 = vpack.c.b16 %v2307, %v2306
        %v2663 = vpack.c.b16 %v2309, %v2308
        %v2664 = vpack.c.b16 %v2311, %v2310
        %v2665 = vpack.c.b16 %v2313, %v2312
        %v2666 = vpack.c.b16 %v2315, %v2314
        %v2667 = vpack.c.b16 %v2317, %v2316
        %v2668 = vpack.c.b16 %v2319, %v2318
        %v2669 = vpack.c.b16 %v2321, %v2320
        %v2670 = vpack.c.b16 %v2323, %v2322
        %v2671 = vpack.c.b16 %v2325, %v2324
        %v2672 = vpack.c.b16 %v2327, %v2326
        %v2673 = vpack.c.b16 %v2329, %v2328
        %v2674 = vpack.c.b16 %v2331, %v2330
        %v2675 = vpack.c.b16 %v2333, %v2332
        %v2676 = vpack.c.b16 %v2335, %v2334
        %v2677 = vpack.c.b16 %v2337, %v2336
        %v2678 = vpack.c.b16 %v2339, %v2338
        %v2679 = vpack.c.b16 %v2341, %v2340
        %v2680 = vpack.c.b16 %v2343, %v2342
        %v2681 = vpack.c.b16 %v2345, %v2344
        %v2682 = vpack.c.b16 %v2347, %v2346
        %v2683 = vpack.c.b16 %v2349, %v2348
        %v2684 = vpack.c.b16 %v2351, %v2350
        %v2685 = vpack.c.b16 %v2353, %v2352
        %v2686 = vpack.c.b16 %v2355, %v2354
        %v2687 = vpack.c.b16 %v2357, %v2356
        %v2688 = vpack.c.b16 %v2359, %v2358
        %v2689 = vpack.c.b16 %v2361, %v2360
        %v2690 = vpack.c.b16 %v2363, %v2362
        %v2691 = vpack.c.b16 %v2365, %v2364
        %v2692 = vpack.c.b16 %v2367, %v2366
        %v2693 = vpack.c.b16 %v2369, %v2368
        %v2694 = vpack.c.b16 %v2371, %v2370
        %v2695 = vpack.c.b16 %v2373, %v2372
        %v2696 = vpack.c.b16 %v2375, %v2374
        %v2697 = vpack.c.b16 %v2377, %v2376
        %v2698 = vpack.c.b16 %v2379, %v2378
        %v2699 = vpack.c.b16 %v2381, %v2380
        %v2700 = vpack.c.b16 %v2383, %v2382
        %v2701 = vpack.c.b16 %v2385, %v2384
        %v2702 = vpack.c.b16 %v2387, %v2386
        %v2703 = vpack.c.b16 %v2389, %v2388
        %v2704 = vpack.c.b16 %v2391, %v2390
        %v2705 = vpack.c.b16 %v2393, %v2392
        %v2706 = vpack.c.b16 %v2395, %v2394
        %v2707 = vpack.c.b16 %v2397, %v2396
        %v2708 = vpack.c.b16 %v2399, %v2398
        %v2709 = vpack.c.b16 %v2401, %v2400
        %v2710 = vpack.c.b16 %v2403, %v2402
        %v2711 = vpack.c.b16 %v2405, %v2404
        %v2712 = vpack.c.b16 %v2407, %v2406
        %v2713 = vpack.c.b16 %v2409, %v2408
        %v2714 = vpack.c.b16 %v2411, %v2410
        %v2715 = vpack.c.b16 %v2413, %v2412
        %v2716 = vpack.c.b16 %v2415, %v2414
        %v2717 = vpack.c.b16 %v2417, %v2416
        %v2718 = vpack.c.b16 %v2419, %v2418
        %v2719 = vpack.c.b16 %v2421, %v2420
        %v2720 = vpack.c.b16 %v2423, %v2422
        %v2721 = vpack.c.b16 %v2425, %v2424
        %v2722 = vpack.c.b16 %v2427, %v2426
        %v2723 = vpack.c.b16 %v2429, %v2428
        %v2724 = vpack.c.b16 %v2431, %v2430
        %v2725 = vpack.c.b16 %v2433, %v2432
        %v2726 = vpack.c.b16 %v2435, %v2434
        %v2727 = vpack.c.b16 %v2437, %v2436
        %v2728 = vpack.c.b16 %v2439, %v2438
        %v2729 = vpack.c.b16 %v2441, %v2440
        %v2730 = vpack.c.b16 %v2443, %v2442
        %v2731 = vpack.c.b16 %v2445, %v2444
        %v2732 = vpack.c.b16 %v2447, %v2446
        %v2733 = vpack.c.b16 %v2449, %v2448
        %v2734 = vpack.c.b16 %v2451, %v2450
        %v2735 = vpack.c.b16 %v2453, %v2452
        %v2736 = vpack.c.b16 %v2455, %v2454
        %v2737 = vpack.c.b16 %v2457, %v2456
        %v2738 = vpack.c.b16 %v2459, %v2458
        %v2739 = vpack.c.b16 %v2461, %v2460
        %v2740 = vpack.c.b16 %v2463, %v2462
        %v2741 = vpack.c.b16 %v2465, %v2464
        %v2742 = vpack.c.b16 %v2467, %v2466
        %v2743 = vpack.c.b16 %v2469, %v2468
        %v2744 = vpack.c.b16 %v2471, %v2470
        %v2745 = vpack.c.b16 %v2473, %v2472
        %v2746 = vpack.c.b16 %v2475, %v2474
        %v2747 = vpack.c.b16 %v2477, %v2476
        %v2748 = vpack.c.b16 %v2479, %v2478
        %v2749 = vpack.c.b16 %v2481, %v2480
        %v2750 = vpack.c.b16 %v2483, %v2482
        %v2751 = vpack.c.b16 %v2485, %v2484
        %v2752 = vpack.c.b16 %v2487, %v2486
        %v2753 = vpack.c.b16 %v2489, %v2488
        %v2754 = vpack.c.b16 %v2491, %v2490
        %v2755 = vpack.c.b16 %v2493, %v2492
        %v2756 = vpack.c.b16 %v2495, %v2494
        %v2757 = vpack.c.b16 %v2497, %v2496
        %v2758 = vpack.c.b16 %v2499, %v2498
        %v2759 = vpack.c.b16 %v2501, %v2500
        %v2760 = vpack.c.b16 %v2503, %v2502
        %v2761 = vpack.c.b16 %v2505, %v2504
        %3018 = vmatprep.subr.bf16.mxu0 0
        %3019 = vmatpush1.bf16.msra.mxu0 %v2506
        %3020 = vmatprep.subr.bf16.mxu0 0
        %3021 = vmatpush1.bf16.msra.mxu0 %v2507
        %3022 = vmatprep.subr.bf16.mxu0 0
        %3023 = vmatpush1.bf16.msra.mxu0 %v2508
        %3024 = vmatprep.subr.bf16.mxu0 0
        %3025 = vmatpush1.bf16.msra.mxu0 %v2509
        %3026 = vmatprep.subr.bf16.mxu0 0
        %3027 = vmatpush1.bf16.msra.mxu0 %v2510
        %3028 = vmatprep.subr.bf16.mxu0 0
        %3029 = vmatpush1.bf16.msra.mxu0 %v2511
        %3030 = vmatprep.subr.bf16.mxu0 0
        %3031 = vmatpush1.bf16.msra.mxu0 %v2512
        %3032 = vmatprep.subr.bf16.mxu0 0
        %3033 = vmatpush1.bf16.msra.mxu0 %v2513
        %3034 = vmatprep.subr.bf16.mxu0 0
        %3035 = vmatpush1.bf16.msra.mxu0 %v2514
        %3036 = vmatprep.subr.bf16.mxu0 0
        %3037 = vmatpush1.bf16.msra.mxu0 %v2515
        %3038 = vmatprep.subr.bf16.mxu0 0
        %3039 = vmatpush1.bf16.msra.mxu0 %v2516
        %3040 = vmatprep.subr.bf16.mxu0 0
        %3041 = vmatpush1.bf16.msra.mxu0 %v2517
        %3042 = vmatprep.subr.bf16.mxu0 0
        %3043 = vmatpush1.bf16.msra.mxu0 %v2518
        %3044 = vmatprep.subr.bf16.mxu0 0
        %3045 = vmatpush1.bf16.msra.mxu0 %v2519
        %3046 = vmatprep.subr.bf16.mxu0 0
        %3047 = vmatpush1.bf16.msra.mxu0 %v2520
        %3048 = vmatprep.subr.bf16.mxu0 0
        %3049 = vmatpush1.bf16.msra.mxu0 %v2521
        %3050 = vmatprep.mubr.bf16.mxu0 %v938
        %3051 = vmatmul.mubr.bf16.gmra.mrb[0].mxu0 %v937
        %v3052 = vpop.f32.mrb[0].mxu0
        %v3053 = vadd.f32 %v1481, %v3052
        %v3054 = vpop.f32.mrb[0].mxu0
        %v3055 = vpop.f32.mrb[0].mxu0
        %v3056 = vpop.f32.mrb[0].mxu0
        %3057 = vdwg.mxu0
        %3058 = vmatprep.subr.bf16.mxu0 0
        %3059 = vmatpush1.bf16.msra.mxu0 %v2522
        %3060 = vmatprep.subr.bf16.mxu0 0
        %3061 = vmatpush1.bf16.msra.mxu0 %v2523
        %3062 = vmatprep.subr.bf16.mxu0 0
        %3063 = vmatpush1.bf16.msra.mxu0 %v2524
        %3064 = vmatprep.subr.bf16.mxu0 0
        %3065 = vmatpush1.bf16.msra.mxu0 %v2525
        %3066 = vmatprep.subr.bf16.mxu0 0
        %3067 = vmatpush1.bf16.msra.mxu0 %v2526
        %3068 = vmatprep.subr.bf16.mxu0 0
        %3069 = vmatpush1.bf16.msra.mxu0 %v2527
        %3070 = vmatprep.subr.bf16.mxu0 0
        %3071 = vmatpush1.bf16.msra.mxu0 %v2528
        %3072 = vmatprep.subr.bf16.mxu0 0
        %3073 = vmatpush1.bf16.msra.mxu0 %v2529
        %3074 = vmatprep.subr.bf16.mxu0 0
        %3075 = vmatpush1.bf16.msra.mxu0 %v2530
        %3076 = vmatprep.subr.bf16.mxu0 0
        %3077 = vmatpush1.bf16.msra.mxu0 %v2531
        %3078 = vmatprep.subr.bf16.mxu0 0
        %3079 = vmatpush1.bf16.msra.mxu0 %v2532
        %3080 = vmatprep.subr.bf16.mxu0 0
        %3081 = vmatpush1.bf16.msra.mxu0 %v2533
        %3082 = vmatprep.subr.bf16.mxu0 0
        %3083 = vmatpush1.bf16.msra.mxu0 %v2534
        %3084 = vmatprep.subr.bf16.mxu0 0
        %3085 = vmatpush1.bf16.msra.mxu0 %v2535
        %3086 = vmatprep.subr.bf16.mxu0 0
        %3087 = vmatpush1.bf16.msra.mxu0 %v2536
        %3088 = vmatprep.subr.bf16.mxu0 0
        %3089 = vmatpush1.bf16.msra.mxu0 %v2537
        %3090 = vmatprep.mubr.bf16.mxu0 %v940
        %3091 = vmatmul.mubr.bf16.gmra.mrb[0].mxu0 %v939
        %v3092 = vpop.f32.mrb[0].mxu0
        %v3093 = vadd.f32 %v3053, %v3092
        %v3094 = vpop.f32.mrb[0].mxu0
        %v3095 = vpop.f32.mrb[0].mxu0
        %v3096 = vpop.f32.mrb[0].mxu0
        %3097 = vdwg.mxu0
        %3098 = vmatprep.subr.bf16.mxu0 0
        %3099 = vmatpush1.bf16.msra.mxu0 %v2538
        %3100 = vmatprep.subr.bf16.mxu0 0
        %3101 = vmatpush1.bf16.msra.mxu0 %v2539
        %3102 = vmatprep.subr.bf16.mxu0 0
        %3103 = vmatpush1.bf16.msra.mxu0 %v2540
        %3104 = vmatprep.subr.bf16.mxu0 0
        %3105 = vmatpush1.bf16.msra.mxu0 %v2541
        %3106 = vmatprep.subr.bf16.mxu0 0
        %3107 = vmatpush1.bf16.msra.mxu0 %v2542
        %3108 = vmatprep.subr.bf16.mxu0 0
        %3109 = vmatpush1.bf16.msra.mxu0 %v2543
        %3110 = vmatprep.subr.bf16.mxu0 0
        %3111 = vmatpush1.bf16.msra.mxu0 %v2544
        %3112 = vmatprep.subr.bf16.mxu0 0
        %3113 = vmatpush1.bf16.msra.mxu0 %v2545
        %3114 = vmatprep.subr.bf16.mxu0 0
        %3115 = vmatpush1.bf16.msra.mxu0 %v2546
        %3116 = vmatprep.subr.bf16.mxu0 0
        %3117 = vmatpush1.bf16.msra.mxu0 %v2547
        %3118 = vmatprep.subr.bf16.mxu0 0
        %3119 = vmatpush1.bf16.msra.mxu0 %v2548
        %3120 = vmatprep.subr.bf16.mxu0 0
        %3121 = vmatpush1.bf16.msra.mxu0 %v2549
        %3122 = vmatprep.subr.bf16.mxu0 0
        %3123 = vmatpush1.bf16.msra.mxu0 %v2550
        %3124 = vmatprep.subr.bf16.mxu0 0
        %3125 = vmatpush1.bf16.msra.mxu0 %v2551
        %3126 = vmatprep.subr.bf16.mxu0 0
        %3127 = vmatpush1.bf16.msra.mxu0 %v2552
        %3128 = vmatprep.subr.bf16.mxu0 0
        %3129 = vmatpush1.bf16.msra.mxu0 %v2553
        %3130 = vmatprep.mubr.bf16.mxu0 %v942
        %3131 = vmatmul.mubr.bf16.gmra.mrb[0].mxu0 %v941
        %v3132 = vpop.f32.mrb[0].mxu0
        %v3133 = vadd.f32 %v3093, %v3132
        %v3134 = vpop.f32.mrb[0].mxu0
        %v3135 = vpop.f32.mrb[0].mxu0
        %v3136 = vpop.f32.mrb[0].mxu0
        %3137 = vdwg.mxu0
        %3138 = vmatprep.subr.bf16.mxu0 0
        %3139 = vmatpush1.bf16.msra.mxu0 %v2554
        %3140 = vmatprep.subr.bf16.mxu0 0
        %3141 = vmatpush1.bf16.msra.mxu0 %v2555
        %3142 = vmatprep.subr.bf16.mxu0 0
        %3143 = vmatpush1.bf16.msra.mxu0 %v2556
        %3144 = vmatprep.subr.bf16.mxu0 0
        %3145 = vmatpush1.bf16.msra.mxu0 %v2557
        %3146 = vmatprep.subr.bf16.mxu0 0
        %3147 = vmatpush1.bf16.msra.mxu0 %v2558
        %3148 = vmatprep.subr.bf16.mxu0 0
        %3149 = vmatpush1.bf16.msra.mxu0 %v2559
        %3150 = vmatprep.subr.bf16.mxu0 0
        %3151 = vmatpush1.bf16.msra.mxu0 %v2560
        %3152 = vmatprep.subr.bf16.mxu0 0
        %3153 = vmatpush1.bf16.msra.mxu0 %v2561
        %3154 = vmatprep.subr.bf16.mxu0 0
        %3155 = vmatpush1.bf16.msra.mxu0 %v2562
        %3156 = vmatprep.subr.bf16.mxu0 0
        %3157 = vmatpush1.bf16.msra.mxu0 %v2563
        %3158 = vmatprep.subr.bf16.mxu0 0
        %3159 = vmatpush1.bf16.msra.mxu0 %v2564
        %3160 = vmatprep.subr.bf16.mxu0 0
        %3161 = vmatpush1.bf16.msra.mxu0 %v2565
        %3162 = vmatprep.subr.bf16.mxu0 0
        %3163 = vmatpush1.bf16.msra.mxu0 %v2566
        %3164 = vmatprep.subr.bf16.mxu0 0
        %3165 = vmatpush1.bf16.msra.mxu0 %v2567
        %3166 = vmatprep.subr.bf16.mxu0 0
        %3167 = vmatpush1.bf16.msra.mxu0 %v2568
        %3168 = vmatprep.subr.bf16.mxu0 0
        %3169 = vmatpush1.bf16.msra.mxu0 %v2569
        %3170 = vmatprep.mubr.bf16.mxu0 %v944
        %3171 = vmatmul.mubr.bf16.gmra.mrb[0].mxu0 %v943
        %v3172 = vpop.f32.mrb[0].mxu0
        %v3173 = vadd.f32 %v3133, %v3172
        %v3174 = vpop.f32.mrb[0].mxu0
        %v3175 = vpop.f32.mrb[0].mxu0
        %v3176 = vpop.f32.mrb[0].mxu0
        %3177 = vdwg.mxu0
        %3178 = vmatprep.subr.bf16.mxu0 0
        %3179 = vmatpush1.bf16.msra.mxu0 %v2570
        %3180 = vmatprep.subr.bf16.mxu0 0
        %3181 = vmatpush1.bf16.msra.mxu0 %v2571
        %3182 = vmatprep.subr.bf16.mxu0 0
        %3183 = vmatpush1.bf16.msra.mxu0 %v2572
        %3184 = vmatprep.subr.bf16.mxu0 0
        %3185 = vmatpush1.bf16.msra.mxu0 %v2573
        %3186 = vmatprep.subr.bf16.mxu0 0
        %3187 = vmatpush1.bf16.msra.mxu0 %v2574
        %3188 = vmatprep.subr.bf16.mxu0 0
        %3189 = vmatpush1.bf16.msra.mxu0 %v2575
        %3190 = vmatprep.subr.bf16.mxu0 0
        %3191 = vmatpush1.bf16.msra.mxu0 %v2576
        %3192 = vmatprep.subr.bf16.mxu0 0
        %3193 = vmatpush1.bf16.msra.mxu0 %v2577
        %3194 = vmatprep.subr.bf16.mxu0 0
        %3195 = vmatpush1.bf16.msra.mxu0 %v2578
        %3196 = vmatprep.subr.bf16.mxu0 0
        %3197 = vmatpush1.bf16.msra.mxu0 %v2579
        %3198 = vmatprep.subr.bf16.mxu0 0
        %3199 = vmatpush1.bf16.msra.mxu0 %v2580
        %3200 = vmatprep.subr.bf16.mxu0 0
        %3201 = vmatpush1.bf16.msra.mxu0 %v2581
        %3202 = vmatprep.subr.bf16.mxu0 0
        %3203 = vmatpush1.bf16.msra.mxu0 %v2582
        %3204 = vmatprep.subr.bf16.mxu0 0
        %3205 = vmatpush1.bf16.msra.mxu0 %v2583
        %3206 = vmatprep.subr.bf16.mxu0 0
        %3207 = vmatpush1.bf16.msra.mxu0 %v2584
        %3208 = vmatprep.subr.bf16.mxu0 0
        %3209 = vmatpush1.bf16.msra.mxu0 %v2585
        %3210 = vmatprep.mubr.bf16.mxu0 %v946
        %3211 = vmatmul.mubr.bf16.gmra.mrb[0].mxu0 %v945
        %v3212 = vpop.f32.mrb[0].mxu0
        %v3213 = vadd.f32 %v3173, %v3212
        %v3214 = vpop.f32.mrb[0].mxu0
        %v3215 = vpop.f32.mrb[0].mxu0
        %v3216 = vpop.f32.mrb[0].mxu0
        %3217 = vdwg.mxu0
        %3218 = vmatprep.subr.bf16.mxu0 0
        %3219 = vmatpush1.bf16.msra.mxu0 %v2586
        %3220 = vmatprep.subr.bf16.mxu0 0
        %3221 = vmatpush1.bf16.msra.mxu0 %v2587
        %3222 = vmatprep.subr.bf16.mxu0 0
        %3223 = vmatpush1.bf16.msra.mxu0 %v2588
        %3224 = vmatprep.subr.bf16.mxu0 0
        %3225 = vmatpush1.bf16.msra.mxu0 %v2589
        %3226 = vmatprep.subr.bf16.mxu0 0
        %3227 = vmatpush1.bf16.msra.mxu0 %v2590
        %3228 = vmatprep.subr.bf16.mxu0 0
        %3229 = vmatpush1.bf16.msra.mxu0 %v2591
        %3230 = vmatprep.subr.bf16.mxu0 0
        %3231 = vmatpush1.bf16.msra.mxu0 %v2592
        %3232 = vmatprep.subr.bf16.mxu0 0
        %3233 = vmatpush1.bf16.msra.mxu0 %v2593
        %3234 = vmatprep.subr.bf16.mxu0 0
        %3235 = vmatpush1.bf16.msra.mxu0 %v2594
        %3236 = vmatprep.subr.bf16.mxu0 0
        %3237 = vmatpush1.bf16.msra.mxu0 %v2595
        %3238 = vmatprep.subr.bf16.mxu0 0
        %3239 = vmatpush1.bf16.msra.mxu0 %v2596
        %3240 = vmatprep.subr.bf16.mxu0 0
        %3241 = vmatpush1.bf16.msra.mxu0 %v2597
        %3242 = vmatprep.subr.bf16.mxu0 0
        %3243 = vmatpush1.bf16.msra.mxu0 %v2598
        %3244 = vmatprep.subr.bf16.mxu0 0
        %3245 = vmatpush1.bf16.msra.mxu0 %v2599
        %3246 = vmatprep.subr.bf16.mxu0 0
        %3247 = vmatpush1.bf16.msra.mxu0 %v2600
        %3248 = vmatprep.subr.bf16.mxu0 0
        %3249 = vmatpush1.bf16.msra.mxu0 %v2601
        %3250 = vmatprep.mubr.bf16.mxu0 %v948
        %3251 = vmatmul.mubr.bf16.gmra.mrb[0].mxu0 %v947
        %v3252 = vpop.f32.mrb[0].mxu0
        %v3253 = vadd.f32 %v3213, %v3252
        %v3254 = vpop.f32.mrb[0].mxu0
        %v3255 = vpop.f32.mrb[0].mxu0
        %v3256 = vpop.f32.mrb[0].mxu0
        %3257 = vdwg.mxu0
        %3258 = vmatprep.subr.bf16.mxu0 0
        %3259 = vmatpush1.bf16.msra.mxu0 %v2602
        %3260 = vmatprep.subr.bf16.mxu0 0
        %3261 = vmatpush1.bf16.msra.mxu0 %v2603
        %3262 = vmatprep.subr.bf16.mxu0 0
        %3263 = vmatpush1.bf16.msra.mxu0 %v2604
        %3264 = vmatprep.subr.bf16.mxu0 0
        %3265 = vmatpush1.bf16.msra.mxu0 %v2605
        %3266 = vmatprep.subr.bf16.mxu0 0
        %3267 = vmatpush1.bf16.msra.mxu0 %v2606
        %3268 = vmatprep.subr.bf16.mxu0 0
        %3269 = vmatpush1.bf16.msra.mxu0 %v2607
        %3270 = vmatprep.subr.bf16.mxu0 0
        %3271 = vmatpush1.bf16.msra.mxu0 %v2608
        %3272 = vmatprep.subr.bf16.mxu0 0
        %3273 = vmatpush1.bf16.msra.mxu0 %v2609
        %3274 = vmatprep.subr.bf16.mxu0 0
        %3275 = vmatpush1.bf16.msra.mxu0 %v2610
        %3276 = vmatprep.subr.bf16.mxu0 0
        %3277 = vmatpush1.bf16.msra.mxu0 %v2611
        %3278 = vmatprep.subr.bf16.mxu0 0
        %3279 = vmatpush1.bf16.msra.mxu0 %v2612
        %3280 = vmatprep.subr.bf16.mxu0 0
        %3281 = vmatpush1.bf16.msra.mxu0 %v2613
        %3282 = vmatprep.subr.bf16.mxu0 0
        %3283 = vmatpush1.bf16.msra.mxu0 %v2614
        %3284 = vmatprep.subr.bf16.mxu0 0
        %3285 = vmatpush1.bf16.msra.mxu0 %v2615
        %3286 = vmatprep.subr.bf16.mxu0 0
        %3287 = vmatpush1.bf16.msra.mxu0 %v2616
        %3288 = vmatprep.subr.bf16.mxu0 0
        %3289 = vmatpush1.bf16.msra.mxu0 %v2617
        %3290 = vmatprep.mubr.bf16.mxu0 %v950
        %3291 = vmatmul.mubr.bf16.gmra.mrb[0].mxu0 %v949
        %v3292 = vpop.f32.mrb[0].mxu0
        %v3293 = vadd.f32 %v3253, %v3292
        %v3294 = vpop.f32.mrb[0].mxu0
        %v3295 = vpop.f32.mrb[0].mxu0
        %v3296 = vpop.f32.mrb[0].mxu0
        %3297 = vdwg.mxu0
        %3298 = vmatprep.subr.bf16.mxu0 0
        %3299 = vmatpush1.bf16.msra.mxu0 %v2618
        %3300 = vmatprep.subr.bf16.mxu0 0
        %3301 = vmatpush1.bf16.msra.mxu0 %v2619
        %3302 = vmatprep.subr.bf16.mxu0 0
        %3303 = vmatpush1.bf16.msra.mxu0 %v2620
        %3304 = vmatprep.subr.bf16.mxu0 0
        %3305 = vmatpush1.bf16.msra.mxu0 %v2621
        %3306 = vmatprep.subr.bf16.mxu0 0
        %3307 = vmatpush1.bf16.msra.mxu0 %v2622
        %3308 = vmatprep.subr.bf16.mxu0 0
        %3309 = vmatpush1.bf16.msra.mxu0 %v2623
        %3310 = vmatprep.subr.bf16.mxu0 0
        %3311 = vmatpush1.bf16.msra.mxu0 %v2624
        %3312 = vmatprep.subr.bf16.mxu0 0
        %3313 = vmatpush1.bf16.msra.mxu0 %v2625
        %3314 = vmatprep.subr.bf16.mxu0 0
        %3315 = vmatpush1.bf16.msra.mxu0 %v2626
        %3316 = vmatprep.subr.bf16.mxu0 0
        %3317 = vmatpush1.bf16.msra.mxu0 %v2627
        %3318 = vmatprep.subr.bf16.mxu0 0
        %3319 = vmatpush1.bf16.msra.mxu0 %v2628
        %3320 = vmatprep.subr.bf16.mxu0 0
        %3321 = vmatpush1.bf16.msra.mxu0 %v2629
        %3322 = vmatprep.subr.bf16.mxu0 0
        %3323 = vmatpush1.bf16.msra.mxu0 %v2630
        %3324 = vmatprep.subr.bf16.mxu0 0
        %3325 = vmatpush1.bf16.msra.mxu0 %v2631
        %3326 = vmatprep.subr.bf16.mxu0 0
        %3327 = vmatpush1.bf16.msra.mxu0 %v2632
        %3328 = vmatprep.subr.bf16.mxu0 0
        %3329 = vmatpush1.bf16.msra.mxu0 %v2633
        %3330 = vmatprep.mubr.bf16.mxu0 %v952
        %3331 = vmatmul.mubr.bf16.gmra.mrb[0].mxu0 %v951
        %v3332 = vpop.f32.mrb[0].mxu0
        %v3333 = vadd.f32 %v3293, %v3332
        %v3334 = vpop.f32.mrb[0].mxu0
        %v3335 = vpop.f32.mrb[0].mxu0
        %v3336 = vpop.f32.mrb[0].mxu0
        %3337 = vdwg.mxu0
        %3338 = vmatprep.subr.bf16.mxu0 0
        %3339 = vmatpush1.bf16.msra.mxu0 %v2634
        %3340 = vmatprep.subr.bf16.mxu0 0
        %3341 = vmatpush1.bf16.msra.mxu0 %v2635
        %3342 = vmatprep.subr.bf16.mxu0 0
        %3343 = vmatpush1.bf16.msra.mxu0 %v2636
        %3344 = vmatprep.subr.bf16.mxu0 0
        %3345 = vmatpush1.bf16.msra.mxu0 %v2637
        %3346 = vmatprep.subr.bf16.mxu0 0
        %3347 = vmatpush1.bf16.msra.mxu0 %v2638
        %3348 = vmatprep.subr.bf16.mxu0 0
        %3349 = vmatpush1.bf16.msra.mxu0 %v2639
        %3350 = vmatprep.subr.bf16.mxu0 0
        %3351 = vmatpush1.bf16.msra.mxu0 %v2640
        %3352 = vmatprep.subr.bf16.mxu0 0
        %3353 = vmatpush1.bf16.msra.mxu0 %v2641
        %3354 = vmatprep.subr.bf16.mxu0 0
        %3355 = vmatpush1.bf16.msra.mxu0 %v2642
        %3356 = vmatprep.subr.bf16.mxu0 0
        %3357 = vmatpush1.bf16.msra.mxu0 %v2643
        %3358 = vmatprep.subr.bf16.mxu0 0
        %3359 = vmatpush1.bf16.msra.mxu0 %v2644
        %3360 = vmatprep.subr.bf16.mxu0 0
        %3361 = vmatpush1.bf16.msra.mxu0 %v2645
        %3362 = vmatprep.subr.bf16.mxu0 0
        %3363 = vmatpush1.bf16.msra.mxu0 %v2646
        %3364 = vmatprep.subr.bf16.mxu0 0
        %3365 = vmatpush1.bf16.msra.mxu0 %v2647
        %3366 = vmatprep.subr.bf16.mxu0 0
        %3367 = vmatpush1.bf16.msra.mxu0 %v2648
        %3368 = vmatprep.subr.bf16.mxu0 0
        %3369 = vmatpush1.bf16.msra.mxu0 %v2649
        %3370 = vmatprep.mubr.bf16.mxu0 %v954
        %3371 = vmatmul.mubr.bf16.gmra.mrb[0].mxu0 %v953
        %v3372 = vpop.f32.mrb[0].mxu0
        %v3373 = vadd.f32 %v3333, %v3372
        %v3374 = vpop.f32.mrb[0].mxu0
        %v3375 = vpop.f32.mrb[0].mxu0
        %v3376 = vpop.f32.mrb[0].mxu0
        %3377 = vdwg.mxu0
        %3378 = vmatprep.subr.bf16.mxu0 0
        %3379 = vmatpush1.bf16.msra.mxu0 %v2650
        %3380 = vmatprep.subr.bf16.mxu0 0
        %3381 = vmatpush1.bf16.msra.mxu0 %v2651
        %3382 = vmatprep.subr.bf16.mxu0 0
        %3383 = vmatpush1.bf16.msra.mxu0 %v2652
        %3384 = vmatprep.subr.bf16.mxu0 0
        %3385 = vmatpush1.bf16.msra.mxu0 %v2653
        %3386 = vmatprep.subr.bf16.mxu0 0
        %3387 = vmatpush1.bf16.msra.mxu0 %v2654
        %3388 = vmatprep.subr.bf16.mxu0 0
        %3389 = vmatpush1.bf16.msra.mxu0 %v2655
        %3390 = vmatprep.subr.bf16.mxu0 0
        %3391 = vmatpush1.bf16.msra.mxu0 %v2656
        %3392 = vmatprep.subr.bf16.mxu0 0
        %3393 = vmatpush1.bf16.msra.mxu0 %v2657
        %3394 = vmatprep.subr.bf16.mxu0 0
        %3395 = vmatpush1.bf16.msra.mxu0 %v2658
        %3396 = vmatprep.subr.bf16.mxu0 0
        %3397 = vmatpush1.bf16.msra.mxu0 %v2659
        %3398 = vmatprep.subr.bf16.mxu0 0
        %3399 = vmatpush1.bf16.msra.mxu0 %v2660
        %3400 = vmatprep.subr.bf16.mxu0 0
        %3401 = vmatpush1.bf16.msra.mxu0 %v2661
        %3402 = vmatprep.subr.bf16.mxu0 0
        %3403 = vmatpush1.bf16.msra.mxu0 %v2662
        %3404 = vmatprep.subr.bf16.mxu0 0
        %3405 = vmatpush1.bf16.msra.mxu0 %v2663
        %3406 = vmatprep.subr.bf16.mxu0 0
        %3407 = vmatpush1.bf16.msra.mxu0 %v2664
        %3408 = vmatprep.subr.bf16.mxu0 0
        %3409 = vmatpush1.bf16.msra.mxu0 %v2665
        %3410 = vmatprep.mubr.bf16.mxu0 %v956
        %3411 = vmatmul.mubr.bf16.gmra.mrb[0].mxu0 %v955
        %v3412 = vpop.f32.mrb[0].mxu0
        %v3413 = vadd.f32 %v3373, %v3412
        %v3414 = vpop.f32.mrb[0].mxu0
        %v3415 = vpop.f32.mrb[0].mxu0
        %v3416 = vpop.f32.mrb[0].mxu0
        %3417 = vdwg.mxu0
        %3418 = vmatprep.subr.bf16.mxu0 0
        %3419 = vmatpush1.bf16.msra.mxu0 %v2666
        %3420 = vmatprep.subr.bf16.mxu0 0
        %3421 = vmatpush1.bf16.msra.mxu0 %v2667
        %3422 = vmatprep.subr.bf16.mxu0 0
        %3423 = vmatpush1.bf16.msra.mxu0 %v2668
        %3424 = vmatprep.subr.bf16.mxu0 0
        %3425 = vmatpush1.bf16.msra.mxu0 %v2669
        %3426 = vmatprep.subr.bf16.mxu0 0
        %3427 = vmatpush1.bf16.msra.mxu0 %v2670
        %3428 = vmatprep.subr.bf16.mxu0 0
        %3429 = vmatpush1.bf16.msra.mxu0 %v2671
        %3430 = vmatprep.subr.bf16.mxu0 0
        %3431 = vmatpush1.bf16.msra.mxu0 %v2672
        %3432 = vmatprep.subr.bf16.mxu0 0
        %3433 = vmatpush1.bf16.msra.mxu0 %v2673
        %3434 = vmatprep.subr.bf16.mxu0 0
        %3435 = vmatpush1.bf16.msra.mxu0 %v2674
        %3436 = vmatprep.subr.bf16.mxu0 0
        %3437 = vmatpush1.bf16.msra.mxu0 %v2675
        %3438 = vmatprep.subr.bf16.mxu0 0
        %3439 = vmatpush1.bf16.msra.mxu0 %v2676
        %3440 = vmatprep.subr.bf16.mxu0 0
        %3441 = vmatpush1.bf16.msra.mxu0 %v2677
        %3442 = vmatprep.subr.bf16.mxu0 0
        %3443 = vmatpush1.bf16.msra.mxu0 %v2678
        %3444 = vmatprep.subr.bf16.mxu0 0
        %3445 = vmatpush1.bf16.msra.mxu0 %v2679
        %3446 = vmatprep.subr.bf16.mxu0 0
        %3447 = vmatpush1.bf16.msra.mxu0 %v2680
        %3448 = vmatprep.subr.bf16.mxu0 0
        %3449 = vmatpush1.bf16.msra.mxu0 %v2681
        %3450 = vmatprep.mubr.bf16.mxu0 %v958
        %3451 = vmatmul.mubr.bf16.gmra.mrb[0].mxu0 %v957
        %v3452 = vpop.f32.mrb[0].mxu0
        %v3453 = vadd.f32 %v3413, %v3452
        %v3454 = vpop.f32.mrb[0].mxu0
        %v3455 = vpop.f32.mrb[0].mxu0
        %v3456 = vpop.f32.mrb[0].mxu0
        %3457 = vdwg.mxu0
        %3458 = vmatprep.subr.bf16.mxu0 0
        %3459 = vmatpush1.bf16.msra.mxu0 %v2682
        %3460 = vmatprep.subr.bf16.mxu0 0
        %3461 = vmatpush1.bf16.msra.mxu0 %v2683
        %3462 = vmatprep.subr.bf16.mxu0 0
        %3463 = vmatpush1.bf16.msra.mxu0 %v2684
        %3464 = vmatprep.subr.bf16.mxu0 0
        %3465 = vmatpush1.bf16.msra.mxu0 %v2685
        %3466 = vmatprep.subr.bf16.mxu0 0
        %3467 = vmatpush1.bf16.msra.mxu0 %v2686
        %3468 = vmatprep.subr.bf16.mxu0 0
        %3469 = vmatpush1.bf16.msra.mxu0 %v2687
        %3470 = vmatprep.subr.bf16.mxu0 0
        %3471 = vmatpush1.bf16.msra.mxu0 %v2688
        %3472 = vmatprep.subr.bf16.mxu0 0
        %3473 = vmatpush1.bf16.msra.mxu0 %v2689
        %3474 = vmatprep.subr.bf16.mxu0 0
        %3475 = vmatpush1.bf16.msra.mxu0 %v2690
        %3476 = vmatprep.subr.bf16.mxu0 0
        %3477 = vmatpush1.bf16.msra.mxu0 %v2691
        %3478 = vmatprep.subr.bf16.mxu0 0
        %3479 = vmatpush1.bf16.msra.mxu0 %v2692
        %3480 = vmatprep.subr.bf16.mxu0 0
        %3481 = vmatpush1.bf16.msra.mxu0 %v2693
        %3482 = vmatprep.subr.bf16.mxu0 0
        %3483 = vmatpush1.bf16.msra.mxu0 %v2694
        %3484 = vmatprep.subr.bf16.mxu0 0
        %3485 = vmatpush1.bf16.msra.mxu0 %v2695
        %3486 = vmatprep.subr.bf16.mxu0 0
        %3487 = vmatpush1.bf16.msra.mxu0 %v2696
        %3488 = vmatprep.subr.bf16.mxu0 0
        %3489 = vmatpush1.bf16.msra.mxu0 %v2697
        %3490 = vmatprep.mubr.bf16.mxu0 %v960
        %3491 = vmatmul.mubr.bf16.gmra.mrb[0].mxu0 %v959
        %v3492 = vpop.f32.mrb[0].mxu0
        %v3493 = vadd.f32 %v3453, %v3492
        %v3494 = vpop.f32.mrb[0].mxu0
        %v3495 = vpop.f32.mrb[0].mxu0
        %v3496 = vpop.f32.mrb[0].mxu0
        %3497 = vdwg.mxu0
        %3498 = vmatprep.subr.bf16.mxu0 0
        %3499 = vmatpush1.bf16.msra.mxu0 %v2698
        %3500 = vmatprep.subr.bf16.mxu0 0
        %3501 = vmatpush1.bf16.msra.mxu0 %v2699
        %3502 = vmatprep.subr.bf16.mxu0 0
        %3503 = vmatpush1.bf16.msra.mxu0 %v2700
        %3504 = vmatprep.subr.bf16.mxu0 0
        %3505 = vmatpush1.bf16.msra.mxu0 %v2701
        %3506 = vmatprep.subr.bf16.mxu0 0
        %3507 = vmatpush1.bf16.msra.mxu0 %v2702
        %3508 = vmatprep.subr.bf16.mxu0 0
        %3509 = vmatpush1.bf16.msra.mxu0 %v2703
        %3510 = vmatprep.subr.bf16.mxu0 0
        %3511 = vmatpush1.bf16.msra.mxu0 %v2704
        %3512 = vmatprep.subr.bf16.mxu0 0
        %3513 = vmatpush1.bf16.msra.mxu0 %v2705
        %3514 = vmatprep.subr.bf16.mxu0 0
        %3515 = vmatpush1.bf16.msra.mxu0 %v2706
        %3516 = vmatprep.subr.bf16.mxu0 0
        %3517 = vmatpush1.bf16.msra.mxu0 %v2707
        %3518 = vmatprep.subr.bf16.mxu0 0
        %3519 = vmatpush1.bf16.msra.mxu0 %v2708
        %3520 = vmatprep.subr.bf16.mxu0 0
        %3521 = vmatpush1.bf16.msra.mxu0 %v2709
        %3522 = vmatprep.subr.bf16.mxu0 0
        %3523 = vmatpush1.bf16.msra.mxu0 %v2710
        %3524 = vmatprep.subr.bf16.mxu0 0
        %3525 = vmatpush1.bf16.msra.mxu0 %v2711
        %3526 = vmatprep.subr.bf16.mxu0 0
        %3527 = vmatpush1.bf16.msra.mxu0 %v2712
        %3528 = vmatprep.subr.bf16.mxu0 0
        %3529 = vmatpush1.bf16.msra.mxu0 %v2713
        %3530 = vmatprep.mubr.bf16.mxu0 %v962
        %3531 = vmatmul.mubr.bf16.gmra.mrb[0].mxu0 %v961
        %v3532 = vpop.f32.mrb[0].mxu0
        %v3533 = vadd.f32 %v3493, %v3532
        %v3534 = vpop.f32.mrb[0].mxu0
        %v3535 = vpop.f32.mrb[0].mxu0
        %v3536 = vpop.f32.mrb[0].mxu0
        %3537 = vdwg.mxu0
        %3538 = vmatprep.subr.bf16.mxu0 0
        %3539 = vmatpush1.bf16.msra.mxu0 %v2714
        %3540 = vmatprep.subr.bf16.mxu0 0
        %3541 = vmatpush1.bf16.msra.mxu0 %v2715
        %3542 = vmatprep.subr.bf16.mxu0 0
        %3543 = vmatpush1.bf16.msra.mxu0 %v2716
        %3544 = vmatprep.subr.bf16.mxu0 0
        %3545 = vmatpush1.bf16.msra.mxu0 %v2717
        %3546 = vmatprep.subr.bf16.mxu0 0
        %3547 = vmatpush1.bf16.msra.mxu0 %v2718
        %3548 = vmatprep.subr.bf16.mxu0 0
        %3549 = vmatpush1.bf16.msra.mxu0 %v2719
        %3550 = vmatprep.subr.bf16.mxu0 0
        %3551 = vmatpush1.bf16.msra.mxu0 %v2720
        %3552 = vmatprep.subr.bf16.mxu0 0
        %3553 = vmatpush1.bf16.msra.mxu0 %v2721
        %3554 = vmatprep.subr.bf16.mxu0 0
        %3555 = vmatpush1.bf16.msra.mxu0 %v2722
        %3556 = vmatprep.subr.bf16.mxu0 0
        %3557 = vmatpush1.bf16.msra.mxu0 %v2723
        %3558 = vmatprep.subr.bf16.mxu0 0
        %3559 = vmatpush1.bf16.msra.mxu0 %v2724
        %3560 = vmatprep.subr.bf16.mxu0 0
        %3561 = vmatpush1.bf16.msra.mxu0 %v2725
        %3562 = vmatprep.subr.bf16.mxu0 0
        %3563 = vmatpush1.bf16.msra.mxu0 %v2726
        %3564 = vmatprep.subr.bf16.mxu0 0
        %3565 = vmatpush1.bf16.msra.mxu0 %v2727
        %3566 = vmatprep.subr.bf16.mxu0 0
        %3567 = vmatpush1.bf16.msra.mxu0 %v2728
        %3568 = vmatprep.subr.bf16.mxu0 0
        %3569 = vmatpush1.bf16.msra.mxu0 %v2729
        %3570 = vmatprep.mubr.bf16.mxu0 %v964
        %3571 = vmatmul.mubr.bf16.gmra.mrb[0].mxu0 %v963
        %v3572 = vpop.f32.mrb[0].mxu0
        %v3573 = vadd.f32 %v3533, %v3572
        %v3574 = vpop.f32.mrb[0].mxu0
        %v3575 = vpop.f32.mrb[0].mxu0
        %v3576 = vpop.f32.mrb[0].mxu0
        %3577 = vdwg.mxu0
        %3578 = vmatprep.subr.bf16.mxu0 0
        %3579 = vmatpush1.bf16.msra.mxu0 %v2730
        %3580 = vmatprep.subr.bf16.mxu0 0
        %3581 = vmatpush1.bf16.msra.mxu0 %v2731
        %3582 = vmatprep.subr.bf16.mxu0 0
        %3583 = vmatpush1.bf16.msra.mxu0 %v2732
        %3584 = vmatprep.subr.bf16.mxu0 0
        %3585 = vmatpush1.bf16.msra.mxu0 %v2733
        %3586 = vmatprep.subr.bf16.mxu0 0
        %3587 = vmatpush1.bf16.msra.mxu0 %v2734
        %3588 = vmatprep.subr.bf16.mxu0 0
        %3589 = vmatpush1.bf16.msra.mxu0 %v2735
        %3590 = vmatprep.subr.bf16.mxu0 0
        %3591 = vmatpush1.bf16.msra.mxu0 %v2736
        %3592 = vmatprep.subr.bf16.mxu0 0
        %3593 = vmatpush1.bf16.msra.mxu0 %v2737
        %3594 = vmatprep.subr.bf16.mxu0 0
        %3595 = vmatpush1.bf16.msra.mxu0 %v2738
        %3596 = vmatprep.subr.bf16.mxu0 0
        %3597 = vmatpush1.bf16.msra.mxu0 %v2739
        %3598 = vmatprep.subr.bf16.mxu0 0
        %3599 = vmatpush1.bf16.msra.mxu0 %v2740
        %3600 = vmatprep.subr.bf16.mxu0 0
        %3601 = vmatpush1.bf16.msra.mxu0 %v2741
        %3602 = vmatprep.subr.bf16.mxu0 0
        %3603 = vmatpush1.bf16.msra.mxu0 %v2742
        %3604 = vmatprep.subr.bf16.mxu0 0
        %3605 = vmatpush1.bf16.msra.mxu0 %v2743
        %3606 = vmatprep.subr.bf16.mxu0 0
        %3607 = vmatpush1.bf16.msra.mxu0 %v2744
        %3608 = vmatprep.subr.bf16.mxu0 0
        %3609 = vmatpush1.bf16.msra.mxu0 %v2745
        %3610 = vmatprep.mubr.bf16.mxu0 %v966
        %3611 = vmatmul.mubr.bf16.gmra.mrb[0].mxu0 %v965
        %v3612 = vpop.f32.mrb[0].mxu0
        %v3613 = vadd.f32 %v3573, %v3612
        %v3614 = vpop.f32.mrb[0].mxu0
        %v3615 = vpop.f32.mrb[0].mxu0
        %v3616 = vpop.f32.mrb[0].mxu0
        %3617 = vdwg.mxu0
        %3618 = vmatprep.subr.bf16.mxu0 0
        %3619 = vmatpush1.bf16.msra.mxu0 %v2746
        %3620 = vmatprep.subr.bf16.mxu0 0
        %3621 = vmatpush1.bf16.msra.mxu0 %v2747
        %3622 = vmatprep.subr.bf16.mxu0 0
        %3623 = vmatpush1.bf16.msra.mxu0 %v2748
        %3624 = vmatprep.subr.bf16.mxu0 0
        %3625 = vmatpush1.bf16.msra.mxu0 %v2749
        %3626 = vmatprep.subr.bf16.mxu0 0
        %3627 = vmatpush1.bf16.msra.mxu0 %v2750
        %3628 = vmatprep.subr.bf16.mxu0 0
        %3629 = vmatpush1.bf16.msra.mxu0 %v2751
        %3630 = vmatprep.subr.bf16.mxu0 0
        %3631 = vmatpush1.bf16.msra.mxu0 %v2752
        %3632 = vmatprep.subr.bf16.mxu0 0
        %3633 = vmatpush1.bf16.msra.mxu0 %v2753
        %3634 = vmatprep.subr.bf16.mxu0 0
        %3635 = vmatpush1.bf16.msra.mxu0 %v2754
        %3636 = vmatprep.subr.bf16.mxu0 0
        %3637 = vmatpush1.bf16.msra.mxu0 %v2755
        %3638 = vmatprep.subr.bf16.mxu0 0
        %3639 = vmatpush1.bf16.msra.mxu0 %v2756
        %3640 = vmatprep.subr.bf16.mxu0 0
        %3641 = vmatpush1.bf16.msra.mxu0 %v2757
        %3642 = vmatprep.subr.bf16.mxu0 0
        %3643 = vmatpush1.bf16.msra.mxu0 %v2758
        %3644 = vmatprep.subr.bf16.mxu0 0
        %3645 = vmatpush1.bf16.msra.mxu0 %v2759
        %3646 = vmatprep.subr.bf16.mxu0 0
        %3647 = vmatpush1.bf16.msra.mxu0 %v2760
        %3648 = vmatprep.subr.bf16.mxu0 0
        %3649 = vmatpush1.bf16.msra.mxu0 %v2761
        %3650 = vmatprep.mubr.bf16.mxu0 %v968
        %3651 = vmatmul.mubr.bf16.gmra.mrb[0].mxu0 %v967
        %v3652 = vpop.f32.mrb[0].mxu0
        %v3653 = vadd.f32 %v3613, %v3652
        %v3654 = vpop.f32.mrb[0].mxu0
        %v3655 = vpop.f32.mrb[0].mxu0
        %v3656 = vpop.f32.mrb[0].mxu0
        %3657 = vdwg.mxu0
        %v3658 = vmax.f32 %v3653, 0.0
        %v3659 = vpack.c.bf16 %v3658, %v3658
        %v3660 = vld [vmem:[%s8] sm:$0xf]
        %v3661 = vld [vmem:[%s8 + $0x4] sm:$0xf]
        %v3662 = vld [vmem:[%s8 + $0x8] sm:$0xf]
        %v3663 = vld [vmem:[%s8 + $0xc] sm:$0xf]
        %v3664 = vld [vmem:[%s9] sm:$0x1]
        %v3669 = vunpack.c.l.b16 %v3660
        %v3670 = vunpack.c.l.b16 %v3661
        %v3671 = vunpack.c.l.b16 %v3662
        %v3672 = vunpack.c.l.b16 %v3663
        %v3673 = vpack.c.b16 %v3670, %v3669
        %v3674 = vpack.c.b16 %v3672, %v3671
        %vm3677 = vcmask 261120
        %v3679 = vsel %vm3677, %v3659, 0
        %3681 = vmatprep.subr.bf16.mxu0 0
        %3682 = vmatpush1.bf16.msra.mxu0 %v3673
        %3683 = vmatprep.subr.bf16.mxu0 0
        %3684 = vmatpush1.bf16.msra.mxu0 %v3674
        %3685 = vmatprep.subr.bf16.mxu0 0
        %3686 = vmatpush1.bf16.msra.mxu0 0
        %3687 = vmatprep.subr.bf16.mxu0 0
        %3688 = vmatpush1.bf16.msra.mxu0 0
        %3689 = vmatprep.subr.bf16.mxu0 0
        %3690 = vmatpush1.bf16.msra.mxu0 0
        %3691 = vmatprep.subr.bf16.mxu0 0
        %3692 = vmatpush1.bf16.msra.mxu0 0
        %3693 = vmatprep.subr.bf16.mxu0 0
        %3694 = vmatpush1.bf16.msra.mxu0 0
        %3695 = vmatprep.subr.bf16.mxu0 0
        %3696 = vmatpush1.bf16.msra.mxu0 0
        %3697 = vmatprep.subr.bf16.mxu0 0
        %3698 = vmatpush1.bf16.msra.mxu0 0
        %3699 = vmatprep.subr.bf16.mxu0 0
        %3700 = vmatpush1.bf16.msra.mxu0 0
        %3701 = vmatprep.subr.bf16.mxu0 0
        %3702 = vmatpush1.bf16.msra.mxu0 0
        %3703 = vmatprep.subr.bf16.mxu0 0
        %3704 = vmatpush1.bf16.msra.mxu0 0
        %3705 = vmatprep.subr.bf16.mxu0 0
        %3706 = vmatpush1.bf16.msra.mxu0 0
        %3707 = vmatprep.subr.bf16.mxu0 0
        %3708 = vmatpush1.bf16.msra.mxu0 0
        %3709 = vmatprep.subr.bf16.mxu0 0
        %3710 = vmatpush1.bf16.msra.mxu0 0
        %3711 = vmatprep.subr.bf16.mxu0 0
        %3712 = vmatpush1.bf16.msra.mxu0 0
        %3713 = vmatprep.mubr.bf16.mxu0 0
        %3714 = vmatmul.mubr.bf16.gmra.mrb[0].mxu0 %v3679
        %v3715 = vpop.f32.mrb[0].mxu0
        %v3716 = vadd.f32 %v3664, %v3715
        %v3717 = vpop.f32.mrb[0].mxu0
        %v3718 = vpop.f32.mrb[0].mxu0
        %v3719 = vpop.f32.mrb[0].mxu0
        %3720 = vdwg.mxu0
        %vm3721 = vcmask 40960
        %3722 = vst.msk [vmem:[%s379] sm:$0x1] %vm3721, %v3716
        %3724 = vrot.lane.b32.xlu0 %v3716, 122
        %v3725 = vpop.permute.xlu0 %3724
        %vm3727 = vcmask 0
        %3728 = vst.msk [vmem:[%s392] sm:$0x1] %vm3727, %v3725
        %s3729 = sand.u32 %s249, 1
        %s3730 = scalar_lea.sflag [#allocation3], %s3729
        %s3731 = sand.u32 %s249, 1
        %s3732 = scalar_lea.vmem [#allocation2], %s3731
        %p3733 = scmp.lt.s32.totalorder %s26, 1
        %s3734 = scalar_select %p3733, %s26, 1
        %s3735 = scalar_lea.vmem %s11, %s3734
        // Predicated region
        $region61: #{ac_net_forward.1} parent=59 // pred_check
          %p3736 = pneg %p259
        $region62: #{ac_net_forward.1} parent=59 // pred_check_branch
          %3738 = sbr.rel (%p3736) target = $region64
        $region63: #{ac_net_forward.1} parent=59 // pred_region
          %s3740 = ssub.s32 16, 16
          %3741 = vsyncadd %s3730, %s3740
          %s3742 = smul.addr %s26, 16
          %s3743 = scalar_lea.hbm %s10, %s3742
          %s3745 = sshll.u32 %s3732, 4
          %s3746 = int_to_ptr.vmem [resolvable:$true] %s3745
          %3748 = dma.vmem_to_hbm [thread:$0]  %s3746, 16, %s3743, %s3730
        $region64: #{ac_net_forward.1} parent=59 // pred_fallthru
          _
        // Predicated region
        $region65: #{ac_net_forward.1} parent=59 // pred_check
          %p3749 = pneg %p285
        $region66: #{ac_net_forward.1} parent=59 // pred_check_branch
          %3751 = sbr.rel (%p3749) target = $region68
        $region67: #{ac_net_forward.1} parent=59 // pred_region
          _
        $region68: #{ac_net_forward.1} parent=59 // pred_fallthru
          _
      $region60: #{ac_net_forward.1} parent=5 // pred_fallthru
        _
      %p3752 = scmp.le.s32.totalorder 2, %s21
      // Predicated region
      $region69: #{ac_net_forward.1} parent=5 // pred_check
        %p3753 = pneg %p3752
      $region70: #{ac_net_forward.1} parent=5 // pred_check_branch
        %3755 = sbr.rel (%p3753) target = $region72
      $region71: #{ac_net_forward.1} parent=5 // pred_region
        %s3756 = ssub.s32 %s21, 2
        // Predicated region
        $region73: #{ac_net_forward.1} parent=71 // pred_check
          %p3757 = pneg %p265
        $region74: #{ac_net_forward.1} parent=71 // pred_check_branch
          %3759 = sbr.rel (%p3757) target = $region76
        $region75: #{ac_net_forward.1} parent=71 // pred_region
          %s3760 = sand.u32 %s250, 1
          %s3761 = scalar_lea.sflag [#allocation3], %s3760
          %s3762 = sand.u32 %s250, 1
          %s3763 = scalar_lea.vmem [#allocation2], %s3762
          %3764 = dma.done %s3761, 16
        $region76: #{ac_net_forward.1} parent=71 // pred_fallthru
          _
        // Predicated region
        $region77: #{ac_net_forward.1} parent=71 // pred_check
          %p3765 = pneg %p291
        $region78: #{ac_net_forward.1} parent=71 // pred_check_branch
          %3767 = sbr.rel (%p3765) target = $region80
        $region79: #{ac_net_forward.1} parent=71 // pred_region
          %p3768 = scmp.lt.s32.totalorder %s27, 1
          %s3769 = scalar_select %p3768, %s27, 1
          %s3770 = scalar_lea.vmem %s11, %s3769
        $region80: #{ac_net_forward.1} parent=71 // pred_fallthru
          _
      $region72: #{ac_net_forward.1} parent=5 // pred_fallthru
        _
    $region6: #{ac_net_forward.1} parent=1 // loop_footer
      %s25 = sadd.s32 1, %s21
    $region7: #{ac_net_forward.1} parent=1 // loop_footer_branch
      %20 = sbr.rel target = $region3
    $region8: #{ac_net_forward.1} parent=1 // loop_exit
      _
    %3771 = vsyncpa [#allocation3], 1
    %s3772 = scalar_lea.sflag [#allocation3], 1
    %3773 = vsyncpa %s3772, 1

</llo_original>
